<compile_context>
chip_gen: v7x
topology: tpu7x:2x2x1
jax: 0.10.0
libtpu: 0.0.40
codegen_flags: <defaults>
</compile_context>

<pallas_src>
import functools

import numpy as np
import jax
import jax.numpy as jnp
from jax.experimental import pallas as pl
from jax.experimental.pallas import tpu as pltpu


def _round_up(x, m):
    return (x + m - 1) // m * m


def _pick_tile(dim_padded, pref, step=128):
    """Largest multiple of `step` <= pref that divides dim_padded."""
    best = step
    t = step
    cap = min(pref, dim_padded)
    while t <= cap:
        if dim_padded % t == 0:
            best = t
        t += step
    return best


def _pick_tm(Mp, pref):
    """Like _pick_tile, but prefer >=2 M blocks so v7x megacore uses both TCs."""
    tm = _pick_tile(Mp, pref)
    if tm == Mp and Mp >= 256:
        tm = _pick_tile(Mp, Mp // 2)
    return tm


# ----------------------------------------------------------------------------
# Pallas kernels
# ----------------------------------------------------------------------------
def _matmul_bias_kernel(a_ref, w_ref, b_ref, o_ref, acc_ref, *, relu):
    k = pl.program_id(2)

    @pl.when(k == 0)
    def _():
        acc_ref[...] = jnp.zeros_like(acc_ref)

    acc_ref[...] += jnp.dot(a_ref[...], w_ref[...],
                            preferred_element_type=jnp.float32)

    @pl.when(k == pl.num_programs(2) - 1)
    def _():
        out = acc_ref[...] + b_ref[...]          # (tm, tn) + (1, tn)
        if relu:
            out = jnp.maximum(out, 0.0)
        o_ref[...] = out.astype(o_ref.dtype)


def matmul_bias(a, w_p, b_p, n_out, relu, out_dtype,
                tm_pref=512, tn_pref=256, tk_pref=1024):
    """a: (M,K) activations; w_p: (Kp,Np) pre-padded bf16; b_p: (1,Np) f32.

    Returns (M, n_out) in `out_dtype` (bias + optional ReLU fused in epilogue).
    """
    M, K = a.shape
    Kp, Np = w_p.shape
    assert K <= Kp and n_out <= Np

    Mp = _round_up(M, 128)
    tm = _pick_tm(Mp, tm_pref)
    tn = _pick_tile(Np, tn_pref)
    tk = _pick_tile(Kp, tk_pref)

    a_p = a if a.dtype == jnp.bfloat16 else a.astype(jnp.bfloat16)
    if (Mp - M) or (Kp - K):
        a_p = jnp.pad(a_p, ((0, Mp - M), (0, Kp - K)))

    grid = (Mp // tm, Np // tn, Kp // tk)
    out_bytes = Mp * Np * jnp.dtype(out_dtype).itemsize
    cost = pl.CostEstimate(
        flops=2 * Mp * Np * Kp,
        transcendentals=0,
        bytes_accessed=a_p.size * 2 + w_p.size * 2 + b_p.size * 4 + out_bytes,
    )

    out = pl.pallas_call(
        functools.partial(_matmul_bias_kernel, relu=relu),
        out_shape=jax.ShapeDtypeStruct((Mp, Np), out_dtype),
        grid_spec=pltpu.PrefetchScalarGridSpec(
            num_scalar_prefetch=0,
            grid=grid,
            in_specs=[
                pl.BlockSpec((tm, tk), lambda i, j, k: (i, k)),
                pl.BlockSpec((tk, tn), lambda i, j, k: (k, j)),
                pl.BlockSpec((1, tn), lambda i, j, k: (0, j)),
            ],
            out_specs=pl.BlockSpec((tm, tn), lambda i, j, k: (i, j)),
            scratch_shapes=[pltpu.VMEM((tm, tn), jnp.float32)],
        ),
        compiler_params=pltpu.CompilerParams(
            dimension_semantics=("parallel", "parallel", "arbitrary")),
        cost_estimate=cost,
    )(a_p, w_p, b_p)
    return out[:M, :n_out]


def _maxpool_kernel(*refs):
    # refs = (tap_0, ..., tap_{kk-1}, out).  Pure-VPU elementwise maximum chain.
    o_ref = refs[-1]
    m = refs[0][...]
    for r in refs[1:-1]:
        m = jnp.maximum(m, r[...])
    o_ref[...] = m


def maxpool2d_nhwc(x, k=3, stride=2):
    """MaxPool2d(k, stride) on NHWC bf16 via k*k separate lane-dense taps."""
    B, H, W, C = x.shape
    Ho = (H - k) // stride + 1
    Wo = (W - k) // stride + 1
    M = B * Ho * Wo * C
    LANES = 128
    Mp = _round_up(M, 16 * LANES)        # 16 sublanes (bf16 packing) x 128 lanes
    rows = Mp // LANES
    tr = _pick_tile(rows, 512, step=16)

    taps = []
    for i in range(k):
        for j in range(k):
            t = x[:, i:i + stride * Ho:stride, j:j + stride * Wo:stride, :]
            t = jnp.pad(t.reshape(-1), (0, Mp - M)).reshape(rows, LANES)
            taps.append(t)

    kk = k * k
    out = pl.pallas_call(
        _maxpool_kernel,
        out_shape=jax.ShapeDtypeStruct((rows, LANES), x.dtype),
        grid=(rows // tr,),
        in_specs=[pl.BlockSpec((tr, LANES), lambda i: (i, 0)) for _ in range(kk)],
        out_specs=pl.BlockSpec((tr, LANES), lambda i: (i, 0)),
        compiler_params=pltpu.CompilerParams(dimension_semantics=("parallel",)),
    )(*taps)
    return out.reshape(-1)[:M].reshape(B, Ho, Wo, C)


# ----------------------------------------------------------------------------
# Layer wrappers (glue in plain JAX, compute in Pallas)
# ----------------------------------------------------------------------------
def conv2d_nhwc(x, layer, kh, kw, stride, pad, cout, relu):
    """x: (B,H,W,C) NHWC bf16; layer: {"w": (Kp,Np) bf16, "b": (1,Np) f32}."""
    B, H, W, C = x.shape
    xp = jnp.pad(x, ((0, 0), (pad, pad), (pad, pad), (0, 0)))
    Ho = (H + 2 * pad - kh) // stride + 1
    Wo = (W + 2 * pad - kw) // stride + 1
    # Contiguous NHWC im2col gather in bf16 (half the HBM traffic of f32).
    # TODO(synk): fold the kh*kw tap gather into the matmul K-loop to avoid
    # materializing the patch tensor in HBM.
    taps = [xp[:, i:i + stride * Ho:stride, j:j + stride * Wo:stride, :]
            for i in range(kh) for j in range(kw)]
    patches = jnp.stack(taps, axis=3).reshape(B * Ho * Wo, kh * kw * C)
    out = matmul_bias(patches, layer["w"], layer["b"], cout,
                      relu=relu, out_dtype=jnp.bfloat16)
    return out.reshape(B, Ho, Wo, cout)


# ----------------------------------------------------------------------------
# AlexNet definition
# ----------------------------------------------------------------------------
def _conv_out(h, k, s, p):
    return (h + 2 * p - k) // s + 1


def _pool_out(h, k=3, s=2):
    return (h - k) // s + 1


def alexnet_dims(input_height, input_width, ch):
    h, w = input_height, input_width
    h, w = _conv_out(h, 4, 2, 2), _conv_out(w, 4, 2, 2)   # conv1
    h, w = _pool_out(h), _pool_out(w)                      # pool1
    h, w = _conv_out(h, 5, 1, 2), _conv_out(w, 5, 1, 2)   # conv2
    h, w = _pool_out(h), _pool_out(w)                      # pool2
    # conv3/4/5: k=3, p=1, s=1 -> same size
    h, w = _pool_out(h), _pool_out(w)                      # pool3
    size = ch * h * w
    # mirror torch float32 arithmetic: int(a) * int(1 + log(a)/log(2))
    a = np.float32(size)
    b = np.float32(2.0)
    width = int(a) * int(np.float32(1.0) + np.log(a) / np.log(b))
    return size, width


def init_alexnet_params(key, input_channels, ch, size, width, no_class):
    def nrm(key, shape, scale=0.05):
        return scale * jax.random.normal(key, shape, dtype=jnp.float32)

    keys = jax.random.split(key, 16)
    p = {}
    p["conv1_w"] = nrm(keys[0], (ch, input_channels, 4, 4))
    p["conv1_b"] = nrm(keys[1], (ch,))
    p["conv2_w"] = nrm(keys[2], (ch, ch, 5, 5))
    p["conv2_b"] = nrm(keys[3], (ch,))
    p["conv3_w"] = nrm(keys[4], (ch, ch, 3, 3))
    p["conv3_b"] = nrm(keys[5], (ch,))
    p["conv4_w"] = nrm(keys[6], (ch, ch, 3, 3))
    p["conv4_b"] = nrm(keys[7], (ch,))
    p["conv5_w"] = nrm(keys[8], (ch, ch, 3, 3))
    p["conv5_b"] = nrm(keys[9], (ch,))
    p["fc1_w"] = nrm(keys[10], (size, width))      # stored as (in, out)
    p["fc1_b"] = nrm(keys[11], (width,))
    p["fc2_w"] = nrm(keys[12], (width, width))
    p["fc2_b"] = nrm(keys[13], (width,))
    p["fc3_w"] = nrm(keys[14], (width, no_class))
    p["fc3_b"] = nrm(keys[15], (no_class,))
    return p


def prepare_params(params):
    """One-time: (in,out) weight layout, bf16 cast, 128-pad K/N, f32 bias pad."""
    def prep_matmul(w_io, b):
        K, N = w_io.shape
        Kp, Np = _round_up(K, 128), _round_up(N, 128)
        w_p = jnp.pad(w_io, ((0, Kp - K), (0, Np - N))).astype(jnp.bfloat16)
        b_p = jnp.pad(b.astype(jnp.float32), (0, Np - N)).reshape(1, Np)
        return {"w": w_p, "b": b_p}

    def prep_conv(w, b):
        Cout, Cin, kh, kw = w.shape
        # (Cout,Cin,kh,kw) -> (kh,kw,Cin,Cout) -> (kh*kw*Cin, Cout)
        wmat = jnp.transpose(w, (2, 3, 1, 0)).reshape(kh * kw * Cin, Cout)
        return prep_matmul(wmat, b)

    pp = {}
    for name in ("conv1", "conv2", "conv3", "conv4", "conv5"):
        pp[name] = prep_conv(params[name + "_w"], params[name + "_b"])
    for name in ("fc1", "fc2", "fc3"):
        pp[name] = prep_matmul(params[name + "_w"], params[name + "_b"])
    return jax.tree_util.tree_map(jnp.asarray, pp)


def alexnet_forward(prepped, x, *, ch, width, no_class):
    """x: (B, C, H, W) NCHW float32 -> logits (B, no_class) float32."""
    # features (NHWC, bf16 internally)
    x = jnp.transpose(x, (0, 2, 3, 1)).astype(jnp.bfloat16)
    x = conv2d_nhwc(x, prepped["conv1"], 4, 4, stride=2, pad=2, cout=ch, relu=True)
    x = maxpool2d_nhwc(x, 3, 2)
    x = conv2d_nhwc(x, prepped["conv2"], 5, 5, stride=1, pad=2, cout=ch, relu=True)
    x = maxpool2d_nhwc(x, 3, 2)
    x = conv2d_nhwc(x, prepped["conv3"], 3, 3, stride=1, pad=1, cout=ch, relu=True)
    x = conv2d_nhwc(x, prepped["conv4"], 3, 3, stride=1, pad=1, cout=ch, relu=True)
    x = conv2d_nhwc(x, prepped["conv5"], 3, 3, stride=1, pad=1, cout=ch, relu=True)
    x = maxpool2d_nhwc(x, 3, 2)
    # classifier (inference mode: Dropout == identity)
    B = x.shape[0]
    x = jnp.transpose(x, (0, 3, 1, 2)).reshape(B, -1)   # PyTorch C,H,W flatten order
    x = matmul_bias(x, prepped["fc1"]["w"], prepped["fc1"]["b"], width,
                    relu=True, out_dtype=jnp.bfloat16)
    x = matmul_bias(x, prepped["fc2"]["w"], prepped["fc2"]["b"], width,
                    relu=True, out_dtype=jnp.bfloat16)
    x = matmul_bias(x, prepped["fc3"]["w"], prepped["fc3"]["b"], no_class,
                    relu=False, out_dtype=jnp.float32)
    return x


# ----------------------------------------------------------------------------
if __name__ == "__main__":
    # Smallest "nice" configuration that survives the three stride-2 maxpools.
    B, C, H, W = 2, 3, 32, 32
    ch, no_class = 16, 10

    size, width = alexnet_dims(H, W, ch)   # size = 16, width = 80

    key = jax.random.PRNGKey(0)
    pkey, xkey = jax.random.split(key)
    params = init_alexnet_params(pkey, C, ch, size, width, no_class)
    prepped = prepare_params(params)       # one-time bf16 cast + 128-pad
    x = jax.random.normal(xkey, (B, C, H, W), dtype=jnp.float32)

    fwd = jax.jit(functools.partial(alexnet_forward,
                                    ch=ch, width=width, no_class=no_class))
    out = fwd(prepped, x)
    out = jax.block_until_ready(out)

    assert out.shape == (B, no_class), out.shape
    assert jnp.all(jnp.isfinite(out))
    print("KERNEL_OK")
</pallas_src>

<mosaic_0001>
module attributes {stable_mosaic.version = 11 : i64} {
  func.func @_matmul_bias_kernel(%arg0: i32, %arg1: i32, %arg2: i32, %arg3: memref<128x128xbf16, #tpu.memory_space<vmem>>, %arg4: memref<128x128xbf16, #tpu.memory_space<vmem>>, %arg5: memref<1x128xf32, #tpu.memory_space<vmem>>, %arg6: memref<128x128xbf16, #tpu.memory_space<vmem>>, %arg7: memref<128x128xf32, #tpu.memory_space<vmem>>) attributes {dimension_semantics = [#tpu.dimension_semantics<parallel>, #tpu.dimension_semantics<parallel>, #tpu.dimension_semantics<arbitrary>], iteration_bounds = array<i64: 5, 1, 1>, scalar_prefetch = 0 : i64, scratch_operands = 1 : i64, tpu.core_type = #tpu.core_type<tc>, window_params = [{transform_indices = @transform_0, window_bounds = array<i64: 128, 128>}, {transform_indices = @transform_1, window_bounds = array<i64: 128, 128>}, {transform_indices = @transform_2, window_bounds = array<i64: 1, 128>}, {transform_indices = @transform_3, window_bounds = array<i64: 128, 128>}]} {
    %c0_i32 = arith.constant 0 : i32
    %0 = arith.cmpi eq, %arg2, %c0_i32 : i32
    %1 = arith.extui %0 : i1 to i32
    %c0_i32_0 = arith.constant 0 : i32
    %2 = arith.cmpi ne, %1, %c0_i32_0 : i32
    scf.if %2 {
      %cst_10 = arith.constant 0.000000e+00 : f32
      %12 = vector.broadcast %cst_10 : f32 to vector<128x128xf32>
      %c0_11 = arith.constant 0 : index
      %c0_12 = arith.constant 0 : index
      %13 = vector.load %arg7[%c0_11, %c0_12] : memref<128x128xf32, #tpu.memory_space<vmem>>, vector<128x128xf32>
      tpu.vector_store %arg7[%c0_11, %c0_12], %12 {strides = array<i32>} : memref<128x128xf32, #tpu.memory_space<vmem>>, vector<128x128xf32>,
    } else {
    }
    %c0 = arith.constant 0 : index
    %c0_1 = arith.constant 0 : index
    %3 = vector.load %arg7[%c0, %c0_1] : memref<128x128xf32, #tpu.memory_space<vmem>>, vector<128x128xf32>
    %c0_2 = arith.constant 0 : index
    %c0_3 = arith.constant 0 : index
    %4 = vector.load %arg3[%c0_2, %c0_3] : memref<128x128xbf16, #tpu.memory_space<vmem>>, vector<128x128xbf16>
    %c0_4 = arith.constant 0 : index
    %c0_5 = arith.constant 0 : index
    %5 = vector.load %arg4[%c0_4, %c0_5] : memref<128x128xbf16, #tpu.memory_space<vmem>>, vector<128x128xbf16>
    %cst = arith.constant dense<0.000000e+00> : vector<128x128xf32>
    %6 = tpu.matmul %4, %5, %cst {dimension_numbers = #tpu.dot_dimension_numbers<[1], [0], [0], [1], [0, 0, 1, 1], [], []>} : vector<128x128xbf16>, vector<128x128xbf16>, vector<128x128xf32> -> vector<128x128xf32>
    %7 = arith.addf %3, %6 : vector<128x128xf32>
    %c0_6 = arith.constant 0 : index
    %c0_7 = arith.constant 0 : index
    %8 = vector.load %arg7[%c0_6, %c0_7] : memref<128x128xf32, #tpu.memory_space<vmem>>, vector<128x128xf32>
    tpu.vector_store %arg7[%c0_6, %c0_7], %7 {strides = array<i32>} : memref<128x128xf32, #tpu.memory_space<vmem>>, vector<128x128xf32>,
    %c0_i32_8 = arith.constant 0 : i32
    %9 = arith.cmpi eq, %arg2, %c0_i32_8 : i32
    %10 = arith.extui %9 : i1 to i32
    %c0_i32_9 = arith.constant 0 : i32
    %11 = arith.cmpi ne, %10, %c0_i32_9 : i32
    scf.if %11 {
      %c0_10 = arith.constant 0 : index
      %c0_11 = arith.constant 0 : index
      %12 = vector.load %arg7[%c0_10, %c0_11] : memref<128x128xf32, #tpu.memory_space<vmem>>, vector<128x128xf32>
      %c0_12 = arith.constant 0 : index
      %c0_13 = arith.constant 0 : index
      %13 = vector.load %arg5[%c0_12, %c0_13] : memref<1x128xf32, #tpu.memory_space<vmem>>, vector<1x128xf32>
      %14 = vector.broadcast %13 : vector<1x128xf32> to vector<128x128xf32>
      %15 = arith.addf %12, %14 : vector<128x128xf32>
      %cst_14 = arith.constant 0.000000e+00 : f32
      %16 = vector.broadcast %cst_14 : f32 to vector<128x128xf32>
      %17 = arith.maximumf %15, %16 : vector<128x128xf32>
      %18 = arith.truncf %17 : vector<128x128xf32> to vector<128x128xbf16>
      %c0_15 = arith.constant 0 : index
      %c0_16 = arith.constant 0 : index
      %19 = vector.load %arg6[%c0_15, %c0_16] : memref<128x128xbf16, #tpu.memory_space<vmem>>, vector<128x128xbf16>
      tpu.vector_store %arg6[%c0_15, %c0_16], %18 {strides = array<i32>} : memref<128x128xbf16, #tpu.memory_space<vmem>>, vector<128x128xbf16>,
    } else {
    }
    return
  }
  func.func @transform_0(%arg0: i32, %arg1: i32, %arg2: i32) -> (i32, i32) {
    %c0_i32 = arith.constant 0 : i32
    return %arg0, %arg2 : i32, i32
  }
  func.func @transform_1(%arg0: i32, %arg1: i32, %arg2: i32) -> (i32, i32) {
    %c0_i32 = arith.constant 0 : i32
    return %arg2, %arg1 : i32, i32
  }
  func.func @transform_2(%arg0: i32, %arg1: i32, %arg2: i32) -> (i32, i32) {
    %c0_i32 = arith.constant 0 : i32
    %c0_i32_0 = arith.constant 0 : i32
    return %c0_i32, %arg1 : i32, i32
  }
  func.func @transform_3(%arg0: i32, %arg1: i32, %arg2: i32) -> (i32, i32) {
    %c0_i32 = arith.constant 0 : i32
    return %arg0, %arg1 : i32, i32
  }
}

module attributes {stable_mosaic.version = 11 : i64} {
  func.func @_maxpool_kernel(%arg0: i32, %arg1: memref<16x128xbf16, #tpu.memory_space<vmem>>, %arg2: memref<16x128xbf16, #tpu.memory_space<vmem>>, %arg3: memref<16x128xbf16, #tpu.memory_space<vmem>>, %arg4: memref<16x128xbf16, #tpu.memory_space<vmem>>, %arg5: memref<16x128xbf16, #tpu.memory_space<vmem>>, %arg6: memref<16x128xbf16, #tpu.memory_space<vmem>>, %arg7: memref<16x128xbf16, #tpu.memory_space<vmem>>, %arg8: memref<16x128xbf16, #tpu.memory_space<vmem>>, %arg9: memref<16x128xbf16, #tpu.memory_space<vmem>>, %arg10: memref<16x128xbf16, #tpu.memory_space<vmem>>) attributes {dimension_semantics = [#tpu.dimension_semantics<parallel>], iteration_bounds = array<i64: 1>, scalar_prefetch = 0 : i64, scratch_operands = 0 : i64, tpu.core_type = #tpu.core_type<tc>, window_params = [{transform_indices = @transform_0, window_bounds = array<i64: 16, 128>}, {transform_indices = @transform_1, window_bounds = array<i64: 16, 128>}, {transform_indices = @transform_2, window_bounds = array<i64: 16, 128>}, {transform_indices = @transform_3, window_bounds = array<i64: 16, 128>}, {transform_indices = @transform_4, window_bounds = array<i64: 16, 128>}, {transform_indices = @transform_5, window_bounds = array<i64: 16, 128>}, {transform_indices = @transform_6, window_bounds = array<i64: 16, 128>}, {transform_indices = @transform_7, window_bounds = array<i64: 16, 128>}, {transform_indices = @transform_8, window_bounds = array<i64: 16, 128>}, {transform_indices = @transform_9, window_bounds = array<i64: 16, 128>}]} {
    %c0 = arith.constant 0 : index
    %c0_0 = arith.constant 0 : index
    %0 = vector.load %arg1[%c0, %c0_0] : memref<16x128xbf16, #tpu.memory_space<vmem>>, vector<16x128xbf16>
    %c0_1 = arith.constant 0 : index
    %c0_2 = arith.constant 0 : index
    %1 = vector.load %arg2[%c0_1, %c0_2] : memref<16x128xbf16, #tpu.memory_space<vmem>>, vector<16x128xbf16>
    %2 = arith.maximumf %0, %1 : vector<16x128xbf16>
    %c0_3 = arith.constant 0 : index
    %c0_4 = arith.constant 0 : index
    %3 = vector.load %arg3[%c0_3, %c0_4] : memref<16x128xbf16, #tpu.memory_space<vmem>>, vector<16x128xbf16>
    %4 = arith.maximumf %2, %3 : vector<16x128xbf16>
    %c0_5 = arith.constant 0 : index
    %c0_6 = arith.constant 0 : index
    %5 = vector.load %arg4[%c0_5, %c0_6] : memref<16x128xbf16, #tpu.memory_space<vmem>>, vector<16x128xbf16>
    %6 = arith.maximumf %4, %5 : vector<16x128xbf16>
    %c0_7 = arith.constant 0 : index
    %c0_8 = arith.constant 0 : index
    %7 = vector.load %arg5[%c0_7, %c0_8] : memref<16x128xbf16, #tpu.memory_space<vmem>>, vector<16x128xbf16>
    %8 = arith.maximumf %6, %7 : vector<16x128xbf16>
    %c0_9 = arith.constant 0 : index
    %c0_10 = arith.constant 0 : index
    %9 = vector.load %arg6[%c0_9, %c0_10] : memref<16x128xbf16, #tpu.memory_space<vmem>>, vector<16x128xbf16>
    %10 = arith.maximumf %8, %9 : vector<16x128xbf16>
    %c0_11 = arith.constant 0 : index
    %c0_12 = arith.constant 0 : index
    %11 = vector.load %arg7[%c0_11, %c0_12] : memref<16x128xbf16, #tpu.memory_space<vmem>>, vector<16x128xbf16>
    %12 = arith.maximumf %10, %11 : vector<16x128xbf16>
    %c0_13 = arith.constant 0 : index
    %c0_14 = arith.constant 0 : index
    %13 = vector.load %arg8[%c0_13, %c0_14] : memref<16x128xbf16, #tpu.memory_space<vmem>>, vector<16x128xbf16>
    %14 = arith.maximumf %12, %13 : vector<16x128xbf16>
    %c0_15 = arith.constant 0 : index
    %c0_16 = arith.constant 0 : index
    %15 = vector.load %arg9[%c0_15, %c0_16] : memref<16x128xbf16, #tpu.memory_space<vmem>>, vector<16x128xbf16>
    %16 = arith.maximumf %14, %15 : vector<16x128xbf16>
    %c0_17 = arith.constant 0 : index
    %c0_18 = arith.constant 0 : index
    %17 = vector.load %arg10[%c0_17, %c0_18] : memref<16x128xbf16, #tpu.memory_space<vmem>>, vector<16x128xbf16>
    tpu.vector_store %arg10[%c0_17, %c0_18], %16 {strides = array<i32>} : memref<16x128xbf16, #tpu.memory_space<vmem>>, vector<16x128xbf16>,
    return
  }
  func.func @transform_0(%arg0: i32) -> (i32, i32) {
    %c0_i32 = arith.constant 0 : i32
    %c0_i32_0 = arith.constant 0 : i32
    return %arg0, %c0_i32 : i32, i32
  }
  func.func @transform_1(%arg0: i32) -> (i32, i32) {
    %c0_i32 = arith.constant 0 : i32
    %c0_i32_0 = arith.constant 0 : i32
    return %arg0, %c0_i32 : i32, i32
  }
  func.func @transform_2(%arg0: i32) -> (i32, i32) {
    %c0_i32 = arith.constant 0 : i32
    %c0_i32_0 = arith.constant 0 : i32
    return %arg0, %c0_i32 : i32, i32
  }
  func.func @transform_3(%arg0: i32) -> (i32, i32) {
    %c0_i32 = arith.constant 0 : i32
    %c0_i32_0 = arith.constant 0 : i32
    return %arg0, %c0_i32 : i32, i32
  }
  func.func @transform_4(%arg0: i32) -> (i32, i32) {
    %c0_i32 = arith.constant 0 : i32
    %c0_i32_0 = arith.constant 0 : i32
    return %arg0, %c0_i32 : i32, i32
  }
  func.func @transform_5(%arg0: i32) -> (i32, i32) {
    %c0_i32 = arith.constant 0 : i32
    %c0_i32_0 = arith.constant 0 : i32
    return %arg0, %c0_i32 : i32, i32
  }
  func.func @transform_6(%arg0: i32) -> (i32, i32) {
    %c0_i32 = arith.constant 0 : i32
    %c0_i32_0 = arith.constant 0 : i32
    return %arg0, %c0_i32 : i32, i32
  }
  func.func @transform_7(%arg0: i32) -> (i32, i32) {
    %c0_i32 = arith.constant 0 : i32
    %c0_i32_0 = arith.constant 0 : i32
    return %arg0, %c0_i32 : i32, i32
  }
  func.func @transform_8(%arg0: i32) -> (i32, i32) {
    %c0_i32 = arith.constant 0 : i32
    %c0_i32_0 = arith.constant 0 : i32
    return %arg0, %c0_i32 : i32, i32
  }
  func.func @transform_9(%arg0: i32) -> (i32, i32) {
    %c0_i32 = arith.constant 0 : i32
    %c0_i32_0 = arith.constant 0 : i32
    return %arg0, %c0_i32 : i32, i32
  }
}

module attributes {stable_mosaic.version = 11 : i64} {
  func.func @_matmul_bias_kernel(%arg0: i32, %arg1: i32, %arg2: i32, %arg3: memref<128x512xbf16, #tpu.memory_space<vmem>>, %arg4: memref<512x128xbf16, #tpu.memory_space<vmem>>, %arg5: memref<1x128xf32, #tpu.memory_space<vmem>>, %arg6: memref<128x128xbf16, #tpu.memory_space<vmem>>, %arg7: memref<128x128xf32, #tpu.memory_space<vmem>>) attributes {dimension_semantics = [#tpu.dimension_semantics<parallel>, #tpu.dimension_semantics<parallel>, #tpu.dimension_semantics<arbitrary>], iteration_bounds = array<i64: 1, 1, 1>, scalar_prefetch = 0 : i64, scratch_operands = 1 : i64, tpu.core_type = #tpu.core_type<tc>, window_params = [{transform_indices = @transform_0, window_bounds = array<i64: 128, 512>}, {transform_indices = @transform_1, window_bounds = array<i64: 512, 128>}, {transform_indices = @transform_2, window_bounds = array<i64: 1, 128>}, {transform_indices = @transform_3, window_bounds = array<i64: 128, 128>}]} {
    %c0_i32 = arith.constant 0 : i32
    %0 = arith.cmpi eq, %arg2, %c0_i32 : i32
    %1 = arith.extui %0 : i1 to i32
    %c0_i32_0 = arith.constant 0 : i32
    %2 = arith.cmpi ne, %1, %c0_i32_0 : i32
    scf.if %2 {
      %cst_10 = arith.constant 0.000000e+00 : f32
      %12 = vector.broadcast %cst_10 : f32 to vector<128x128xf32>
      %c0_11 = arith.constant 0 : index
      %c0_12 = arith.constant 0 : index
      %13 = vector.load %arg7[%c0_11, %c0_12] : memref<128x128xf32, #tpu.memory_space<vmem>>, vector<128x128xf32>
      tpu.vector_store %arg7[%c0_11, %c0_12], %12 {strides = array<i32>} : memref<128x128xf32, #tpu.memory_space<vmem>>, vector<128x128xf32>,
    } else {
    }
    %c0 = arith.constant 0 : index
    %c0_1 = arith.constant 0 : index
    %3 = vector.load %arg7[%c0, %c0_1] : memref<128x128xf32, #tpu.memory_space<vmem>>, vector<128x128xf32>
    %c0_2 = arith.constant 0 : index
    %c0_3 = arith.constant 0 : index
    %4 = vector.load %arg3[%c0_2, %c0_3] : memref<128x512xbf16, #tpu.memory_space<vmem>>, vector<128x512xbf16>
    %c0_4 = arith.constant 0 : index
    %c0_5 = arith.constant 0 : index
    %5 = vector.load %arg4[%c0_4, %c0_5] : memref<512x128xbf16, #tpu.memory_space<vmem>>, vector<512x128xbf16>
    %cst = arith.constant dense<0.000000e+00> : vector<128x128xf32>
    %6 = tpu.matmul %4, %5, %cst {dimension_numbers = #tpu.dot_dimension_numbers<[1], [0], [0], [1], [0, 0, 1, 1], [], []>} : vector<128x512xbf16>, vector<512x128xbf16>, vector<128x128xf32> -> vector<128x128xf32>
    %7 = arith.addf %3, %6 : vector<128x128xf32>
    %c0_6 = arith.constant 0 : index
    %c0_7 = arith.constant 0 : index
    %8 = vector.load %arg7[%c0_6, %c0_7] : memref<128x128xf32, #tpu.memory_space<vmem>>, vector<128x128xf32>
    tpu.vector_store %arg7[%c0_6, %c0_7], %7 {strides = array<i32>} : memref<128x128xf32, #tpu.memory_space<vmem>>, vector<128x128xf32>,
    %c0_i32_8 = arith.constant 0 : i32
    %9 = arith.cmpi eq, %arg2, %c0_i32_8 : i32
    %10 = arith.extui %9 : i1 to i32
    %c0_i32_9 = arith.constant 0 : i32
    %11 = arith.cmpi ne, %10, %c0_i32_9 : i32
    scf.if %11 {
      %c0_10 = arith.constant 0 : index
      %c0_11 = arith.constant 0 : index
      %12 = vector.load %arg7[%c0_10, %c0_11] : memref<128x128xf32, #tpu.memory_space<vmem>>, vector<128x128xf32>
      %c0_12 = arith.constant 0 : index
      %c0_13 = arith.constant 0 : index
      %13 = vector.load %arg5[%c0_12, %c0_13] : memref<1x128xf32, #tpu.memory_space<vmem>>, vector<1x128xf32>
      %14 = vector.broadcast %13 : vector<1x128xf32> to vector<128x128xf32>
      %15 = arith.addf %12, %14 : vector<128x128xf32>
      %cst_14 = arith.constant 0.000000e+00 : f32
      %16 = vector.broadcast %cst_14 : f32 to vector<128x128xf32>
      %17 = arith.maximumf %15, %16 : vector<128x128xf32>
      %18 = arith.truncf %17 : vector<128x128xf32> to vector<128x128xbf16>
      %c0_15 = arith.constant 0 : index
      %c0_16 = arith.constant 0 : index
      %19 = vector.load %arg6[%c0_15, %c0_16] : memref<128x128xbf16, #tpu.memory_space<vmem>>, vector<128x128xbf16>
      tpu.vector_store %arg6[%c0_15, %c0_16], %18 {strides = array<i32>} : memref<128x128xbf16, #tpu.memory_space<vmem>>, vector<128x128xbf16>,
    } else {
    }
    return
  }
  func.func @transform_0(%arg0: i32, %arg1: i32, %arg2: i32) -> (i32, i32) {
    %c0_i32 = arith.constant 0 : i32
    return %arg0, %arg2 : i32, i32
  }
  func.func @transform_1(%arg0: i32, %arg1: i32, %arg2: i32) -> (i32, i32) {
    %c0_i32 = arith.constant 0 : i32
    return %arg2, %arg1 : i32, i32
  }
  func.func @transform_2(%arg0: i32, %arg1: i32, %arg2: i32) -> (i32, i32) {
    %c0_i32 = arith.constant 0 : i32
    %c0_i32_0 = arith.constant 0 : i32
    return %c0_i32, %arg1 : i32, i32
  }
  func.func @transform_3(%arg0: i32, %arg1: i32, %arg2: i32) -> (i32, i32) {
    %c0_i32 = arith.constant 0 : i32
    return %arg0, %arg1 : i32, i32
  }
}

module attributes {stable_mosaic.version = 11 : i64} {
  func.func @_matmul_bias_kernel(%arg0: i32, %arg1: i32, %arg2: i32, %arg3: memref<128x256xbf16, #tpu.memory_space<vmem>>, %arg4: memref<256x128xbf16, #tpu.memory_space<vmem>>, %arg5: memref<1x128xf32, #tpu.memory_space<vmem>>, %arg6: memref<128x128xbf16, #tpu.memory_space<vmem>>, %arg7: memref<128x128xf32, #tpu.memory_space<vmem>>) attributes {dimension_semantics = [#tpu.dimension_semantics<parallel>, #tpu.dimension_semantics<parallel>, #tpu.dimension_semantics<arbitrary>], iteration_bounds = array<i64: 1, 1, 1>, scalar_prefetch = 0 : i64, scratch_operands = 1 : i64, tpu.core_type = #tpu.core_type<tc>, window_params = [{transform_indices = @transform_0, window_bounds = array<i64: 128, 256>}, {transform_indices = @transform_1, window_bounds = array<i64: 256, 128>}, {transform_indices = @transform_2, window_bounds = array<i64: 1, 128>}, {transform_indices = @transform_3, window_bounds = array<i64: 128, 128>}]} {
    %c0_i32 = arith.constant 0 : i32
    %0 = arith.cmpi eq, %arg2, %c0_i32 : i32
    %1 = arith.extui %0 : i1 to i32
    %c0_i32_0 = arith.constant 0 : i32
    %2 = arith.cmpi ne, %1, %c0_i32_0 : i32
    scf.if %2 {
      %cst_10 = arith.constant 0.000000e+00 : f32
      %12 = vector.broadcast %cst_10 : f32 to vector<128x128xf32>
      %c0_11 = arith.constant 0 : index
      %c0_12 = arith.constant 0 : index
      %13 = vector.load %arg7[%c0_11, %c0_12] : memref<128x128xf32, #tpu.memory_space<vmem>>, vector<128x128xf32>
      tpu.vector_store %arg7[%c0_11, %c0_12], %12 {strides = array<i32>} : memref<128x128xf32, #tpu.memory_space<vmem>>, vector<128x128xf32>,
    } else {
    }
    %c0 = arith.constant 0 : index
    %c0_1 = arith.constant 0 : index
    %3 = vector.load %arg7[%c0, %c0_1] : memref<128x128xf32, #tpu.memory_space<vmem>>, vector<128x128xf32>
    %c0_2 = arith.constant 0 : index
    %c0_3 = arith.constant 0 : index
    %4 = vector.load %arg3[%c0_2, %c0_3] : memref<128x256xbf16, #tpu.memory_space<vmem>>, vector<128x256xbf16>
    %c0_4 = arith.constant 0 : index
    %c0_5 = arith.constant 0 : index
    %5 = vector.load %arg4[%c0_4, %c0_5] : memref<256x128xbf16, #tpu.memory_space<vmem>>, vector<256x128xbf16>
    %cst = arith.constant dense<0.000000e+00> : vector<128x128xf32>
    %6 = tpu.matmul %4, %5, %cst {dimension_numbers = #tpu.dot_dimension_numbers<[1], [0], [0], [1], [0, 0, 1, 1], [], []>} : vector<128x256xbf16>, vector<256x128xbf16>, vector<128x128xf32> -> vector<128x128xf32>
    %7 = arith.addf %3, %6 : vector<128x128xf32>
    %c0_6 = arith.constant 0 : index
    %c0_7 = arith.constant 0 : index
    %8 = vector.load %arg7[%c0_6, %c0_7] : memref<128x128xf32, #tpu.memory_space<vmem>>, vector<128x128xf32>
    tpu.vector_store %arg7[%c0_6, %c0_7], %7 {strides = array<i32>} : memref<128x128xf32, #tpu.memory_space<vmem>>, vector<128x128xf32>,
    %c0_i32_8 = arith.constant 0 : i32
    %9 = arith.cmpi eq, %arg2, %c0_i32_8 : i32
    %10 = arith.extui %9 : i1 to i32
    %c0_i32_9 = arith.constant 0 : i32
    %11 = arith.cmpi ne, %10, %c0_i32_9 : i32
    scf.if %11 {
      %c0_10 = arith.constant 0 : index
      %c0_11 = arith.constant 0 : index
      %12 = vector.load %arg7[%c0_10, %c0_11] : memref<128x128xf32, #tpu.memory_space<vmem>>, vector<128x128xf32>
      %c0_12 = arith.constant 0 : index
      %c0_13 = arith.constant 0 : index
      %13 = vector.load %arg5[%c0_12, %c0_13] : memref<1x128xf32, #tpu.memory_space<vmem>>, vector<1x128xf32>
      %14 = vector.broadcast %13 : vector<1x128xf32> to vector<128x128xf32>
      %15 = arith.addf %12, %14 : vector<128x128xf32>
      %cst_14 = arith.constant 0.000000e+00 : f32
      %16 = vector.broadcast %cst_14 : f32 to vector<128x128xf32>
      %17 = arith.maximumf %15, %16 : vector<128x128xf32>
      %18 = arith.truncf %17 : vector<128x128xf32> to vector<128x128xbf16>
      %c0_15 = arith.constant 0 : index
      %c0_16 = arith.constant 0 : index
      %19 = vector.load %arg6[%c0_15, %c0_16] : memref<128x128xbf16, #tpu.memory_space<vmem>>, vector<128x128xbf16>
      tpu.vector_store %arg6[%c0_15, %c0_16], %18 {strides = array<i32>} : memref<128x128xbf16, #tpu.memory_space<vmem>>, vector<128x128xbf16>,
    } else {
    }
    return
  }
  func.func @transform_0(%arg0: i32, %arg1: i32, %arg2: i32) -> (i32, i32) {
    %c0_i32 = arith.constant 0 : i32
    return %arg0, %arg2 : i32, i32
  }
  func.func @transform_1(%arg0: i32, %arg1: i32, %arg2: i32) -> (i32, i32) {
    %c0_i32 = arith.constant 0 : i32
    return %arg2, %arg1 : i32, i32
  }
  func.func @transform_2(%arg0: i32, %arg1: i32, %arg2: i32) -> (i32, i32) {
    %c0_i32 = arith.constant 0 : i32
    %c0_i32_0 = arith.constant 0 : i32
    return %c0_i32, %arg1 : i32, i32
  }
  func.func @transform_3(%arg0: i32, %arg1: i32, %arg2: i32) -> (i32, i32) {
    %c0_i32 = arith.constant 0 : i32
    return %arg0, %arg1 : i32, i32
  }
}

module attributes {stable_mosaic.version = 11 : i64} {
  func.func @_matmul_bias_kernel(%arg0: i32, %arg1: i32, %arg2: i32, %arg3: memref<128x128xbf16, #tpu.memory_space<vmem>>, %arg4: memref<128x128xbf16, #tpu.memory_space<vmem>>, %arg5: memref<1x128xf32, #tpu.memory_space<vmem>>, %arg6: memref<128x128xf32, #tpu.memory_space<vmem>>, %arg7: memref<128x128xf32, #tpu.memory_space<vmem>>) attributes {dimension_semantics = [#tpu.dimension_semantics<parallel>, #tpu.dimension_semantics<parallel>, #tpu.dimension_semantics<arbitrary>], iteration_bounds = array<i64: 1, 1, 1>, scalar_prefetch = 0 : i64, scratch_operands = 1 : i64, tpu.core_type = #tpu.core_type<tc>, window_params = [{transform_indices = @transform_0, window_bounds = array<i64: 128, 128>}, {transform_indices = @transform_1, window_bounds = array<i64: 128, 128>}, {transform_indices = @transform_2, window_bounds = array<i64: 1, 128>}, {transform_indices = @transform_3, window_bounds = array<i64: 128, 128>}]} {
    %c0_i32 = arith.constant 0 : i32
    %0 = arith.cmpi eq, %arg2, %c0_i32 : i32
    %1 = arith.extui %0 : i1 to i32
    %c0_i32_0 = arith.constant 0 : i32
    %2 = arith.cmpi ne, %1, %c0_i32_0 : i32
    scf.if %2 {
      %cst_10 = arith.constant 0.000000e+00 : f32
      %12 = vector.broadcast %cst_10 : f32 to vector<128x128xf32>
      %c0_11 = arith.constant 0 : index
      %c0_12 = arith.constant 0 : index
      %13 = vector.load %arg7[%c0_11, %c0_12] : memref<128x128xf32, #tpu.memory_space<vmem>>, vector<128x128xf32>
      tpu.vector_store %arg7[%c0_11, %c0_12], %12 {strides = array<i32>} : memref<128x128xf32, #tpu.memory_space<vmem>>, vector<128x128xf32>,
    } else {
    }
    %c0 = arith.constant 0 : index
    %c0_1 = arith.constant 0 : index
    %3 = vector.load %arg7[%c0, %c0_1] : memref<128x128xf32, #tpu.memory_space<vmem>>, vector<128x128xf32>
    %c0_2 = arith.constant 0 : index
    %c0_3 = arith.constant 0 : index
    %4 = vector.load %arg3[%c0_2, %c0_3] : memref<128x128xbf16, #tpu.memory_space<vmem>>, vector<128x128xbf16>
    %c0_4 = arith.constant 0 : index
    %c0_5 = arith.constant 0 : index
    %5 = vector.load %arg4[%c0_4, %c0_5] : memref<128x128xbf16, #tpu.memory_space<vmem>>, vector<128x128xbf16>
    %cst = arith.constant dense<0.000000e+00> : vector<128x128xf32>
    %6 = tpu.matmul %4, %5, %cst {dimension_numbers = #tpu.dot_dimension_numbers<[1], [0], [0], [1], [0, 0, 1, 1], [], []>} : vector<128x128xbf16>, vector<128x128xbf16>, vector<128x128xf32> -> vector<128x128xf32>
    %7 = arith.addf %3, %6 : vector<128x128xf32>
    %c0_6 = arith.constant 0 : index
    %c0_7 = arith.constant 0 : index
    %8 = vector.load %arg7[%c0_6, %c0_7] : memref<128x128xf32, #tpu.memory_space<vmem>>, vector<128x128xf32>
    tpu.vector_store %arg7[%c0_6, %c0_7], %7 {strides = array<i32>} : memref<128x128xf32, #tpu.memory_space<vmem>>, vector<128x128xf32>,
    %c0_i32_8 = arith.constant 0 : i32
    %9 = arith.cmpi eq, %arg2, %c0_i32_8 : i32
    %10 = arith.extui %9 : i1 to i32
    %c0_i32_9 = arith.constant 0 : i32
    %11 = arith.cmpi ne, %10, %c0_i32_9 : i32
    scf.if %11 {
      %c0_10 = arith.constant 0 : index
      %c0_11 = arith.constant 0 : index
      %12 = vector.load %arg7[%c0_10, %c0_11] : memref<128x128xf32, #tpu.memory_space<vmem>>, vector<128x128xf32>
      %c0_12 = arith.constant 0 : index
      %c0_13 = arith.constant 0 : index
      %13 = vector.load %arg5[%c0_12, %c0_13] : memref<1x128xf32, #tpu.memory_space<vmem>>, vector<1x128xf32>
      %14 = vector.broadcast %13 : vector<1x128xf32> to vector<128x128xf32>
      %15 = arith.addf %12, %14 : vector<128x128xf32>
      %c0_14 = arith.constant 0 : index
      %c0_15 = arith.constant 0 : index
      %16 = vector.load %arg6[%c0_14, %c0_15] : memref<128x128xf32, #tpu.memory_space<vmem>>, vector<128x128xf32>
      tpu.vector_store %arg6[%c0_14, %c0_15], %15 {strides = array<i32>} : memref<128x128xf32, #tpu.memory_space<vmem>>, vector<128x128xf32>,
    } else {
    }
    return
  }
  func.func @transform_0(%arg0: i32, %arg1: i32, %arg2: i32) -> (i32, i32) {
    %c0_i32 = arith.constant 0 : i32
    return %arg0, %arg2 : i32, i32
  }
  func.func @transform_1(%arg0: i32, %arg1: i32, %arg2: i32) -> (i32, i32) {
    %c0_i32 = arith.constant 0 : i32
    return %arg2, %arg1 : i32, i32
  }
  func.func @transform_2(%arg0: i32, %arg1: i32, %arg2: i32) -> (i32, i32) {
    %c0_i32 = arith.constant 0 : i32
    %c0_i32_0 = arith.constant 0 : i32
    return %c0_i32, %arg1 : i32, i32
  }
  func.func @transform_3(%arg0: i32, %arg1: i32, %arg2: i32) -> (i32, i32) {
    %c0_i32 = arith.constant 0 : i32
    return %arg0, %arg1 : i32, i32
  }
}

module attributes {stable_mosaic.version = 11 : i64} {
  func.func @_matmul_bias_kernel(%arg0: i32, %arg1: i32, %arg2: i32, %arg3: memref<128x128xbf16, #tpu.memory_space<vmem>>, %arg4: memref<128x128xbf16, #tpu.memory_space<vmem>>, %arg5: memref<1x128xf32, #tpu.memory_space<vmem>>, %arg6: memref<128x128xbf16, #tpu.memory_space<vmem>>, %arg7: memref<128x128xf32, #tpu.memory_space<vmem>>) attributes {dimension_semantics = [#tpu.dimension_semantics<parallel>, #tpu.dimension_semantics<parallel>, #tpu.dimension_semantics<arbitrary>], iteration_bounds = array<i64: 1, 1, 1>, scalar_prefetch = 0 : i64, scratch_operands = 1 : i64, tpu.core_type = #tpu.core_type<tc>, window_params = [{transform_indices = @transform_0, window_bounds = array<i64: 128, 128>}, {transform_indices = @transform_1, window_bounds = array<i64: 128, 128>}, {transform_indices = @transform_2, window_bounds = array<i64: 1, 128>}, {transform_indices = @transform_3, window_bounds = array<i64: 128, 128>}]} {
    %c0_i32 = arith.constant 0 : i32
    %0 = arith.cmpi eq, %arg2, %c0_i32 : i32
    %1 = arith.extui %0 : i1 to i32
    %c0_i32_0 = arith.constant 0 : i32
    %2 = arith.cmpi ne, %1, %c0_i32_0 : i32
    scf.if %2 {
      %cst_10 = arith.constant 0.000000e+00 : f32
      %12 = vector.broadcast %cst_10 : f32 to vector<128x128xf32>
      %c0_11 = arith.constant 0 : index
      %c0_12 = arith.constant 0 : index
      %13 = vector.load %arg7[%c0_11, %c0_12] : memref<128x128xf32, #tpu.memory_space<vmem>>, vector<128x128xf32>
      tpu.vector_store %arg7[%c0_11, %c0_12], %12 {strides = array<i32>} : memref<128x128xf32, #tpu.memory_space<vmem>>, vector<128x128xf32>,
    } else {
    }
    %c0 = arith.constant 0 : index
    %c0_1 = arith.constant 0 : index
    %3 = vector.load %arg7[%c0, %c0_1] : memref<128x128xf32, #tpu.memory_space<vmem>>, vector<128x128xf32>
    %c0_2 = arith.constant 0 : index
    %c0_3 = arith.constant 0 : index
    %4 = vector.load %arg3[%c0_2, %c0_3] : memref<128x128xbf16, #tpu.memory_space<vmem>>, vector<128x128xbf16>
    %c0_4 = arith.constant 0 : index
    %c0_5 = arith.constant 0 : index
    %5 = vector.load %arg4[%c0_4, %c0_5] : memref<128x128xbf16, #tpu.memory_space<vmem>>, vector<128x128xbf16>
    %cst = arith.constant dense<0.000000e+00> : vector<128x128xf32>
    %6 = tpu.matmul %4, %5, %cst {dimension_numbers = #tpu.dot_dimension_numbers<[1], [0], [0], [1], [0, 0, 1, 1], [], []>} : vector<128x128xbf16>, vector<128x128xbf16>, vector<128x128xf32> -> vector<128x128xf32>
    %7 = arith.addf %3, %6 : vector<128x128xf32>
    %c0_6 = arith.constant 0 : index
    %c0_7 = arith.constant 0 : index
    %8 = vector.load %arg7[%c0_6, %c0_7] : memref<128x128xf32, #tpu.memory_space<vmem>>, vector<128x128xf32>
    tpu.vector_store %arg7[%c0_6, %c0_7], %7 {strides = array<i32>} : memref<128x128xf32, #tpu.memory_space<vmem>>, vector<128x128xf32>,
    %c0_i32_8 = arith.constant 0 : i32
    %9 = arith.cmpi eq, %arg2, %c0_i32_8 : i32
    %10 = arith.extui %9 : i1 to i32
    %c0_i32_9 = arith.constant 0 : i32
    %11 = arith.cmpi ne, %10, %c0_i32_9 : i32
    scf.if %11 {
      %c0_10 = arith.constant 0 : index
      %c0_11 = arith.constant 0 : index
      %12 = vector.load %arg7[%c0_10, %c0_11] : memref<128x128xf32, #tpu.memory_space<vmem>>, vector<128x128xf32>
      %c0_12 = arith.constant 0 : index
      %c0_13 = arith.constant 0 : index
      %13 = vector.load %arg5[%c0_12, %c0_13] : memref<1x128xf32, #tpu.memory_space<vmem>>, vector<1x128xf32>
      %14 = vector.broadcast %13 : vector<1x128xf32> to vector<128x128xf32>
      %15 = arith.addf %12, %14 : vector<128x128xf32>
      %cst_14 = arith.constant 0.000000e+00 : f32
      %16 = vector.broadcast %cst_14 : f32 to vector<128x128xf32>
      %17 = arith.maximumf %15, %16 : vector<128x128xf32>
      %18 = arith.truncf %17 : vector<128x128xf32> to vector<128x128xbf16>
      %c0_15 = arith.constant 0 : index
      %c0_16 = arith.constant 0 : index
      %19 = vector.load %arg6[%c0_15, %c0_16] : memref<128x128xbf16, #tpu.memory_space<vmem>>, vector<128x128xbf16>
      tpu.vector_store %arg6[%c0_15, %c0_16], %18 {strides = array<i32>} : memref<128x128xbf16, #tpu.memory_space<vmem>>, vector<128x128xbf16>,
    } else {
    }
    return
  }
  func.func @transform_0(%arg0: i32, %arg1: i32, %arg2: i32) -> (i32, i32) {
    %c0_i32 = arith.constant 0 : i32
    return %arg0, %arg2 : i32, i32
  }
  func.func @transform_1(%arg0: i32, %arg1: i32, %arg2: i32) -> (i32, i32) {
    %c0_i32 = arith.constant 0 : i32
    return %arg2, %arg1 : i32, i32
  }
  func.func @transform_2(%arg0: i32, %arg1: i32, %arg2: i32) -> (i32, i32) {
    %c0_i32 = arith.constant 0 : i32
    %c0_i32_0 = arith.constant 0 : i32
    return %c0_i32, %arg1 : i32, i32
  }
  func.func @transform_3(%arg0: i32, %arg1: i32, %arg2: i32) -> (i32, i32) {
    %c0_i32 = arith.constant 0 : i32
    return %arg0, %arg1 : i32, i32
  }
}

</mosaic_0001>

<llo_original>
// kernel: alexnet_forward.11
$region0: #{alexnet_forward.11}
  #allocation0 [shape = 'u32[]', space=smem, size = 0x4, offset = 0x4, fixed_abs, tag = 'smem constant byte address 0x4 - core index']
  #allocation1 [shape = 'u32[144,128]{1,0:T(1,128)}', space=vmem, size = 0x12000, scoped, tag = 'internal scratch']
  #allocation2 [shape = 'f32[128,128]{1,0:T(8,128)}', space=vmem, size = 0x10000, scoped, tag = 'scratch operand']
  %s0 = inlined_call_operand.vmem [shape: bf16[640,128], index: 0, kind: input, shape index: {}]
  %s1 = inlined_call_operand.vmem [shape: bf16[128,128], index: 1, kind: input, shape index: {}]
  %s2 = inlined_call_operand.vmem [shape: f32[1,128], index: 2, kind: input, shape index: {}]
  %s3 = inlined_call_operand.vmem [shape: bf16[640,128], index: 3, kind: output, shape index: {}]
  %s4 = sld [smem:[#allocation0]]
  $region53: #{alexnet_forward.11} parent=0
    _
  %s6 = ssub.s32 1, %s4
  %s7 = scalar_select 0, %s6, %s4
  loop: start=0, step=1, limit=7
  $region2: #{alexnet_forward.11} parent=0 // loop_pre_header
    _
  $region3: #{alexnet_forward.11} parent=0 // loop_header
    %s9 = sphi 0, %s13
    %p10 = scmp.ge.s32.totalorder %s9, 7
    %s16 = sphi 0, %s35
    %s17 = sphi 0, %s31
    %s18 = sphi 0, %s27
    %s19 = sphi 0, %s16
    %s20 = sphi 0, %s17
    %s21 = sphi 0, %s18
    %s22 = sphi 0, %s19
    %s23 = sphi 0, %s20
    %s24 = sphi 0, %s21
    %s40 = sphi 0, %s42
    %s43 = sphi 0, %s40
    %s44 = sphi 0, %s43
    %s60 = sphi 0, %s44
    %s68 = sphi 0, %s70
    %s71 = sphi 0, %s68
    %s72 = sphi 0, %s71
    %s88 = sphi 0, %s72
    %s94 = sphi 0, %s96
    %s97 = sphi 0, %s94
    %s98 = sphi 0, %s97
    %s114 = sphi 0, %s98
    %s122 = sphi 0, %s124
    %s125 = sphi 0, %s122
    %s126 = sphi 0, %s125
    %s142 = sphi 0, %s126
  $region4: #{alexnet_forward.11} parent=0 // loop_header_branch
    %12 = sbr.rel (%p10) target = $region8
  $region5: #{alexnet_forward.11} parent=0 // loop_body
    %s14 = ssub.s32 %s9, 1
    %s15 = ssub.s32 %s9, 2
    %s25 = sadd.s32 1, %s18
    %p26 = scmp.ge.s32.totalorder %s25, 1
    %s27 = scalar_select %p26, 0, %s25
    %s28 = sadd.s32 1, %s17
    %s29 = scalar_select %p26, %s28, %s17
    %p30 = scmp.ge.s32.totalorder %s29, 1
    %s31 = scalar_select %p30, 0, %s29
    %s32 = sadd.s32 1, %s16
    %s33 = scalar_select %p30, %s32, %s16
    %p34 = scmp.ge.s32.totalorder %s33, 5
    %s35 = scalar_select %p34, 0, %s33
    %s36 = ssub.s32 %s16, %s35
    %s37 = ssub.s32 %s18, %s27
    %s38 = sor.u32 %s36, %s37
    %p39 = scmp.eq.s32.totalorder %s38, 0
    %s41 = sadd.s32 %s40, 1
    %s42 = scalar_select %p39, %s40, %s41
    %p45 = pneg %p39
    %p46 = scmp.eq.s32.totalorder %s9, 4
    %p47 = por %p45, %p46
    %p48 = scmp.ne.s32.totalorder %s40, %s43
    %p49 = scmp.eq.s32.totalorder %s9, 0
    %p50 = por %p48, %p49
    %p51 = scmp.ne.s32.totalorder %s40, %s43
    %p52 = scmp.eq.s32.totalorder %s14, 4
    %p53 = por %p51, %p52
    %p54 = scmp.ne.s32.totalorder %s43, %s44
    %p55 = scmp.eq.s32.totalorder %s14, 0
    %p56 = por %p54, %p55
    %p57 = scmp.ne.s32.totalorder %s43, %s44
    %p58 = scmp.eq.s32.totalorder %s15, 4
    %p59 = por %p57, %p58
    %p61 = scmp.ne.s32.totalorder %s44, %s60
    %p62 = scmp.eq.s32.totalorder %s15, 0
    %p63 = por %p61, %p62
    %s64 = ssub.s32 %s18, %s27
    %s65 = ssub.s32 %s17, %s31
    %s66 = sor.u32 %s64, %s65
    %p67 = scmp.eq.s32.totalorder %s66, 0
    %s69 = sadd.s32 %s68, 1
    %s70 = scalar_select %p67, %s68, %s69
    %p73 = pneg %p67
    %p74 = scmp.eq.s32.totalorder %s9, 4
    %p75 = por %p73, %p74
    %p76 = scmp.ne.s32.totalorder %s68, %s71
    %p77 = scmp.eq.s32.totalorder %s9, 0
    %p78 = por %p76, %p77
    %p79 = scmp.ne.s32.totalorder %s68, %s71
    %p80 = scmp.eq.s32.totalorder %s14, 4
    %p81 = por %p79, %p80
    %p82 = scmp.ne.s32.totalorder %s71, %s72
    %p83 = scmp.eq.s32.totalorder %s14, 0
    %p84 = por %p82, %p83
    %p85 = scmp.ne.s32.totalorder %s71, %s72
    %p86 = scmp.eq.s32.totalorder %s15, 4
    %p87 = por %p85, %p86
    %p89 = scmp.ne.s32.totalorder %s72, %s88
    %p90 = scmp.eq.s32.totalorder %s15, 0
    %p91 = por %p89, %p90
    %s92 = ssub.s32 %s17, %s31
    %p93 = scmp.eq.s32.totalorder %s92, 0
    %s95 = sadd.s32 %s94, 1
    %s96 = scalar_select %p93, %s94, %s95
    %p99 = pneg %p93
    %p100 = scmp.eq.s32.totalorder %s9, 4
    %p101 = por %p99, %p100
    %p102 = scmp.ne.s32.totalorder %s94, %s97
    %p103 = scmp.eq.s32.totalorder %s9, 0
    %p104 = por %p102, %p103
    %p105 = scmp.ne.s32.totalorder %s94, %s97
    %p106 = scmp.eq.s32.totalorder %s14, 4
    %p107 = por %p105, %p106
    %p108 = scmp.ne.s32.totalorder %s97, %s98
    %p109 = scmp.eq.s32.totalorder %s14, 0
    %p110 = por %p108, %p109
    %p111 = scmp.ne.s32.totalorder %s97, %s98
    %p112 = scmp.eq.s32.totalorder %s15, 4
    %p113 = por %p111, %p112
    %p115 = scmp.ne.s32.totalorder %s98, %s114
    %p116 = scmp.eq.s32.totalorder %s15, 0
    %p117 = por %p115, %p116
    %s118 = ssub.s32 %s16, %s35
    %s119 = ssub.s32 %s17, %s31
    %s120 = sor.u32 %s118, %s119
    %p121 = scmp.eq.s32.totalorder %s120, 0
    %s123 = sadd.s32 %s122, 1
    %s124 = scalar_select %p121, %s122, %s123
    %p127 = pneg %p121
    %p128 = scmp.eq.s32.totalorder %s9, 4
    %p129 = por %p127, %p128
    %p130 = scmp.ne.s32.totalorder %s122, %s125
    %p131 = scmp.eq.s32.totalorder %s9, 0
    %p132 = por %p130, %p131
    %p133 = scmp.ne.s32.totalorder %s122, %s125
    %p134 = scmp.eq.s32.totalorder %s14, 4
    %p135 = por %p133, %p134
    %p136 = scmp.ne.s32.totalorder %s125, %s126
    %p137 = scmp.eq.s32.totalorder %s14, 0
    %p138 = por %p136, %p137
    %p139 = scmp.ne.s32.totalorder %s125, %s126
    %p140 = scmp.eq.s32.totalorder %s15, 4
    %p141 = por %p139, %p140
    %p143 = scmp.ne.s32.totalorder %s126, %s142
    %p144 = scmp.eq.s32.totalorder %s15, 0
    %p145 = por %p143, %p144
    %p146 = scmp.le.s32.totalorder 1, %s9
    %p147 = scmp.lt.s32.totalorder %s9, 6
    %p148 = pnand %p146, %p147
    %p149 = pneg %p148
    // Predicated region
    $region9: #{alexnet_forward.11} parent=5 // pred_check
      _
    $region10: #{alexnet_forward.11} parent=5 // pred_check_branch
      %151 = sbr.rel (%p148) target = $region12
    $region11: #{alexnet_forward.11} parent=5 // pred_region
      %s152 = ssub.s32 %s9, 1
      // Predicated region
      $region13: #{alexnet_forward.11} parent=11 // pred_check
        %p153 = pneg %p84
      $region14: #{alexnet_forward.11} parent=11 // pred_check_branch
        %155 = sbr.rel (%p153) target = $region16
      $region15: #{alexnet_forward.11} parent=11 // pred_region
        %s156 = smul.u32 16, %s21
        %p157 = scmp.lt.s32.totalorder %s156, 15
        %s158 = scalar_select %p157, %s156, 15
        %p159 = scmp.lt.s32.totalorder %s20, 0
        %s160 = scalar_select %p159, %s20, 0
        %s161 = sadd.s32 %s160, %s158
        %s162 = smul.addr %s161, 4
        %s163 = scalar_lea.vmem %s1, %s162
        %s164 = smul.u32 16, %s21
      $region16: #{alexnet_forward.11} parent=11 // pred_fallthru
        _
      // Predicated region
      $region17: #{alexnet_forward.11} parent=11 // pred_check
        %p165 = pneg %p110
      $region18: #{alexnet_forward.11} parent=11 // pred_check_branch
        %167 = sbr.rel (%p165) target = $region20
      $region19: #{alexnet_forward.11} parent=11 // pred_region
        %p168 = scmp.lt.s32.totalorder %s20, 0
        %s169 = scalar_select %p168, %s20, 0
        %s170 = scalar_lea.vmem %s2, %s169
      $region20: #{alexnet_forward.11} parent=11 // pred_fallthru
        _
    $region12: #{alexnet_forward.11} parent=5 // pred_fallthru
      _
    %p171 = scmp.lt.s32.totalorder %s9, 5
    // Predicated region
    $region21: #{alexnet_forward.11} parent=5 // pred_check
      %p172 = pneg %p171
    $region22: #{alexnet_forward.11} parent=5 // pred_check_branch
      %174 = sbr.rel (%p172) target = $region24
    $region23: #{alexnet_forward.11} parent=5 // pred_region
      // Predicated region
      $region25: #{alexnet_forward.11} parent=23 // pred_check
        %p175 = pneg %p50
      $region26: #{alexnet_forward.11} parent=23 // pred_check_branch
        %177 = sbr.rel (%p175) target = $region28
      $region27: #{alexnet_forward.11} parent=23 // pred_region
        %s178 = smul.u32 16, %s16
        %p179 = scmp.lt.s32.totalorder %s178, 79
        %s180 = scalar_select %p179, %s178, 79
        %p181 = scmp.lt.s32.totalorder %s18, 0
        %s182 = scalar_select %p181, %s18, 0
        %s183 = sadd.s32 %s182, %s180
        %s184 = smul.addr %s183, 4
        %s185 = scalar_lea.vmem %s0, %s184
        %s186 = smul.u32 16, %s16
      $region28: #{alexnet_forward.11} parent=23 // pred_fallthru
        _
    $region24: #{alexnet_forward.11} parent=5 // pred_fallthru
      _
    %p187 = scmp.le.s32.totalorder 1, %s9
    %p188 = scmp.lt.s32.totalorder %s9, 6
    %p189 = pnand %p187, %p188
    %p190 = pneg %p189
    // Predicated region
    $region29: #{alexnet_forward.11} parent=5 // pred_check
      _
    $region30: #{alexnet_forward.11} parent=5 // pred_check_branch
      %192 = sbr.rel (%p189) target = $region32
    $region31: #{alexnet_forward.11} parent=5 // pred_region
      %s193 = ssub.s32 %s9, 1
      %s194 = smul.u32 16, %s19
      %p195 = scmp.lt.s32.totalorder %s194, 79
      %s196 = scalar_select %p195, %s194, 79
      %p197 = scmp.lt.s32.totalorder %s21, 0
      %s198 = scalar_select %p197, %s21, 0
      %s199 = sadd.s32 %s198, %s196
      %s200 = smul.addr %s199, 4
      %s201 = scalar_lea.vmem %s0, %s200
      %p202 = pneg %p56
      %p203 = pneg %p53
      %s204 = smul.u32 16, %s21
      %p205 = scmp.lt.s32.totalorder %s204, 15
      %s206 = scalar_select %p205, %s204, 15
      %p207 = scmp.lt.s32.totalorder %s20, 0
      %s208 = scalar_select %p207, %s20, 0
      %s209 = sadd.s32 %s208, %s206
      %s210 = smul.addr %s209, 4
      %s211 = scalar_lea.vmem %s1, %s210
      %p212 = pneg %p84
      %p213 = pneg %p81
      %p214 = scmp.lt.s32.totalorder %s20, 0
      %s215 = scalar_select %p214, %s20, 0
      %s216 = scalar_lea.vmem %s2, %s215
      %p217 = pneg %p110
      %p218 = pneg %p107
      %p219 = pneg %p138
      %p220 = pneg %p135
      %s221 = smul.u32 16, %s19
      %p222 = scmp.lt.s32.totalorder %s221, 79
      %s223 = scalar_select %p222, %s221, 79
      %p224 = scmp.lt.s32.totalorder %s20, 0
      %s225 = scalar_select %p224, %s20, 0
      %s226 = sadd.s32 %s225, %s223
      %s227 = smul.addr %s226, 4
      %s228 = scalar_lea.vmem %s3, %s227
      %s229 = smul.u32 16, %s19
      %p230 = scmp.lt.s32.totalorder %s229, 79
      %s231 = scalar_select %p230, %s229, 79
      %p232 = scmp.lt.s32.totalorder %s21, 0
      %s233 = scalar_select %p232, %s21, 0
      %s234 = sadd.s32 %s233, %s231
      %s235 = smul.addr %s234, 4
      %s236 = scalar_lea.vmem %s0, %s235
      %s237 = smul.u32 16, %s19
      %s238 = smul.u32 16, %s21
      %p239 = scmp.lt.s32.totalorder %s238, 15
      %s240 = scalar_select %p239, %s238, 15
      %p241 = scmp.lt.s32.totalorder %s20, 0
      %s242 = scalar_select %p241, %s20, 0
      %s243 = sadd.s32 %s242, %s240
      %s244 = smul.addr %s243, 4
      %s245 = scalar_lea.vmem %s1, %s244
      %s246 = smul.u32 16, %s21
      %p247 = scmp.lt.s32.totalorder %s20, 0
      %s248 = scalar_select %p247, %s20, 0
      %s249 = scalar_lea.vmem %s2, %s248
      %s250 = smul.u32 16, %s19
      %p251 = scmp.lt.s32.totalorder %s250, 79
      %s252 = scalar_select %p251, %s250, 79
      %p253 = scmp.lt.s32.totalorder %s20, 0
      %s254 = scalar_select %p253, %s20, 0
      %s255 = sadd.s32 %s254, %s252
      %s256 = smul.addr %s255, 4
      %s257 = scalar_lea.vmem %s3, %s256
      %s258 = smul.u32 16, %s19
      %p260 = scmp.eq.s32.totalorder %s21, 0
      // Predicated region
      $region33: #{alexnet_forward.11} parent=31 // pred_check
        %p261 = pneg %p260
      $region34: #{alexnet_forward.11} parent=31 // pred_check_branch
        %263 = sbr.rel (%p261) target = $region36
      $region35: #{alexnet_forward.11} parent=31 // pred_region
        %264 = vst [vmem:[#allocation2] sm:$0xff] 0.0
        %265 = vst [vmem:[#allocation2 + $0x8] sm:$0xff] 0.0
        %266 = vst [vmem:[#allocation2 + $0x10] sm:$0xff] 0.0
        %267 = vst [vmem:[#allocation2 + $0x18] sm:$0xff] 0.0
        %268 = vst [vmem:[#allocation2 + $0x20] sm:$0xff] 0.0
        %269 = vst [vmem:[#allocation2 + $0x28] sm:$0xff] 0.0
        %270 = vst [vmem:[#allocation2 + $0x30] sm:$0xff] 0.0
        %271 = vst [vmem:[#allocation2 + $0x38] sm:$0xff] 0.0
        %272 = vst [vmem:[#allocation2 + $0x40] sm:$0xff] 0.0
        %273 = vst [vmem:[#allocation2 + $0x48] sm:$0xff] 0.0
        %274 = vst [vmem:[#allocation2 + $0x50] sm:$0xff] 0.0
        %275 = vst [vmem:[#allocation2 + $0x58] sm:$0xff] 0.0
        %276 = vst [vmem:[#allocation2 + $0x60] sm:$0xff] 0.0
        %277 = vst [vmem:[#allocation2 + $0x68] sm:$0xff] 0.0
        %278 = vst [vmem:[#allocation2 + $0x70] sm:$0xff] 0.0
        %279 = vst [vmem:[#allocation2 + $0x78] sm:$0xff] 0.0
      $region36: #{alexnet_forward.11} parent=31 // pred_fallthru
        _
      %v280 = vld [vmem:[#allocation2] sm:$0xff]
      %v281 = vld [vmem:[#allocation2 + $0x8] sm:$0xff]
      %v282 = vld [vmem:[#allocation2 + $0x10] sm:$0xff]
      %v283 = vld [vmem:[#allocation2 + $0x18] sm:$0xff]
      %v284 = vld [vmem:[#allocation2 + $0x20] sm:$0xff]
      %v285 = vld [vmem:[#allocation2 + $0x28] sm:$0xff]
      %v286 = vld [vmem:[#allocation2 + $0x30] sm:$0xff]
      %v287 = vld [vmem:[#allocation2 + $0x38] sm:$0xff]
      %v288 = vld [vmem:[#allocation2 + $0x40] sm:$0xff]
      %v289 = vld [vmem:[#allocation2 + $0x48] sm:$0xff]
      %v290 = vld [vmem:[#allocation2 + $0x50] sm:$0xff]
      %v291 = vld [vmem:[#allocation2 + $0x58] sm:$0xff]
      %v292 = vld [vmem:[#allocation2 + $0x60] sm:$0xff]
      %v293 = vld [vmem:[#allocation2 + $0x68] sm:$0xff]
      %v294 = vld [vmem:[#allocation2 + $0x70] sm:$0xff]
      %v295 = vld [vmem:[#allocation2 + $0x78] sm:$0xff]
      %v296 = vld [vmem:[%s236] sm:$0xf]
      %v297 = vld [vmem:[%s236 + $0x4] sm:$0xf]
      %v298 = vld [vmem:[%s236 + $0x8] sm:$0xf]
      %v299 = vld [vmem:[%s236 + $0xc] sm:$0xf]
      %v300 = vld [vmem:[%s236 + $0x10] sm:$0xf]
      %v301 = vld [vmem:[%s236 + $0x14] sm:$0xf]
      %v302 = vld [vmem:[%s236 + $0x18] sm:$0xf]
      %v303 = vld [vmem:[%s236 + $0x1c] sm:$0xf]
      %v304 = vld [vmem:[%s236 + $0x20] sm:$0xf]
      %v305 = vld [vmem:[%s236 + $0x24] sm:$0xf]
      %v306 = vld [vmem:[%s236 + $0x28] sm:$0xf]
      %v307 = vld [vmem:[%s236 + $0x2c] sm:$0xf]
      %v308 = vld [vmem:[%s236 + $0x30] sm:$0xf]
      %v309 = vld [vmem:[%s236 + $0x34] sm:$0xf]
      %v310 = vld [vmem:[%s236 + $0x38] sm:$0xf]
      %v311 = vld [vmem:[%s236 + $0x3c] sm:$0xf]
      %v312 = vld [vmem:[%s245] sm:$0xf]
      %v313 = vld [vmem:[%s245 + $0x4] sm:$0xf]
      %v314 = vld [vmem:[%s245 + $0x8] sm:$0xf]
      %v315 = vld [vmem:[%s245 + $0xc] sm:$0xf]
      %v316 = vld [vmem:[%s245 + $0x10] sm:$0xf]
      %v317 = vld [vmem:[%s245 + $0x14] sm:$0xf]
      %v318 = vld [vmem:[%s245 + $0x18] sm:$0xf]
      %v319 = vld [vmem:[%s245 + $0x1c] sm:$0xf]
      %v320 = vld [vmem:[%s245 + $0x20] sm:$0xf]
      %v321 = vld [vmem:[%s245 + $0x24] sm:$0xf]
      %v322 = vld [vmem:[%s245 + $0x28] sm:$0xf]
      %v323 = vld [vmem:[%s245 + $0x2c] sm:$0xf]
      %v324 = vld [vmem:[%s245 + $0x30] sm:$0xf]
      %v325 = vld [vmem:[%s245 + $0x34] sm:$0xf]
      %v326 = vld [vmem:[%s245 + $0x38] sm:$0xf]
      %v327 = vld [vmem:[%s245 + $0x3c] sm:$0xf]
      %v344 = vunpack.c.l.b16 %v296
      %v345 = vunpack.c.l.b16 %v297
      %v346 = vunpack.c.l.b16 %v298
      %v347 = vunpack.c.l.b16 %v299
      %v348 = vunpack.c.l.b16 %v300
      %v349 = vunpack.c.l.b16 %v301
      %v350 = vunpack.c.l.b16 %v302
      %v351 = vunpack.c.l.b16 %v303
      %v352 = vunpack.c.l.b16 %v304
      %v353 = vunpack.c.l.b16 %v305
      %v354 = vunpack.c.l.b16 %v306
      %v355 = vunpack.c.l.b16 %v307
      %v356 = vunpack.c.l.b16 %v308
      %v357 = vunpack.c.l.b16 %v309
      %v358 = vunpack.c.l.b16 %v310
      %v359 = vunpack.c.l.b16 %v311
      %v360 = vpack.c.b16 %v345, %v344
      %v361 = vpack.c.b16 %v347, %v346
      %v362 = vpack.c.b16 %v349, %v348
      %v363 = vpack.c.b16 %v351, %v350
      %v364 = vpack.c.b16 %v353, %v352
      %v365 = vpack.c.b16 %v355, %v354
      %v366 = vpack.c.b16 %v357, %v356
      %v367 = vpack.c.b16 %v359, %v358
      %v392 = vunpack.c.l.b16 %v312
      %v393 = vunpack.c.l.b16 %v313
      %v394 = vunpack.c.l.b16 %v314
      %v395 = vunpack.c.l.b16 %v315
      %v396 = vunpack.c.l.b16 %v316
      %v397 = vunpack.c.l.b16 %v317
      %v398 = vunpack.c.l.b16 %v318
      %v399 = vunpack.c.l.b16 %v319
      %v400 = vunpack.c.l.b16 %v320
      %v401 = vunpack.c.l.b16 %v321
      %v402 = vunpack.c.l.b16 %v322
      %v403 = vunpack.c.l.b16 %v323
      %v404 = vunpack.c.l.b16 %v324
      %v405 = vunpack.c.l.b16 %v325
      %v406 = vunpack.c.l.b16 %v326
      %v407 = vunpack.c.l.b16 %v327
      %v408 = vpack.c.b16 %v393, %v392
      %v409 = vpack.c.b16 %v395, %v394
      %v410 = vpack.c.b16 %v397, %v396
      %v411 = vpack.c.b16 %v399, %v398
      %v412 = vpack.c.b16 %v401, %v400
      %v413 = vpack.c.b16 %v403, %v402
      %v414 = vpack.c.b16 %v405, %v404
      %v415 = vpack.c.b16 %v407, %v406
      %424 = vmatprep.subr.bf16.mxu0 0
      %425 = vmatpush1.bf16.msra.mxu0 %v408
      %426 = vmatprep.subr.bf16.mxu0 0
      %427 = vmatpush1.bf16.msra.mxu0 %v409
      %428 = vmatprep.subr.bf16.mxu0 0
      %429 = vmatpush1.bf16.msra.mxu0 %v410
      %430 = vmatprep.subr.bf16.mxu0 0
      %431 = vmatpush1.bf16.msra.mxu0 %v411
      %432 = vmatprep.subr.bf16.mxu0 0
      %433 = vmatpush1.bf16.msra.mxu0 %v412
      %434 = vmatprep.subr.bf16.mxu0 0
      %435 = vmatpush1.bf16.msra.mxu0 %v413
      %436 = vmatprep.subr.bf16.mxu0 0
      %437 = vmatpush1.bf16.msra.mxu0 %v414
      %438 = vmatprep.subr.bf16.mxu0 0
      %439 = vmatpush1.bf16.msra.mxu0 %v415
      %440 = vmatprep.subr.bf16.mxu0 0
      %441 = vmatpush1.bf16.msra.mxu0 0
      %442 = vmatprep.subr.bf16.mxu0 0
      %443 = vmatpush1.bf16.msra.mxu0 0
      %444 = vmatprep.subr.bf16.mxu0 0
      %445 = vmatpush1.bf16.msra.mxu0 0
      %446 = vmatprep.subr.bf16.mxu0 0
      %447 = vmatpush1.bf16.msra.mxu0 0
      %448 = vmatprep.subr.bf16.mxu0 0
      %449 = vmatpush1.bf16.msra.mxu0 0
      %450 = vmatprep.subr.bf16.mxu0 0
      %451 = vmatpush1.bf16.msra.mxu0 0
      %452 = vmatprep.subr.bf16.mxu0 0
      %453 = vmatpush1.bf16.msra.mxu0 0
      %454 = vmatprep.subr.bf16.mxu0 0
      %455 = vmatpush1.bf16.msra.mxu0 0
      %456 = vmatprep.mubr.bf16.mxu0 0
      %457 = vmatmul.mubr.bf16.gmra.mrb[0].mxu0 %v360
      %v458 = vpop.f32.mrb[0].mxu0
      %v459 = vadd.f32 0.0, %v458
      %v460 = vpop.f32.mrb[0].mxu0
      %v461 = vpop.f32.mrb[0].mxu0
      %v462 = vadd.f32 0.0, %v461
      %v463 = vpop.f32.mrb[0].mxu0
      %464 = vmatprep.mubr.bf16.mxu0 0
      %465 = vmatmul.mubr.bf16.gmra.mrb[0].mxu0 %v361
      %v466 = vpop.f32.mrb[0].mxu0
      %v467 = vadd.f32 0.0, %v466
      %v468 = vpop.f32.mrb[0].mxu0
      %v469 = vpop.f32.mrb[0].mxu0
      %v470 = vadd.f32 0.0, %v469
      %v471 = vpop.f32.mrb[0].mxu0
      %472 = vmatprep.mubr.bf16.mxu0 0
      %473 = vmatmul.mubr.bf16.gmra.mrb[0].mxu0 %v362
      %v474 = vpop.f32.mrb[0].mxu0
      %v475 = vadd.f32 0.0, %v474
      %v476 = vpop.f32.mrb[0].mxu0
      %v477 = vpop.f32.mrb[0].mxu0
      %v478 = vadd.f32 0.0, %v477
      %v479 = vpop.f32.mrb[0].mxu0
      %480 = vmatprep.mubr.bf16.mxu0 0
      %481 = vmatmul.mubr.bf16.gmra.mrb[0].mxu0 %v363
      %v482 = vpop.f32.mrb[0].mxu0
      %v483 = vadd.f32 0.0, %v482
      %v484 = vpop.f32.mrb[0].mxu0
      %v485 = vpop.f32.mrb[0].mxu0
      %v486 = vadd.f32 0.0, %v485
      %v487 = vpop.f32.mrb[0].mxu0
      %488 = vmatprep.mubr.bf16.mxu0 0
      %489 = vmatmul.mubr.bf16.gmra.mrb[0].mxu0 %v364
      %v490 = vpop.f32.mrb[0].mxu0
      %v491 = vadd.f32 0.0, %v490
      %v492 = vpop.f32.mrb[0].mxu0
      %v493 = vpop.f32.mrb[0].mxu0
      %v494 = vadd.f32 0.0, %v493
      %v495 = vpop.f32.mrb[0].mxu0
      %496 = vmatprep.mubr.bf16.mxu0 0
      %497 = vmatmul.mubr.bf16.gmra.mrb[0].mxu0 %v365
      %v498 = vpop.f32.mrb[0].mxu0
      %v499 = vadd.f32 0.0, %v498
      %v500 = vpop.f32.mrb[0].mxu0
      %v501 = vpop.f32.mrb[0].mxu0
      %v502 = vadd.f32 0.0, %v501
      %v503 = vpop.f32.mrb[0].mxu0
      %504 = vmatprep.mubr.bf16.mxu0 0
      %505 = vmatmul.mubr.bf16.gmra.mrb[0].mxu0 %v366
      %v506 = vpop.f32.mrb[0].mxu0
      %v507 = vadd.f32 0.0, %v506
      %v508 = vpop.f32.mrb[0].mxu0
      %v509 = vpop.f32.mrb[0].mxu0
      %v510 = vadd.f32 0.0, %v509
      %v511 = vpop.f32.mrb[0].mxu0
      %512 = vmatprep.mubr.bf16.mxu0 0
      %513 = vmatmul.mubr.bf16.gmra.mrb[0].mxu0 %v367
      %v514 = vpop.f32.mrb[0].mxu0
      %v515 = vadd.f32 0.0, %v514
      %v516 = vpop.f32.mrb[0].mxu0
      %v517 = vpop.f32.mrb[0].mxu0
      %v518 = vadd.f32 0.0, %v517
      %v519 = vpop.f32.mrb[0].mxu0
      %520 = vdwg.mxu0
      %v521 = vadd.f32 %v280, %v459
      %v522 = vadd.f32 %v281, %v462
      %v523 = vadd.f32 %v282, %v467
      %v524 = vadd.f32 %v283, %v470
      %v525 = vadd.f32 %v284, %v475
      %v526 = vadd.f32 %v285, %v478
      %v527 = vadd.f32 %v286, %v483
      %v528 = vadd.f32 %v287, %v486
      %v529 = vadd.f32 %v288, %v491
      %v530 = vadd.f32 %v289, %v494
      %v531 = vadd.f32 %v290, %v499
      %v532 = vadd.f32 %v291, %v502
      %v533 = vadd.f32 %v292, %v507
      %v534 = vadd.f32 %v293, %v510
      %v535 = vadd.f32 %v294, %v515
      %v536 = vadd.f32 %v295, %v518
      %537 = vst [vmem:[#allocation2] sm:$0xff] %v521
      %538 = vst [vmem:[#allocation2 + $0x8] sm:$0xff] %v522
      %539 = vst [vmem:[#allocation2 + $0x10] sm:$0xff] %v523
      %540 = vst [vmem:[#allocation2 + $0x18] sm:$0xff] %v524
      %541 = vst [vmem:[#allocation2 + $0x20] sm:$0xff] %v525
      %542 = vst [vmem:[#allocation2 + $0x28] sm:$0xff] %v526
      %543 = vst [vmem:[#allocation2 + $0x30] sm:$0xff] %v527
      %544 = vst [vmem:[#allocation2 + $0x38] sm:$0xff] %v528
      %545 = vst [vmem:[#allocation2 + $0x40] sm:$0xff] %v529
      %546 = vst [vmem:[#allocation2 + $0x48] sm:$0xff] %v530
      %547 = vst [vmem:[#allocation2 + $0x50] sm:$0xff] %v531
      %548 = vst [vmem:[#allocation2 + $0x58] sm:$0xff] %v532
      %549 = vst [vmem:[#allocation2 + $0x60] sm:$0xff] %v533
      %550 = vst [vmem:[#allocation2 + $0x68] sm:$0xff] %v534
      %551 = vst [vmem:[#allocation2 + $0x70] sm:$0xff] %v535
      %552 = vst [vmem:[#allocation2 + $0x78] sm:$0xff] %v536
      // Predicated region
      $region37: #{alexnet_forward.11} parent=31 // pred_check
        %p553 = pneg %p260
      $region38: #{alexnet_forward.11} parent=31 // pred_check_branch
        %555 = sbr.rel (%p553) target = $region40
      $region39: #{alexnet_forward.11} parent=31 // pred_region
        %v556 = vld [vmem:[#allocation2] sm:$0xff]
        %v557 = vld [vmem:[#allocation2 + $0x8] sm:$0xff]
        %v558 = vld [vmem:[#allocation2 + $0x10] sm:$0xff]
        %v559 = vld [vmem:[#allocation2 + $0x18] sm:$0xff]
        %v560 = vld [vmem:[#allocation2 + $0x20] sm:$0xff]
        %v561 = vld [vmem:[#allocation2 + $0x28] sm:$0xff]
        %v562 = vld [vmem:[#allocation2 + $0x30] sm:$0xff]
        %v563 = vld [vmem:[#allocation2 + $0x38] sm:$0xff]
        %v564 = vld [vmem:[#allocation2 + $0x40] sm:$0xff]
        %v565 = vld [vmem:[#allocation2 + $0x48] sm:$0xff]
        %v566 = vld [vmem:[#allocation2 + $0x50] sm:$0xff]
        %v567 = vld [vmem:[#allocation2 + $0x58] sm:$0xff]
        %v568 = vld [vmem:[#allocation2 + $0x60] sm:$0xff]
        %v569 = vld [vmem:[#allocation2 + $0x68] sm:$0xff]
        %v570 = vld [vmem:[#allocation2 + $0x70] sm:$0xff]
        %v571 = vld [vmem:[#allocation2 + $0x78] sm:$0xff]
        %v572 = vld [vmem:[%s249] sm:$0x1]
        %v574 = vlaneseq
        %v575 = vshrl.u32 %v574, 7
        %v576 = vsub.s32 0, %v575
        %v577 = vrot.slane %v572, %v576
        %v579 = vadd.f32 %v556, %v577
        %v580 = vadd.f32 %v557, %v577
        %v581 = vadd.f32 %v558, %v577
        %v582 = vadd.f32 %v559, %v577
        %v583 = vadd.f32 %v560, %v577
        %v584 = vadd.f32 %v561, %v577
        %v585 = vadd.f32 %v562, %v577
        %v586 = vadd.f32 %v563, %v577
        %v587 = vadd.f32 %v564, %v577
        %v588 = vadd.f32 %v565, %v577
        %v589 = vadd.f32 %v566, %v577
        %v590 = vadd.f32 %v567, %v577
        %v591 = vadd.f32 %v568, %v577
        %v592 = vadd.f32 %v569, %v577
        %v593 = vadd.f32 %v570, %v577
        %v594 = vadd.f32 %v571, %v577
        %v595 = vmax.f32 %v579, 0.0
        %v596 = vmax.f32 %v580, 0.0
        %v597 = vmax.f32 %v581, 0.0
        %v598 = vmax.f32 %v582, 0.0
        %v599 = vmax.f32 %v583, 0.0
        %v600 = vmax.f32 %v584, 0.0
        %v601 = vmax.f32 %v585, 0.0
        %v602 = vmax.f32 %v586, 0.0
        %v603 = vmax.f32 %v587, 0.0
        %v604 = vmax.f32 %v588, 0.0
        %v605 = vmax.f32 %v589, 0.0
        %v606 = vmax.f32 %v590, 0.0
        %v607 = vmax.f32 %v591, 0.0
        %v608 = vmax.f32 %v592, 0.0
        %v609 = vmax.f32 %v593, 0.0
        %v610 = vmax.f32 %v594, 0.0
        %v611 = vpack.c.bf16 %v596, %v595
        %v612 = vpack.c.bf16 %v598, %v597
        %v613 = vpack.c.bf16 %v600, %v599
        %v614 = vpack.c.bf16 %v602, %v601
        %v615 = vpack.c.bf16 %v604, %v603
        %v616 = vpack.c.bf16 %v606, %v605
        %v617 = vpack.c.bf16 %v608, %v607
        %v618 = vpack.c.bf16 %v610, %v609
        %v627 = vunpack.c.l.b16 %v611
        %v628 = vunpack.c.h.b16 %v611
        %v629 = vunpack.c.l.b16 %v612
        %v630 = vunpack.c.h.b16 %v612
        %v631 = vunpack.c.l.b16 %v613
        %v632 = vunpack.c.h.b16 %v613
        %v633 = vunpack.c.l.b16 %v614
        %v634 = vunpack.c.h.b16 %v614
        %v635 = vunpack.c.l.b16 %v615
        %v636 = vunpack.c.h.b16 %v615
        %v637 = vunpack.c.l.b16 %v616
        %v638 = vunpack.c.h.b16 %v616
        %v639 = vunpack.c.l.b16 %v617
        %v640 = vunpack.c.h.b16 %v617
        %v641 = vunpack.c.l.b16 %v618
        %v642 = vunpack.c.h.b16 %v618
        %v643 = vpack.c.b16 %v627, %v627
        %v644 = vpack.c.b16 %v628, %v628
        %v645 = vpack.c.b16 %v629, %v629
        %v646 = vpack.c.b16 %v630, %v630
        %v647 = vpack.c.b16 %v631, %v631
        %v648 = vpack.c.b16 %v632, %v632
        %v649 = vpack.c.b16 %v633, %v633
        %v650 = vpack.c.b16 %v634, %v634
        %v651 = vpack.c.b16 %v635, %v635
        %v652 = vpack.c.b16 %v636, %v636
        %v653 = vpack.c.b16 %v637, %v637
        %v654 = vpack.c.b16 %v638, %v638
        %v655 = vpack.c.b16 %v639, %v639
        %v656 = vpack.c.b16 %v640, %v640
        %v657 = vpack.c.b16 %v641, %v641
        %v658 = vpack.c.b16 %v642, %v642
        %675 = vst [vmem:[%s257] sm:$0xf] %v643
        %676 = vst [vmem:[%s257 + $0x4] sm:$0xf] %v644
        %677 = vst [vmem:[%s257 + $0x8] sm:$0xf] %v645
        %678 = vst [vmem:[%s257 + $0xc] sm:$0xf] %v646
        %679 = vst [vmem:[%s257 + $0x10] sm:$0xf] %v647
        %680 = vst [vmem:[%s257 + $0x14] sm:$0xf] %v648
        %681 = vst [vmem:[%s257 + $0x18] sm:$0xf] %v649
        %682 = vst [vmem:[%s257 + $0x1c] sm:$0xf] %v650
        %683 = vst [vmem:[%s257 + $0x20] sm:$0xf] %v651
        %684 = vst [vmem:[%s257 + $0x24] sm:$0xf] %v652
        %685 = vst [vmem:[%s257 + $0x28] sm:$0xf] %v653
        %686 = vst [vmem:[%s257 + $0x2c] sm:$0xf] %v654
        %687 = vst [vmem:[%s257 + $0x30] sm:$0xf] %v655
        %688 = vst [vmem:[%s257 + $0x34] sm:$0xf] %v656
        %689 = vst [vmem:[%s257 + $0x38] sm:$0xf] %v657
        %690 = vst [vmem:[%s257 + $0x3c] sm:$0xf] %v658
      $region40: #{alexnet_forward.11} parent=31 // pred_fallthru
        _
      %s691 = smul.u32 16, %s19
      %p692 = scmp.lt.s32.totalorder %s691, 79
      %s693 = scalar_select %p692, %s691, 79
      %p694 = scmp.lt.s32.totalorder %s20, 0
      %s695 = scalar_select %p694, %s20, 0
      %s696 = sadd.s32 %s695, %s693
      %s697 = smul.addr %s696, 4
      %s698 = scalar_lea.vmem %s3, %s697
      // Predicated region
      $region41: #{alexnet_forward.11} parent=31 // pred_check
        %p699 = pneg %p135
      $region42: #{alexnet_forward.11} parent=31 // pred_check_branch
        %701 = sbr.rel (%p699) target = $region44
      $region43: #{alexnet_forward.11} parent=31 // pred_region
        %s702 = smul.u32 16, %s19
      $region44: #{alexnet_forward.11} parent=31 // pred_fallthru
        _
    $region32: #{alexnet_forward.11} parent=5 // pred_fallthru
      _
    %p703 = scmp.le.s32.totalorder 2, %s9
    // Predicated region
    $region45: #{alexnet_forward.11} parent=5 // pred_check
      %p704 = pneg %p703
    $region46: #{alexnet_forward.11} parent=5 // pred_check_branch
      %706 = sbr.rel (%p704) target = $region48
    $region47: #{alexnet_forward.11} parent=5 // pred_region
      %s707 = ssub.s32 %s9, 2
      // Predicated region
      $region49: #{alexnet_forward.11} parent=47 // pred_check
        %p708 = pneg %p141
      $region50: #{alexnet_forward.11} parent=47 // pred_check_branch
        %710 = sbr.rel (%p708) target = $region52
      $region51: #{alexnet_forward.11} parent=47 // pred_region
        %s711 = smul.u32 16, %s22
        %p712 = scmp.lt.s32.totalorder %s711, 79
        %s713 = scalar_select %p712, %s711, 79
        %p714 = scmp.lt.s32.totalorder %s23, 0
        %s715 = scalar_select %p714, %s23, 0
        %s716 = sadd.s32 %s715, %s713
        %s717 = smul.addr %s716, 4
        %s718 = scalar_lea.vmem %s3, %s717
      $region52: #{alexnet_forward.11} parent=47 // pred_fallthru
        _
    $region48: #{alexnet_forward.11} parent=5 // pred_fallthru
      _
  $region6: #{alexnet_forward.11} parent=0 // loop_footer
    %s13 = sadd.s32 1, %s9
  $region7: #{alexnet_forward.11} parent=0 // loop_footer_branch
    %8 = sbr.rel target = $region3
  $region8: #{alexnet_forward.11} parent=0 // loop_exit
    _

// kernel: alexnet_forward.12
$region0: #{alexnet_forward.12}
  #allocation0 [shape = 'u32[]', space=smem, size = 0x4, offset = 0x4, fixed_abs, tag = 'smem constant byte address 0x4 - core index']
  #allocation1 [shape = 'u32[144,128]{1,0:T(1,128)}', space=vmem, size = 0x12000, scoped, tag = 'internal scratch']
  %s0 = inlined_call_operand.vmem [shape: bf16[16,128], index: 0, kind: input, shape index: {}]
  %s1 = inlined_call_operand.vmem [shape: bf16[16,128], index: 1, kind: input, shape index: {}]
  %s2 = inlined_call_operand.vmem [shape: bf16[16,128], index: 2, kind: input, shape index: {}]
  %s3 = inlined_call_operand.vmem [shape: bf16[16,128], index: 3, kind: input, shape index: {}]
  %s4 = inlined_call_operand.vmem [shape: bf16[16,128], index: 4, kind: input, shape index: {}]
  %s5 = inlined_call_operand.vmem [shape: bf16[16,128], index: 5, kind: input, shape index: {}]
  %s6 = inlined_call_operand.vmem [shape: bf16[16,128], index: 6, kind: input, shape index: {}]
  %s7 = inlined_call_operand.vmem [shape: bf16[16,128], index: 7, kind: input, shape index: {}]
  %s8 = inlined_call_operand.vmem [shape: bf16[16,128], index: 8, kind: input, shape index: {}]
  %s9 = inlined_call_operand.vmem [shape: bf16[16,128], index: 9, kind: output, shape index: {}]
  %s10 = sld [smem:[#allocation0]]
  $region46: #{alexnet_forward.12} parent=0
    _
  %s12 = ssub.s32 1, %s10
  %s13 = scalar_select 0, %s12, %s10
  // Predicated region
  $region2: #{alexnet_forward.12} parent=0 // pred_check
    _
  $region3: #{alexnet_forward.12} parent=0 // pred_check_branch
    %15 = sbr.rel (0) target = $region5
  $region4: #{alexnet_forward.12} parent=0 // pred_region
    _
  $region5: #{alexnet_forward.12} parent=0 // pred_fallthru
    _
  // Predicated region
  $region6: #{alexnet_forward.12} parent=0 // pred_check
    _
  $region7: #{alexnet_forward.12} parent=0 // pred_check_branch
    %17 = sbr.rel (0) target = $region9
  $region8: #{alexnet_forward.12} parent=0 // pred_region
    _
  $region9: #{alexnet_forward.12} parent=0 // pred_fallthru
    _
  // Predicated region
  $region10: #{alexnet_forward.12} parent=0 // pred_check
    _
  $region11: #{alexnet_forward.12} parent=0 // pred_check_branch
    %19 = sbr.rel (0) target = $region13
  $region12: #{alexnet_forward.12} parent=0 // pred_region
    _
  $region13: #{alexnet_forward.12} parent=0 // pred_fallthru
    _
  // Predicated region
  $region14: #{alexnet_forward.12} parent=0 // pred_check
    _
  $region15: #{alexnet_forward.12} parent=0 // pred_check_branch
    %21 = sbr.rel (0) target = $region17
  $region16: #{alexnet_forward.12} parent=0 // pred_region
    _
  $region17: #{alexnet_forward.12} parent=0 // pred_fallthru
    _
  // Predicated region
  $region18: #{alexnet_forward.12} parent=0 // pred_check
    _
  $region19: #{alexnet_forward.12} parent=0 // pred_check_branch
    %23 = sbr.rel (0) target = $region21
  $region20: #{alexnet_forward.12} parent=0 // pred_region
    _
  $region21: #{alexnet_forward.12} parent=0 // pred_fallthru
    _
  // Predicated region
  $region22: #{alexnet_forward.12} parent=0 // pred_check
    _
  $region23: #{alexnet_forward.12} parent=0 // pred_check_branch
    %25 = sbr.rel (0) target = $region25
  $region24: #{alexnet_forward.12} parent=0 // pred_region
    _
  $region25: #{alexnet_forward.12} parent=0 // pred_fallthru
    _
  // Predicated region
  $region26: #{alexnet_forward.12} parent=0 // pred_check
    _
  $region27: #{alexnet_forward.12} parent=0 // pred_check_branch
    %27 = sbr.rel (0) target = $region29
  $region28: #{alexnet_forward.12} parent=0 // pred_region
    _
  $region29: #{alexnet_forward.12} parent=0 // pred_fallthru
    _
  // Predicated region
  $region30: #{alexnet_forward.12} parent=0 // pred_check
    _
  $region31: #{alexnet_forward.12} parent=0 // pred_check_branch
    %29 = sbr.rel (0) target = $region33
  $region32: #{alexnet_forward.12} parent=0 // pred_region
    _
  $region33: #{alexnet_forward.12} parent=0 // pred_fallthru
    _
  // Predicated region
  $region34: #{alexnet_forward.12} parent=0 // pred_check
    _
  $region35: #{alexnet_forward.12} parent=0 // pred_check_branch
    %31 = sbr.rel (0) target = $region37
  $region36: #{alexnet_forward.12} parent=0 // pred_region
    _
  $region37: #{alexnet_forward.12} parent=0 // pred_fallthru
    _
  %v32 = vld [vmem:[%s0] sm:$0xf]
  %v33 = vld [vmem:[%s0 + $0x4] sm:$0xf]
  %v34 = vld [vmem:[%s1] sm:$0xf]
  %v35 = vld [vmem:[%s1 + $0x4] sm:$0xf]
  %v36 = vmax.bf16 %v32, %v34
  %v37 = vmax.bf16 %v33, %v35
  %v38 = vld [vmem:[%s2] sm:$0xf]
  %v39 = vld [vmem:[%s2 + $0x4] sm:$0xf]
  %v40 = vmax.bf16 %v36, %v38
  %v41 = vmax.bf16 %v37, %v39
  %v42 = vld [vmem:[%s3] sm:$0xf]
  %v43 = vld [vmem:[%s3 + $0x4] sm:$0xf]
  %v44 = vmax.bf16 %v40, %v42
  %v45 = vmax.bf16 %v41, %v43
  %v46 = vld [vmem:[%s4] sm:$0xf]
  %v47 = vld [vmem:[%s4 + $0x4] sm:$0xf]
  %v48 = vmax.bf16 %v44, %v46
  %v49 = vmax.bf16 %v45, %v47
  %v50 = vld [vmem:[%s5] sm:$0xf]
  %v51 = vld [vmem:[%s5 + $0x4] sm:$0xf]
  %v52 = vmax.bf16 %v48, %v50
  %v53 = vmax.bf16 %v49, %v51
  %v54 = vld [vmem:[%s6] sm:$0xf]
  %v55 = vld [vmem:[%s6 + $0x4] sm:$0xf]
  %v56 = vmax.bf16 %v52, %v54
  %v57 = vmax.bf16 %v53, %v55
  %v58 = vld [vmem:[%s7] sm:$0xf]
  %v59 = vld [vmem:[%s7 + $0x4] sm:$0xf]
  %v60 = vmax.bf16 %v56, %v58
  %v61 = vmax.bf16 %v57, %v59
  %v62 = vld [vmem:[%s8] sm:$0xf]
  %v63 = vld [vmem:[%s8 + $0x4] sm:$0xf]
  %v64 = vmax.bf16 %v60, %v62
  %v65 = vmax.bf16 %v61, %v63
  %66 = vst [vmem:[%s9] sm:$0xf] %v64
  %67 = vst [vmem:[%s9 + $0x4] sm:$0xf] %v65
  // Predicated region
  $region38: #{alexnet_forward.12} parent=0 // pred_check
    _
  $region39: #{alexnet_forward.12} parent=0 // pred_check_branch
    %69 = sbr.rel (0) target = $region41
  $region40: #{alexnet_forward.12} parent=0 // pred_region
    _
  $region41: #{alexnet_forward.12} parent=0 // pred_fallthru
    _
  // Predicated region
  $region42: #{alexnet_forward.12} parent=0 // pred_check
    _
  $region43: #{alexnet_forward.12} parent=0 // pred_check_branch
    %71 = sbr.rel (0) target = $region45
  $region44: #{alexnet_forward.12} parent=0 // pred_region
    _
  $region45: #{alexnet_forward.12} parent=0 // pred_fallthru
    _

// kernel: alexnet_forward.13
$region0: #{alexnet_forward.13}
  #allocation0 [shape = 'u32[]', space=smem, size = 0x4, offset = 0x4, fixed_abs, tag = 'smem constant byte address 0x4 - core index']
  #allocation1 [shape = 'u32[144,128]{1,0:T(1,128)}', space=vmem, size = 0x12000, scoped, tag = 'internal scratch']
  #allocation2 [shape = 'f32[128,128]{1,0:T(8,128)}', space=vmem, size = 0x10000, scoped, tag = 'scratch operand']
  %s0 = inlined_call_operand.vmem [shape: bf16[128,512], index: 0, kind: input, shape index: {}]
  %s1 = inlined_call_operand.vmem [shape: bf16[512,128], index: 1, kind: input, shape index: {}]
  %s2 = inlined_call_operand.vmem [shape: f32[1,128], index: 2, kind: input, shape index: {}]
  %s3 = inlined_call_operand.vmem [shape: bf16[128,128], index: 3, kind: output, shape index: {}]
  %s4 = sld [smem:[#allocation0]]
  $region30: #{alexnet_forward.13} parent=0
    _
  %s6 = ssub.s32 1, %s4
  %s7 = scalar_select 0, %s6, %s4
  // Predicated region
  $region2: #{alexnet_forward.13} parent=0 // pred_check
    _
  $region3: #{alexnet_forward.13} parent=0 // pred_check_branch
    %9 = sbr.rel (0) target = $region5
  $region4: #{alexnet_forward.13} parent=0 // pred_region
    _
  $region5: #{alexnet_forward.13} parent=0 // pred_fallthru
    _
  // Predicated region
  $region6: #{alexnet_forward.13} parent=0 // pred_check
    _
  $region7: #{alexnet_forward.13} parent=0 // pred_check_branch
    %11 = sbr.rel (0) target = $region9
  $region8: #{alexnet_forward.13} parent=0 // pred_region
    _
  $region9: #{alexnet_forward.13} parent=0 // pred_fallthru
    _
  // Predicated region
  $region10: #{alexnet_forward.13} parent=0 // pred_check
    _
  $region11: #{alexnet_forward.13} parent=0 // pred_check_branch
    %13 = sbr.rel (0) target = $region13
  $region12: #{alexnet_forward.13} parent=0 // pred_region
    _
  $region13: #{alexnet_forward.13} parent=0 // pred_fallthru
    _
  %p15 = scmp.eq.s32.totalorder 0, 0
  // Predicated region
  $region14: #{alexnet_forward.13} parent=0 // pred_check
    %p16 = pneg %p15
  $region15: #{alexnet_forward.13} parent=0 // pred_check_branch
    %18 = sbr.rel (%p16) target = $region17
  $region16: #{alexnet_forward.13} parent=0 // pred_region
    %19 = vst [vmem:[#allocation2] sm:$0xff] 0.0
    %20 = vst [vmem:[#allocation2 + $0x8] sm:$0xff] 0.0
    %21 = vst [vmem:[#allocation2 + $0x10] sm:$0xff] 0.0
    %22 = vst [vmem:[#allocation2 + $0x18] sm:$0xff] 0.0
    %23 = vst [vmem:[#allocation2 + $0x20] sm:$0xff] 0.0
    %24 = vst [vmem:[#allocation2 + $0x28] sm:$0xff] 0.0
    %25 = vst [vmem:[#allocation2 + $0x30] sm:$0xff] 0.0
    %26 = vst [vmem:[#allocation2 + $0x38] sm:$0xff] 0.0
    %27 = vst [vmem:[#allocation2 + $0x40] sm:$0xff] 0.0
    %28 = vst [vmem:[#allocation2 + $0x48] sm:$0xff] 0.0
    %29 = vst [vmem:[#allocation2 + $0x50] sm:$0xff] 0.0
    %30 = vst [vmem:[#allocation2 + $0x58] sm:$0xff] 0.0
    %31 = vst [vmem:[#allocation2 + $0x60] sm:$0xff] 0.0
    %32 = vst [vmem:[#allocation2 + $0x68] sm:$0xff] 0.0
    %33 = vst [vmem:[#allocation2 + $0x70] sm:$0xff] 0.0
    %34 = vst [vmem:[#allocation2 + $0x78] sm:$0xff] 0.0
  $region17: #{alexnet_forward.13} parent=0 // pred_fallthru
    _
  %v35 = vld [vmem:[#allocation2] sm:$0xff]
  %v36 = vld [vmem:[#allocation2 + $0x8] sm:$0xff]
  %v37 = vld [vmem:[#allocation2 + $0x10] sm:$0xff]
  %v38 = vld [vmem:[#allocation2 + $0x18] sm:$0xff]
  %v39 = vld [vmem:[#allocation2 + $0x20] sm:$0xff]
  %v40 = vld [vmem:[#allocation2 + $0x28] sm:$0xff]
  %v41 = vld [vmem:[#allocation2 + $0x30] sm:$0xff]
  %v42 = vld [vmem:[#allocation2 + $0x38] sm:$0xff]
  %v43 = vld [vmem:[#allocation2 + $0x40] sm:$0xff]
  %v44 = vld [vmem:[#allocation2 + $0x48] sm:$0xff]
  %v45 = vld [vmem:[#allocation2 + $0x50] sm:$0xff]
  %v46 = vld [vmem:[#allocation2 + $0x58] sm:$0xff]
  %v47 = vld [vmem:[#allocation2 + $0x60] sm:$0xff]
  %v48 = vld [vmem:[#allocation2 + $0x68] sm:$0xff]
  %v49 = vld [vmem:[#allocation2 + $0x70] sm:$0xff]
  %v50 = vld [vmem:[#allocation2 + $0x78] sm:$0xff]
  %v51 = vld [vmem:[%s0] sm:$0xff]
  %v52 = vld [vmem:[%s0 + $0x8] sm:$0xff]
  %v53 = vld [vmem:[%s0 + $0x10] sm:$0xff]
  %v54 = vld [vmem:[%s0 + $0x18] sm:$0xff]
  %v55 = vld [vmem:[%s0 + $0x20] sm:$0xff]
  %v56 = vld [vmem:[%s0 + $0x28] sm:$0xff]
  %v57 = vld [vmem:[%s0 + $0x30] sm:$0xff]
  %v58 = vld [vmem:[%s0 + $0x38] sm:$0xff]
  %v59 = vld [vmem:[%s0 + $0x40] sm:$0xff]
  %v60 = vld [vmem:[%s0 + $0x48] sm:$0xff]
  %v61 = vld [vmem:[%s0 + $0x50] sm:$0xff]
  %v62 = vld [vmem:[%s0 + $0x58] sm:$0xff]
  %v63 = vld [vmem:[%s0 + $0x60] sm:$0xff]
  %v64 = vld [vmem:[%s0 + $0x68] sm:$0xff]
  %v65 = vld [vmem:[%s0 + $0x70] sm:$0xff]
  %v66 = vld [vmem:[%s0 + $0x78] sm:$0xff]
  %v67 = vld [vmem:[%s0 + $0x80] sm:$0xff]
  %v68 = vld [vmem:[%s0 + $0x88] sm:$0xff]
  %v69 = vld [vmem:[%s0 + $0x90] sm:$0xff]
  %v70 = vld [vmem:[%s0 + $0x98] sm:$0xff]
  %v71 = vld [vmem:[%s0 + $0xa0] sm:$0xff]
  %v72 = vld [vmem:[%s0 + $0xa8] sm:$0xff]
  %v73 = vld [vmem:[%s0 + $0xb0] sm:$0xff]
  %v74 = vld [vmem:[%s0 + $0xb8] sm:$0xff]
  %v75 = vld [vmem:[%s0 + $0xc0] sm:$0xff]
  %v76 = vld [vmem:[%s0 + $0xc8] sm:$0xff]
  %v77 = vld [vmem:[%s0 + $0xd0] sm:$0xff]
  %v78 = vld [vmem:[%s0 + $0xd8] sm:$0xff]
  %v79 = vld [vmem:[%s0 + $0xe0] sm:$0xff]
  %v80 = vld [vmem:[%s0 + $0xe8] sm:$0xff]
  %v81 = vld [vmem:[%s0 + $0xf0] sm:$0xff]
  %v82 = vld [vmem:[%s0 + $0xf8] sm:$0xff]
  %v83 = vld [vmem:[%s1] sm:$0xf]
  %v84 = vld [vmem:[%s1 + $0x4] sm:$0xf]
  %v85 = vld [vmem:[%s1 + $0x8] sm:$0xf]
  %v86 = vld [vmem:[%s1 + $0xc] sm:$0xf]
  %v87 = vld [vmem:[%s1 + $0x10] sm:$0xf]
  %v88 = vld [vmem:[%s1 + $0x14] sm:$0xf]
  %v89 = vld [vmem:[%s1 + $0x18] sm:$0xf]
  %v90 = vld [vmem:[%s1 + $0x1c] sm:$0xf]
  %v91 = vld [vmem:[%s1 + $0x20] sm:$0xf]
  %v92 = vld [vmem:[%s1 + $0x24] sm:$0xf]
  %v93 = vld [vmem:[%s1 + $0x28] sm:$0xf]
  %v94 = vld [vmem:[%s1 + $0x2c] sm:$0xf]
  %v95 = vld [vmem:[%s1 + $0x30] sm:$0xf]
  %v96 = vld [vmem:[%s1 + $0x34] sm:$0xf]
  %v97 = vld [vmem:[%s1 + $0x38] sm:$0xf]
  %v98 = vld [vmem:[%s1 + $0x3c] sm:$0xf]
  %v99 = vld [vmem:[%s1 + $0x40] sm:$0xf]
  %v100 = vld [vmem:[%s1 + $0x44] sm:$0xf]
  %v101 = vld [vmem:[%s1 + $0x48] sm:$0xf]
  %v102 = vld [vmem:[%s1 + $0x4c] sm:$0xf]
  %v103 = vld [vmem:[%s1 + $0x50] sm:$0xf]
  %v104 = vld [vmem:[%s1 + $0x54] sm:$0xf]
  %v105 = vld [vmem:[%s1 + $0x58] sm:$0xf]
  %v106 = vld [vmem:[%s1 + $0x5c] sm:$0xf]
  %v107 = vld [vmem:[%s1 + $0x60] sm:$0xf]
  %v108 = vld [vmem:[%s1 + $0x64] sm:$0xf]
  %v109 = vld [vmem:[%s1 + $0x68] sm:$0xf]
  %v110 = vld [vmem:[%s1 + $0x6c] sm:$0xf]
  %v111 = vld [vmem:[%s1 + $0x70] sm:$0xf]
  %v112 = vld [vmem:[%s1 + $0x74] sm:$0xf]
  %v113 = vld [vmem:[%s1 + $0x78] sm:$0xf]
  %v114 = vld [vmem:[%s1 + $0x7c] sm:$0xf]
  %v115 = vld [vmem:[%s1 + $0x80] sm:$0xf]
  %v116 = vld [vmem:[%s1 + $0x84] sm:$0xf]
  %v117 = vld [vmem:[%s1 + $0x88] sm:$0xf]
  %v118 = vld [vmem:[%s1 + $0x8c] sm:$0xf]
  %v119 = vld [vmem:[%s1 + $0x90] sm:$0xf]
  %v120 = vld [vmem:[%s1 + $0x94] sm:$0xf]
  %v121 = vld [vmem:[%s1 + $0x98] sm:$0xf]
  %v122 = vld [vmem:[%s1 + $0x9c] sm:$0xf]
  %v123 = vld [vmem:[%s1 + $0xa0] sm:$0xf]
  %v124 = vld [vmem:[%s1 + $0xa4] sm:$0xf]
  %v125 = vld [vmem:[%s1 + $0xa8] sm:$0xf]
  %v126 = vld [vmem:[%s1 + $0xac] sm:$0xf]
  %v127 = vld [vmem:[%s1 + $0xb0] sm:$0xf]
  %v128 = vld [vmem:[%s1 + $0xb4] sm:$0xf]
  %v129 = vld [vmem:[%s1 + $0xb8] sm:$0xf]
  %v130 = vld [vmem:[%s1 + $0xbc] sm:$0xf]
  %v131 = vld [vmem:[%s1 + $0xc0] sm:$0xf]
  %v132 = vld [vmem:[%s1 + $0xc4] sm:$0xf]
  %v133 = vld [vmem:[%s1 + $0xc8] sm:$0xf]
  %v134 = vld [vmem:[%s1 + $0xcc] sm:$0xf]
  %v135 = vld [vmem:[%s1 + $0xd0] sm:$0xf]
  %v136 = vld [vmem:[%s1 + $0xd4] sm:$0xf]
  %v137 = vld [vmem:[%s1 + $0xd8] sm:$0xf]
  %v138 = vld [vmem:[%s1 + $0xdc] sm:$0xf]
  %v139 = vld [vmem:[%s1 + $0xe0] sm:$0xf]
  %v140 = vld [vmem:[%s1 + $0xe4] sm:$0xf]
  %v141 = vld [vmem:[%s1 + $0xe8] sm:$0xf]
  %v142 = vld [vmem:[%s1 + $0xec] sm:$0xf]
  %v143 = vld [vmem:[%s1 + $0xf0] sm:$0xf]
  %v144 = vld [vmem:[%s1 + $0xf4] sm:$0xf]
  %v145 = vld [vmem:[%s1 + $0xf8] sm:$0xf]
  %v146 = vld [vmem:[%s1 + $0xfc] sm:$0xf]
  %v179 = vunpack.c.l.b16 %v51
  %v180 = vunpack.c.h.b16 %v51
  %v181 = vunpack.c.l.b16 %v52
  %v182 = vunpack.c.h.b16 %v52
  %v183 = vunpack.c.l.b16 %v53
  %v184 = vunpack.c.h.b16 %v53
  %v185 = vunpack.c.l.b16 %v54
  %v186 = vunpack.c.h.b16 %v54
  %v187 = vunpack.c.l.b16 %v55
  %v188 = vunpack.c.h.b16 %v55
  %v189 = vunpack.c.l.b16 %v56
  %v190 = vunpack.c.h.b16 %v56
  %v191 = vunpack.c.l.b16 %v57
  %v192 = vunpack.c.h.b16 %v57
  %v193 = vunpack.c.l.b16 %v58
  %v194 = vunpack.c.h.b16 %v58
  %v195 = vunpack.c.l.b16 %v59
  %v196 = vunpack.c.h.b16 %v59
  %v197 = vunpack.c.l.b16 %v60
  %v198 = vunpack.c.h.b16 %v60
  %v199 = vunpack.c.l.b16 %v61
  %v200 = vunpack.c.h.b16 %v61
  %v201 = vunpack.c.l.b16 %v62
  %v202 = vunpack.c.h.b16 %v62
  %v203 = vunpack.c.l.b16 %v63
  %v204 = vunpack.c.h.b16 %v63
  %v205 = vunpack.c.l.b16 %v64
  %v206 = vunpack.c.h.b16 %v64
  %v207 = vunpack.c.l.b16 %v65
  %v208 = vunpack.c.h.b16 %v65
  %v209 = vunpack.c.l.b16 %v66
  %v210 = vunpack.c.h.b16 %v66
  %v211 = vunpack.c.l.b16 %v67
  %v212 = vunpack.c.h.b16 %v67
  %v213 = vunpack.c.l.b16 %v68
  %v214 = vunpack.c.h.b16 %v68
  %v215 = vunpack.c.l.b16 %v69
  %v216 = vunpack.c.h.b16 %v69
  %v217 = vunpack.c.l.b16 %v70
  %v218 = vunpack.c.h.b16 %v70
  %v219 = vunpack.c.l.b16 %v71
  %v220 = vunpack.c.h.b16 %v71
  %v221 = vunpack.c.l.b16 %v72
  %v222 = vunpack.c.h.b16 %v72
  %v223 = vunpack.c.l.b16 %v73
  %v224 = vunpack.c.h.b16 %v73
  %v225 = vunpack.c.l.b16 %v74
  %v226 = vunpack.c.h.b16 %v74
  %v227 = vunpack.c.l.b16 %v75
  %v228 = vunpack.c.h.b16 %v75
  %v229 = vunpack.c.l.b16 %v76
  %v230 = vunpack.c.h.b16 %v76
  %v231 = vunpack.c.l.b16 %v77
  %v232 = vunpack.c.h.b16 %v77
  %v233 = vunpack.c.l.b16 %v78
  %v234 = vunpack.c.h.b16 %v78
  %v235 = vunpack.c.l.b16 %v79
  %v236 = vunpack.c.h.b16 %v79
  %v237 = vunpack.c.l.b16 %v80
  %v238 = vunpack.c.h.b16 %v80
  %v239 = vunpack.c.l.b16 %v81
  %v240 = vunpack.c.h.b16 %v81
  %v241 = vunpack.c.l.b16 %v82
  %v242 = vunpack.c.h.b16 %v82
  %v243 = vpack.c.b16 %v183, %v179
  %v244 = vpack.c.b16 %v184, %v180
  %v245 = vpack.c.b16 %v185, %v181
  %v246 = vpack.c.b16 %v186, %v182
  %v247 = vpack.c.b16 %v191, %v187
  %v248 = vpack.c.b16 %v192, %v188
  %v249 = vpack.c.b16 %v193, %v189
  %v250 = vpack.c.b16 %v194, %v190
  %v251 = vpack.c.b16 %v199, %v195
  %v252 = vpack.c.b16 %v200, %v196
  %v253 = vpack.c.b16 %v201, %v197
  %v254 = vpack.c.b16 %v202, %v198
  %v255 = vpack.c.b16 %v207, %v203
  %v256 = vpack.c.b16 %v208, %v204
  %v257 = vpack.c.b16 %v209, %v205
  %v258 = vpack.c.b16 %v210, %v206
  %v259 = vpack.c.b16 %v215, %v211
  %v260 = vpack.c.b16 %v216, %v212
  %v261 = vpack.c.b16 %v217, %v213
  %v262 = vpack.c.b16 %v218, %v214
  %v263 = vpack.c.b16 %v223, %v219
  %v264 = vpack.c.b16 %v224, %v220
  %v265 = vpack.c.b16 %v225, %v221
  %v266 = vpack.c.b16 %v226, %v222
  %v267 = vpack.c.b16 %v231, %v227
  %v268 = vpack.c.b16 %v232, %v228
  %v269 = vpack.c.b16 %v233, %v229
  %v270 = vpack.c.b16 %v234, %v230
  %v271 = vpack.c.b16 %v239, %v235
  %v272 = vpack.c.b16 %v240, %v236
  %v273 = vpack.c.b16 %v241, %v237
  %v274 = vpack.c.b16 %v242, %v238
  %v371 = vunpack.c.l.b16 %v83
  %v372 = vunpack.c.l.b16 %v84
  %v373 = vunpack.c.l.b16 %v85
  %v374 = vunpack.c.l.b16 %v86
  %v375 = vunpack.c.l.b16 %v87
  %v376 = vunpack.c.l.b16 %v88
  %v377 = vunpack.c.l.b16 %v89
  %v378 = vunpack.c.l.b16 %v90
  %v379 = vunpack.c.l.b16 %v91
  %v380 = vunpack.c.l.b16 %v92
  %v381 = vunpack.c.l.b16 %v93
  %v382 = vunpack.c.l.b16 %v94
  %v383 = vunpack.c.l.b16 %v95
  %v384 = vunpack.c.l.b16 %v96
  %v385 = vunpack.c.l.b16 %v97
  %v386 = vunpack.c.l.b16 %v98
  %v387 = vunpack.c.l.b16 %v99
  %v388 = vunpack.c.l.b16 %v100
  %v389 = vunpack.c.l.b16 %v101
  %v390 = vunpack.c.l.b16 %v102
  %v391 = vunpack.c.l.b16 %v103
  %v392 = vunpack.c.l.b16 %v104
  %v393 = vunpack.c.l.b16 %v105
  %v394 = vunpack.c.l.b16 %v106
  %v395 = vunpack.c.l.b16 %v107
  %v396 = vunpack.c.l.b16 %v108
  %v397 = vunpack.c.l.b16 %v109
  %v398 = vunpack.c.l.b16 %v110
  %v399 = vunpack.c.l.b16 %v111
  %v400 = vunpack.c.l.b16 %v112
  %v401 = vunpack.c.l.b16 %v113
  %v402 = vunpack.c.l.b16 %v114
  %v403 = vunpack.c.l.b16 %v115
  %v404 = vunpack.c.l.b16 %v116
  %v405 = vunpack.c.l.b16 %v117
  %v406 = vunpack.c.l.b16 %v118
  %v407 = vunpack.c.l.b16 %v119
  %v408 = vunpack.c.l.b16 %v120
  %v409 = vunpack.c.l.b16 %v121
  %v410 = vunpack.c.l.b16 %v122
  %v411 = vunpack.c.l.b16 %v123
  %v412 = vunpack.c.l.b16 %v124
  %v413 = vunpack.c.l.b16 %v125
  %v414 = vunpack.c.l.b16 %v126
  %v415 = vunpack.c.l.b16 %v127
  %v416 = vunpack.c.l.b16 %v128
  %v417 = vunpack.c.l.b16 %v129
  %v418 = vunpack.c.l.b16 %v130
  %v419 = vunpack.c.l.b16 %v131
  %v420 = vunpack.c.l.b16 %v132
  %v421 = vunpack.c.l.b16 %v133
  %v422 = vunpack.c.l.b16 %v134
  %v423 = vunpack.c.l.b16 %v135
  %v424 = vunpack.c.l.b16 %v136
  %v425 = vunpack.c.l.b16 %v137
  %v426 = vunpack.c.l.b16 %v138
  %v427 = vunpack.c.l.b16 %v139
  %v428 = vunpack.c.l.b16 %v140
  %v429 = vunpack.c.l.b16 %v141
  %v430 = vunpack.c.l.b16 %v142
  %v431 = vunpack.c.l.b16 %v143
  %v432 = vunpack.c.l.b16 %v144
  %v433 = vunpack.c.l.b16 %v145
  %v434 = vunpack.c.l.b16 %v146
  %v435 = vpack.c.b16 %v372, %v371
  %v436 = vpack.c.b16 %v374, %v373
  %v437 = vpack.c.b16 %v376, %v375
  %v438 = vpack.c.b16 %v378, %v377
  %v439 = vpack.c.b16 %v380, %v379
  %v440 = vpack.c.b16 %v382, %v381
  %v441 = vpack.c.b16 %v384, %v383
  %v442 = vpack.c.b16 %v386, %v385
  %v443 = vpack.c.b16 %v388, %v387
  %v444 = vpack.c.b16 %v390, %v389
  %v445 = vpack.c.b16 %v392, %v391
  %v446 = vpack.c.b16 %v394, %v393
  %v447 = vpack.c.b16 %v396, %v395
  %v448 = vpack.c.b16 %v398, %v397
  %v449 = vpack.c.b16 %v400, %v399
  %v450 = vpack.c.b16 %v402, %v401
  %v451 = vpack.c.b16 %v404, %v403
  %v452 = vpack.c.b16 %v406, %v405
  %v453 = vpack.c.b16 %v408, %v407
  %v454 = vpack.c.b16 %v410, %v409
  %v455 = vpack.c.b16 %v412, %v411
  %v456 = vpack.c.b16 %v414, %v413
  %v457 = vpack.c.b16 %v416, %v415
  %v458 = vpack.c.b16 %v418, %v417
  %v459 = vpack.c.b16 %v420, %v419
  %v460 = vpack.c.b16 %v422, %v421
  %v461 = vpack.c.b16 %v424, %v423
  %v462 = vpack.c.b16 %v426, %v425
  %v463 = vpack.c.b16 %v428, %v427
  %v464 = vpack.c.b16 %v430, %v429
  %v465 = vpack.c.b16 %v432, %v431
  %v466 = vpack.c.b16 %v434, %v433
  %499 = vmatprep.subr.bf16.mxu0 0
  %500 = vmatpush1.bf16.msra.mxu0 %v435
  %501 = vmatprep.subr.bf16.mxu0 0
  %502 = vmatpush1.bf16.msra.mxu0 %v436
  %503 = vmatprep.subr.bf16.mxu0 0
  %504 = vmatpush1.bf16.msra.mxu0 %v437
  %505 = vmatprep.subr.bf16.mxu0 0
  %506 = vmatpush1.bf16.msra.mxu0 %v438
  %507 = vmatprep.subr.bf16.mxu0 0
  %508 = vmatpush1.bf16.msra.mxu0 %v439
  %509 = vmatprep.subr.bf16.mxu0 0
  %510 = vmatpush1.bf16.msra.mxu0 %v440
  %511 = vmatprep.subr.bf16.mxu0 0
  %512 = vmatpush1.bf16.msra.mxu0 %v441
  %513 = vmatprep.subr.bf16.mxu0 0
  %514 = vmatpush1.bf16.msra.mxu0 %v442
  %515 = vmatprep.subr.bf16.mxu0 0
  %516 = vmatpush1.bf16.msra.mxu0 %v443
  %517 = vmatprep.subr.bf16.mxu0 0
  %518 = vmatpush1.bf16.msra.mxu0 %v444
  %519 = vmatprep.subr.bf16.mxu0 0
  %520 = vmatpush1.bf16.msra.mxu0 %v445
  %521 = vmatprep.subr.bf16.mxu0 0
  %522 = vmatpush1.bf16.msra.mxu0 %v446
  %523 = vmatprep.subr.bf16.mxu0 0
  %524 = vmatpush1.bf16.msra.mxu0 %v447
  %525 = vmatprep.subr.bf16.mxu0 0
  %526 = vmatpush1.bf16.msra.mxu0 %v448
  %527 = vmatprep.subr.bf16.mxu0 0
  %528 = vmatpush1.bf16.msra.mxu0 %v449
  %529 = vmatprep.subr.bf16.mxu0 0
  %530 = vmatpush1.bf16.msra.mxu0 %v450
  %531 = vmatprep.mubr.bf16.mxu0 %v244
  %532 = vmatmul.mubr.bf16.gmra.mrb[0].mxu0 %v243
  %v533 = vpop.f32.mrb[0].mxu0
  %v534 = vadd.f32 0.0, %v533
  %v535 = vpop.f32.mrb[0].mxu0
  %v536 = vpop.f32.mrb[0].mxu0
  %v537 = vadd.f32 0.0, %v536
  %v538 = vpop.f32.mrb[0].mxu0
  %539 = vmatprep.mubr.bf16.mxu0 %v248
  %540 = vmatmul.mubr.bf16.gmra.mrb[0].mxu0 %v247
  %v541 = vpop.f32.mrb[0].mxu0
  %v542 = vadd.f32 0.0, %v541
  %v543 = vpop.f32.mrb[0].mxu0
  %v544 = vpop.f32.mrb[0].mxu0
  %v545 = vadd.f32 0.0, %v544
  %v546 = vpop.f32.mrb[0].mxu0
  %547 = vmatprep.mubr.bf16.mxu0 %v252
  %548 = vmatmul.mubr.bf16.gmra.mrb[0].mxu0 %v251
  %v549 = vpop.f32.mrb[0].mxu0
  %v550 = vadd.f32 0.0, %v549
  %v551 = vpop.f32.mrb[0].mxu0
  %v552 = vpop.f32.mrb[0].mxu0
  %v553 = vadd.f32 0.0, %v552
  %v554 = vpop.f32.mrb[0].mxu0
  %555 = vmatprep.mubr.bf16.mxu0 %v256
  %556 = vmatmul.mubr.bf16.gmra.mrb[0].mxu0 %v255
  %v557 = vpop.f32.mrb[0].mxu0
  %v558 = vadd.f32 0.0, %v557
  %v559 = vpop.f32.mrb[0].mxu0
  %v560 = vpop.f32.mrb[0].mxu0
  %v561 = vadd.f32 0.0, %v560
  %v562 = vpop.f32.mrb[0].mxu0
  %563 = vmatprep.mubr.bf16.mxu0 %v260
  %564 = vmatmul.mubr.bf16.gmra.mrb[0].mxu0 %v259
  %v565 = vpop.f32.mrb[0].mxu0
  %v566 = vadd.f32 0.0, %v565
  %v567 = vpop.f32.mrb[0].mxu0
  %v568 = vpop.f32.mrb[0].mxu0
  %v569 = vadd.f32 0.0, %v568
  %v570 = vpop.f32.mrb[0].mxu0
  %571 = vmatprep.mubr.bf16.mxu0 %v264
  %572 = vmatmul.mubr.bf16.gmra.mrb[0].mxu0 %v263
  %v573 = vpop.f32.mrb[0].mxu0
  %v574 = vadd.f32 0.0, %v573
  %v575 = vpop.f32.mrb[0].mxu0
  %v576 = vpop.f32.mrb[0].mxu0
  %v577 = vadd.f32 0.0, %v576
  %v578 = vpop.f32.mrb[0].mxu0
  %579 = vmatprep.mubr.bf16.mxu0 %v268
  %580 = vmatmul.mubr.bf16.gmra.mrb[0].mxu0 %v267
  %v581 = vpop.f32.mrb[0].mxu0
  %v582 = vadd.f32 0.0, %v581
  %v583 = vpop.f32.mrb[0].mxu0
  %v584 = vpop.f32.mrb[0].mxu0
  %v585 = vadd.f32 0.0, %v584
  %v586 = vpop.f32.mrb[0].mxu0
  %587 = vmatprep.mubr.bf16.mxu0 %v272
  %588 = vmatmul.mubr.bf16.gmra.mrb[0].mxu0 %v271
  %v589 = vpop.f32.mrb[0].mxu0
  %v590 = vadd.f32 0.0, %v589
  %v591 = vpop.f32.mrb[0].mxu0
  %v592 = vpop.f32.mrb[0].mxu0
  %v593 = vadd.f32 0.0, %v592
  %v594 = vpop.f32.mrb[0].mxu0
  %595 = vdwg.mxu0
  %596 = vmatprep.subr.bf16.mxu0 0
  %597 = vmatpush1.bf16.msra.mxu0 %v451
  %598 = vmatprep.subr.bf16.mxu0 0
  %599 = vmatpush1.bf16.msra.mxu0 %v452
  %600 = vmatprep.subr.bf16.mxu0 0
  %601 = vmatpush1.bf16.msra.mxu0 %v453
  %602 = vmatprep.subr.bf16.mxu0 0
  %603 = vmatpush1.bf16.msra.mxu0 %v454
  %604 = vmatprep.subr.bf16.mxu0 0
  %605 = vmatpush1.bf16.msra.mxu0 %v455
  %606 = vmatprep.subr.bf16.mxu0 0
  %607 = vmatpush1.bf16.msra.mxu0 %v456
  %608 = vmatprep.subr.bf16.mxu0 0
  %609 = vmatpush1.bf16.msra.mxu0 %v457
  %610 = vmatprep.subr.bf16.mxu0 0
  %611 = vmatpush1.bf16.msra.mxu0 %v458
  %612 = vmatprep.subr.bf16.mxu0 0
  %613 = vmatpush1.bf16.msra.mxu0 %v459
  %614 = vmatprep.subr.bf16.mxu0 0
  %615 = vmatpush1.bf16.msra.mxu0 %v460
  %616 = vmatprep.subr.bf16.mxu0 0
  %617 = vmatpush1.bf16.msra.mxu0 %v461
  %618 = vmatprep.subr.bf16.mxu0 0
  %619 = vmatpush1.bf16.msra.mxu0 %v462
  %620 = vmatprep.subr.bf16.mxu0 0
  %621 = vmatpush1.bf16.msra.mxu0 %v463
  %622 = vmatprep.subr.bf16.mxu0 0
  %623 = vmatpush1.bf16.msra.mxu0 %v464
  %624 = vmatprep.subr.bf16.mxu0 0
  %625 = vmatpush1.bf16.msra.mxu0 %v465
  %626 = vmatprep.subr.bf16.mxu0 0
  %627 = vmatpush1.bf16.msra.mxu0 %v466
  %628 = vmatprep.mubr.bf16.mxu0 %v246
  %629 = vmatmul.mubr.bf16.gmra.mrb[0].mxu0 %v245
  %v630 = vpop.f32.mrb[0].mxu0
  %v631 = vadd.f32 %v534, %v630
  %v632 = vpop.f32.mrb[0].mxu0
  %v633 = vpop.f32.mrb[0].mxu0
  %v634 = vadd.f32 %v537, %v633
  %v635 = vpop.f32.mrb[0].mxu0
  %636 = vmatprep.mubr.bf16.mxu0 %v250
  %637 = vmatmul.mubr.bf16.gmra.mrb[0].mxu0 %v249
  %v638 = vpop.f32.mrb[0].mxu0
  %v639 = vadd.f32 %v542, %v638
  %v640 = vpop.f32.mrb[0].mxu0
  %v641 = vpop.f32.mrb[0].mxu0
  %v642 = vadd.f32 %v545, %v641
  %v643 = vpop.f32.mrb[0].mxu0
  %644 = vmatprep.mubr.bf16.mxu0 %v254
  %645 = vmatmul.mubr.bf16.gmra.mrb[0].mxu0 %v253
  %v646 = vpop.f32.mrb[0].mxu0
  %v647 = vadd.f32 %v550, %v646
  %v648 = vpop.f32.mrb[0].mxu0
  %v649 = vpop.f32.mrb[0].mxu0
  %v650 = vadd.f32 %v553, %v649
  %v651 = vpop.f32.mrb[0].mxu0
  %652 = vmatprep.mubr.bf16.mxu0 %v258
  %653 = vmatmul.mubr.bf16.gmra.mrb[0].mxu0 %v257
  %v654 = vpop.f32.mrb[0].mxu0
  %v655 = vadd.f32 %v558, %v654
  %v656 = vpop.f32.mrb[0].mxu0
  %v657 = vpop.f32.mrb[0].mxu0
  %v658 = vadd.f32 %v561, %v657
  %v659 = vpop.f32.mrb[0].mxu0
  %660 = vmatprep.mubr.bf16.mxu0 %v262
  %661 = vmatmul.mubr.bf16.gmra.mrb[0].mxu0 %v261
  %v662 = vpop.f32.mrb[0].mxu0
  %v663 = vadd.f32 %v566, %v662
  %v664 = vpop.f32.mrb[0].mxu0
  %v665 = vpop.f32.mrb[0].mxu0
  %v666 = vadd.f32 %v569, %v665
  %v667 = vpop.f32.mrb[0].mxu0
  %668 = vmatprep.mubr.bf16.mxu0 %v266
  %669 = vmatmul.mubr.bf16.gmra.mrb[0].mxu0 %v265
  %v670 = vpop.f32.mrb[0].mxu0
  %v671 = vadd.f32 %v574, %v670
  %v672 = vpop.f32.mrb[0].mxu0
  %v673 = vpop.f32.mrb[0].mxu0
  %v674 = vadd.f32 %v577, %v673
  %v675 = vpop.f32.mrb[0].mxu0
  %676 = vmatprep.mubr.bf16.mxu0 %v270
  %677 = vmatmul.mubr.bf16.gmra.mrb[0].mxu0 %v269
  %v678 = vpop.f32.mrb[0].mxu0
  %v679 = vadd.f32 %v582, %v678
  %v680 = vpop.f32.mrb[0].mxu0
  %v681 = vpop.f32.mrb[0].mxu0
  %v682 = vadd.f32 %v585, %v681
  %v683 = vpop.f32.mrb[0].mxu0
  %684 = vmatprep.mubr.bf16.mxu0 %v274
  %685 = vmatmul.mubr.bf16.gmra.mrb[0].mxu0 %v273
  %v686 = vpop.f32.mrb[0].mxu0
  %v687 = vadd.f32 %v590, %v686
  %v688 = vpop.f32.mrb[0].mxu0
  %v689 = vpop.f32.mrb[0].mxu0
  %v690 = vadd.f32 %v593, %v689
  %v691 = vpop.f32.mrb[0].mxu0
  %692 = vdwg.mxu0
  %v693 = vadd.f32 %v35, %v631
  %v694 = vadd.f32 %v36, %v634
  %v695 = vadd.f32 %v37, %v639
  %v696 = vadd.f32 %v38, %v642
  %v697 = vadd.f32 %v39, %v647
  %v698 = vadd.f32 %v40, %v650
  %v699 = vadd.f32 %v41, %v655
  %v700 = vadd.f32 %v42, %v658
  %v701 = vadd.f32 %v43, %v663
  %v702 = vadd.f32 %v44, %v666
  %v703 = vadd.f32 %v45, %v671
  %v704 = vadd.f32 %v46, %v674
  %v705 = vadd.f32 %v47, %v679
  %v706 = vadd.f32 %v48, %v682
  %v707 = vadd.f32 %v49, %v687
  %v708 = vadd.f32 %v50, %v690
  %709 = vst [vmem:[#allocation2] sm:$0xff] %v693
  %710 = vst [vmem:[#allocation2 + $0x8] sm:$0xff] %v694
  %711 = vst [vmem:[#allocation2 + $0x10] sm:$0xff] %v695
  %712 = vst [vmem:[#allocation2 + $0x18] sm:$0xff] %v696
  %713 = vst [vmem:[#allocation2 + $0x20] sm:$0xff] %v697
  %714 = vst [vmem:[#allocation2 + $0x28] sm:$0xff] %v698
  %715 = vst [vmem:[#allocation2 + $0x30] sm:$0xff] %v699
  %716 = vst [vmem:[#allocation2 + $0x38] sm:$0xff] %v700
  %717 = vst [vmem:[#allocation2 + $0x40] sm:$0xff] %v701
  %718 = vst [vmem:[#allocation2 + $0x48] sm:$0xff] %v702
  %719 = vst [vmem:[#allocation2 + $0x50] sm:$0xff] %v703
  %720 = vst [vmem:[#allocation2 + $0x58] sm:$0xff] %v704
  %721 = vst [vmem:[#allocation2 + $0x60] sm:$0xff] %v705
  %722 = vst [vmem:[#allocation2 + $0x68] sm:$0xff] %v706
  %723 = vst [vmem:[#allocation2 + $0x70] sm:$0xff] %v707
  %724 = vst [vmem:[#allocation2 + $0x78] sm:$0xff] %v708
  // Predicated region
  $region18: #{alexnet_forward.13} parent=0 // pred_check
    %p725 = pneg %p15
  $region19: #{alexnet_forward.13} parent=0 // pred_check_branch
    %727 = sbr.rel (%p725) target = $region21
  $region20: #{alexnet_forward.13} parent=0 // pred_region
    %v728 = vld [vmem:[#allocation2] sm:$0xff]
    %v729 = vld [vmem:[#allocation2 + $0x8] sm:$0xff]
    %v730 = vld [vmem:[#allocation2 + $0x10] sm:$0xff]
    %v731 = vld [vmem:[#allocation2 + $0x18] sm:$0xff]
    %v732 = vld [vmem:[#allocation2 + $0x20] sm:$0xff]
    %v733 = vld [vmem:[#allocation2 + $0x28] sm:$0xff]
    %v734 = vld [vmem:[#allocation2 + $0x30] sm:$0xff]
    %v735 = vld [vmem:[#allocation2 + $0x38] sm:$0xff]
    %v736 = vld [vmem:[#allocation2 + $0x40] sm:$0xff]
    %v737 = vld [vmem:[#allocation2 + $0x48] sm:$0xff]
    %v738 = vld [vmem:[#allocation2 + $0x50] sm:$0xff]
    %v739 = vld [vmem:[#allocation2 + $0x58] sm:$0xff]
    %v740 = vld [vmem:[#allocation2 + $0x60] sm:$0xff]
    %v741 = vld [vmem:[#allocation2 + $0x68] sm:$0xff]
    %v742 = vld [vmem:[#allocation2 + $0x70] sm:$0xff]
    %v743 = vld [vmem:[#allocation2 + $0x78] sm:$0xff]
    %v744 = vld [vmem:[%s2] sm:$0x1]
    %v746 = vlaneseq
    %v747 = vshrl.u32 %v746, 7
    %v748 = vsub.s32 0, %v747
    %v749 = vrot.slane %v744, %v748
    %v751 = vadd.f32 %v728, %v749
    %v752 = vadd.f32 %v729, %v749
    %v753 = vadd.f32 %v730, %v749
    %v754 = vadd.f32 %v731, %v749
    %v755 = vadd.f32 %v732, %v749
    %v756 = vadd.f32 %v733, %v749
    %v757 = vadd.f32 %v734, %v749
    %v758 = vadd.f32 %v735, %v749
    %v759 = vadd.f32 %v736, %v749
    %v760 = vadd.f32 %v737, %v749
    %v761 = vadd.f32 %v738, %v749
    %v762 = vadd.f32 %v739, %v749
    %v763 = vadd.f32 %v740, %v749
    %v764 = vadd.f32 %v741, %v749
    %v765 = vadd.f32 %v742, %v749
    %v766 = vadd.f32 %v743, %v749
    %v767 = vmax.f32 %v751, 0.0
    %v768 = vmax.f32 %v752, 0.0
    %v769 = vmax.f32 %v753, 0.0
    %v770 = vmax.f32 %v754, 0.0
    %v771 = vmax.f32 %v755, 0.0
    %v772 = vmax.f32 %v756, 0.0
    %v773 = vmax.f32 %v757, 0.0
    %v774 = vmax.f32 %v758, 0.0
    %v775 = vmax.f32 %v759, 0.0
    %v776 = vmax.f32 %v760, 0.0
    %v777 = vmax.f32 %v761, 0.0
    %v778 = vmax.f32 %v762, 0.0
    %v779 = vmax.f32 %v763, 0.0
    %v780 = vmax.f32 %v764, 0.0
    %v781 = vmax.f32 %v765, 0.0
    %v782 = vmax.f32 %v766, 0.0
    %v783 = vpack.c.bf16 %v768, %v767
    %v784 = vpack.c.bf16 %v770, %v769
    %v785 = vpack.c.bf16 %v772, %v771
    %v786 = vpack.c.bf16 %v774, %v773
    %v787 = vpack.c.bf16 %v776, %v775
    %v788 = vpack.c.bf16 %v778, %v777
    %v789 = vpack.c.bf16 %v780, %v779
    %v790 = vpack.c.bf16 %v782, %v781
    %v799 = vunpack.c.l.b16 %v783
    %v800 = vunpack.c.h.b16 %v783
    %v801 = vunpack.c.l.b16 %v784
    %v802 = vunpack.c.h.b16 %v784
    %v803 = vunpack.c.l.b16 %v785
    %v804 = vunpack.c.h.b16 %v785
    %v805 = vunpack.c.l.b16 %v786
    %v806 = vunpack.c.h.b16 %v786
    %v807 = vunpack.c.l.b16 %v787
    %v808 = vunpack.c.h.b16 %v787
    %v809 = vunpack.c.l.b16 %v788
    %v810 = vunpack.c.h.b16 %v788
    %v811 = vunpack.c.l.b16 %v789
    %v812 = vunpack.c.h.b16 %v789
    %v813 = vunpack.c.l.b16 %v790
    %v814 = vunpack.c.h.b16 %v790
    %v815 = vpack.c.b16 %v799, %v799
    %v816 = vpack.c.b16 %v800, %v800
    %v817 = vpack.c.b16 %v801, %v801
    %v818 = vpack.c.b16 %v802, %v802
    %v819 = vpack.c.b16 %v803, %v803
    %v820 = vpack.c.b16 %v804, %v804
    %v821 = vpack.c.b16 %v805, %v805
    %v822 = vpack.c.b16 %v806, %v806
    %v823 = vpack.c.b16 %v807, %v807
    %v824 = vpack.c.b16 %v808, %v808
    %v825 = vpack.c.b16 %v809, %v809
    %v826 = vpack.c.b16 %v810, %v810
    %v827 = vpack.c.b16 %v811, %v811
    %v828 = vpack.c.b16 %v812, %v812
    %v829 = vpack.c.b16 %v813, %v813
    %v830 = vpack.c.b16 %v814, %v814
    %847 = vst [vmem:[%s3] sm:$0xf] %v815
    %848 = vst [vmem:[%s3 + $0x4] sm:$0xf] %v816
    %849 = vst [vmem:[%s3 + $0x8] sm:$0xf] %v817
    %850 = vst [vmem:[%s3 + $0xc] sm:$0xf] %v818
    %851 = vst [vmem:[%s3 + $0x10] sm:$0xf] %v819
    %852 = vst [vmem:[%s3 + $0x14] sm:$0xf] %v820
    %853 = vst [vmem:[%s3 + $0x18] sm:$0xf] %v821
    %854 = vst [vmem:[%s3 + $0x1c] sm:$0xf] %v822
    %855 = vst [vmem:[%s3 + $0x20] sm:$0xf] %v823
    %856 = vst [vmem:[%s3 + $0x24] sm:$0xf] %v824
    %857 = vst [vmem:[%s3 + $0x28] sm:$0xf] %v825
    %858 = vst [vmem:[%s3 + $0x2c] sm:$0xf] %v826
    %859 = vst [vmem:[%s3 + $0x30] sm:$0xf] %v827
    %860 = vst [vmem:[%s3 + $0x34] sm:$0xf] %v828
    %861 = vst [vmem:[%s3 + $0x38] sm:$0xf] %v829
    %862 = vst [vmem:[%s3 + $0x3c] sm:$0xf] %v830
  $region21: #{alexnet_forward.13} parent=0 // pred_fallthru
    _
  // Predicated region
  $region22: #{alexnet_forward.13} parent=0 // pred_check
    _
  $region23: #{alexnet_forward.13} parent=0 // pred_check_branch
    %864 = sbr.rel (0) target = $region25
  $region24: #{alexnet_forward.13} parent=0 // pred_region
    _
  $region25: #{alexnet_forward.13} parent=0 // pred_fallthru
    _
  // Predicated region
  $region26: #{alexnet_forward.13} parent=0 // pred_check
    _
  $region27: #{alexnet_forward.13} parent=0 // pred_check_branch
    %866 = sbr.rel (0) target = $region29
  $region28: #{alexnet_forward.13} parent=0 // pred_region
    _
  $region29: #{alexnet_forward.13} parent=0 // pred_fallthru
    _

// kernel: alexnet_forward.15
$region0: #{alexnet_forward.15}
  #allocation0 [shape = 'u32[]', space=smem, size = 0x4, offset = 0x4, fixed_abs, tag = 'smem constant byte address 0x4 - core index']
  #allocation1 [shape = 'u32[144,128]{1,0:T(1,128)}', space=vmem, size = 0x12000, scoped, tag = 'internal scratch']
  #allocation2 [shape = 'f32[128,128]{1,0:T(8,128)}', space=vmem, size = 0x10000, scoped, tag = 'scratch operand']
  %s0 = inlined_call_operand.vmem [shape: bf16[128,256], index: 0, kind: input, shape index: {}]
  %s1 = inlined_call_operand.vmem [shape: bf16[256,128], index: 1, kind: input, shape index: {}]
  %s2 = inlined_call_operand.vmem [shape: f32[1,128], index: 2, kind: input, shape index: {}]
  %s3 = inlined_call_operand.vmem [shape: bf16[128,128], index: 3, kind: output, shape index: {}]
  %s4 = sld [smem:[#allocation0]]
  $region30: #{alexnet_forward.15} parent=0
    _
  %s6 = ssub.s32 1, %s4
  %s7 = scalar_select 0, %s6, %s4
  // Predicated region
  $region2: #{alexnet_forward.15} parent=0 // pred_check
    _
  $region3: #{alexnet_forward.15} parent=0 // pred_check_branch
    %9 = sbr.rel (0) target = $region5
  $region4: #{alexnet_forward.15} parent=0 // pred_region
    _
  $region5: #{alexnet_forward.15} parent=0 // pred_fallthru
    _
  // Predicated region
  $region6: #{alexnet_forward.15} parent=0 // pred_check
    _
  $region7: #{alexnet_forward.15} parent=0 // pred_check_branch
    %11 = sbr.rel (0) target = $region9
  $region8: #{alexnet_forward.15} parent=0 // pred_region
    _
  $region9: #{alexnet_forward.15} parent=0 // pred_fallthru
    _
  // Predicated region
  $region10: #{alexnet_forward.15} parent=0 // pred_check
    _
  $region11: #{alexnet_forward.15} parent=0 // pred_check_branch
    %13 = sbr.rel (0) target = $region13
  $region12: #{alexnet_forward.15} parent=0 // pred_region
    _
  $region13: #{alexnet_forward.15} parent=0 // pred_fallthru
    _
  %p15 = scmp.eq.s32.totalorder 0, 0
  // Predicated region
  $region14: #{alexnet_forward.15} parent=0 // pred_check
    %p16 = pneg %p15
  $region15: #{alexnet_forward.15} parent=0 // pred_check_branch
    %18 = sbr.rel (%p16) target = $region17
  $region16: #{alexnet_forward.15} parent=0 // pred_region
    %19 = vst [vmem:[#allocation2] sm:$0xff] 0.0
    %20 = vst [vmem:[#allocation2 + $0x8] sm:$0xff] 0.0
    %21 = vst [vmem:[#allocation2 + $0x10] sm:$0xff] 0.0
    %22 = vst [vmem:[#allocation2 + $0x18] sm:$0xff] 0.0
    %23 = vst [vmem:[#allocation2 + $0x20] sm:$0xff] 0.0
    %24 = vst [vmem:[#allocation2 + $0x28] sm:$0xff] 0.0
    %25 = vst [vmem:[#allocation2 + $0x30] sm:$0xff] 0.0
    %26 = vst [vmem:[#allocation2 + $0x38] sm:$0xff] 0.0
    %27 = vst [vmem:[#allocation2 + $0x40] sm:$0xff] 0.0
    %28 = vst [vmem:[#allocation2 + $0x48] sm:$0xff] 0.0
    %29 = vst [vmem:[#allocation2 + $0x50] sm:$0xff] 0.0
    %30 = vst [vmem:[#allocation2 + $0x58] sm:$0xff] 0.0
    %31 = vst [vmem:[#allocation2 + $0x60] sm:$0xff] 0.0
    %32 = vst [vmem:[#allocation2 + $0x68] sm:$0xff] 0.0
    %33 = vst [vmem:[#allocation2 + $0x70] sm:$0xff] 0.0
    %34 = vst [vmem:[#allocation2 + $0x78] sm:$0xff] 0.0
  $region17: #{alexnet_forward.15} parent=0 // pred_fallthru
    _
  %v35 = vld [vmem:[#allocation2] sm:$0xff]
  %v36 = vld [vmem:[#allocation2 + $0x8] sm:$0xff]
  %v37 = vld [vmem:[#allocation2 + $0x10] sm:$0xff]
  %v38 = vld [vmem:[#allocation2 + $0x18] sm:$0xff]
  %v39 = vld [vmem:[#allocation2 + $0x20] sm:$0xff]
  %v40 = vld [vmem:[#allocation2 + $0x28] sm:$0xff]
  %v41 = vld [vmem:[#allocation2 + $0x30] sm:$0xff]
  %v42 = vld [vmem:[#allocation2 + $0x38] sm:$0xff]
  %v43 = vld [vmem:[#allocation2 + $0x40] sm:$0xff]
  %v44 = vld [vmem:[#allocation2 + $0x48] sm:$0xff]
  %v45 = vld [vmem:[#allocation2 + $0x50] sm:$0xff]
  %v46 = vld [vmem:[#allocation2 + $0x58] sm:$0xff]
  %v47 = vld [vmem:[#allocation2 + $0x60] sm:$0xff]
  %v48 = vld [vmem:[#allocation2 + $0x68] sm:$0xff]
  %v49 = vld [vmem:[#allocation2 + $0x70] sm:$0xff]
  %v50 = vld [vmem:[#allocation2 + $0x78] sm:$0xff]
  %v51 = vld [vmem:[%s0] sm:$0xff]
  %v52 = vld [vmem:[%s0 + $0x8] sm:$0xff]
  %v53 = vld [vmem:[%s0 + $0x10] sm:$0xff]
  %v54 = vld [vmem:[%s0 + $0x18] sm:$0xff]
  %v55 = vld [vmem:[%s0 + $0x20] sm:$0xff]
  %v56 = vld [vmem:[%s0 + $0x28] sm:$0xff]
  %v57 = vld [vmem:[%s0 + $0x30] sm:$0xff]
  %v58 = vld [vmem:[%s0 + $0x38] sm:$0xff]
  %v59 = vld [vmem:[%s0 + $0x40] sm:$0xff]
  %v60 = vld [vmem:[%s0 + $0x48] sm:$0xff]
  %v61 = vld [vmem:[%s0 + $0x50] sm:$0xff]
  %v62 = vld [vmem:[%s0 + $0x58] sm:$0xff]
  %v63 = vld [vmem:[%s0 + $0x60] sm:$0xff]
  %v64 = vld [vmem:[%s0 + $0x68] sm:$0xff]
  %v65 = vld [vmem:[%s0 + $0x70] sm:$0xff]
  %v66 = vld [vmem:[%s0 + $0x78] sm:$0xff]
  %v67 = vld [vmem:[%s1] sm:$0xf]
  %v68 = vld [vmem:[%s1 + $0x4] sm:$0xf]
  %v69 = vld [vmem:[%s1 + $0x8] sm:$0xf]
  %v70 = vld [vmem:[%s1 + $0xc] sm:$0xf]
  %v71 = vld [vmem:[%s1 + $0x10] sm:$0xf]
  %v72 = vld [vmem:[%s1 + $0x14] sm:$0xf]
  %v73 = vld [vmem:[%s1 + $0x18] sm:$0xf]
  %v74 = vld [vmem:[%s1 + $0x1c] sm:$0xf]
  %v75 = vld [vmem:[%s1 + $0x20] sm:$0xf]
  %v76 = vld [vmem:[%s1 + $0x24] sm:$0xf]
  %v77 = vld [vmem:[%s1 + $0x28] sm:$0xf]
  %v78 = vld [vmem:[%s1 + $0x2c] sm:$0xf]
  %v79 = vld [vmem:[%s1 + $0x30] sm:$0xf]
  %v80 = vld [vmem:[%s1 + $0x34] sm:$0xf]
  %v81 = vld [vmem:[%s1 + $0x38] sm:$0xf]
  %v82 = vld [vmem:[%s1 + $0x3c] sm:$0xf]
  %v83 = vld [vmem:[%s1 + $0x40] sm:$0xf]
  %v84 = vld [vmem:[%s1 + $0x44] sm:$0xf]
  %v85 = vld [vmem:[%s1 + $0x48] sm:$0xf]
  %v86 = vld [vmem:[%s1 + $0x4c] sm:$0xf]
  %v87 = vld [vmem:[%s1 + $0x50] sm:$0xf]
  %v88 = vld [vmem:[%s1 + $0x54] sm:$0xf]
  %v89 = vld [vmem:[%s1 + $0x58] sm:$0xf]
  %v90 = vld [vmem:[%s1 + $0x5c] sm:$0xf]
  %v91 = vld [vmem:[%s1 + $0x60] sm:$0xf]
  %v92 = vld [vmem:[%s1 + $0x64] sm:$0xf]
  %v93 = vld [vmem:[%s1 + $0x68] sm:$0xf]
  %v94 = vld [vmem:[%s1 + $0x6c] sm:$0xf]
  %v95 = vld [vmem:[%s1 + $0x70] sm:$0xf]
  %v96 = vld [vmem:[%s1 + $0x74] sm:$0xf]
  %v97 = vld [vmem:[%s1 + $0x78] sm:$0xf]
  %v98 = vld [vmem:[%s1 + $0x7c] sm:$0xf]
  %v115 = vunpack.c.l.b16 %v51
  %v116 = vunpack.c.h.b16 %v51
  %v117 = vunpack.c.l.b16 %v52
  %v118 = vunpack.c.h.b16 %v52
  %v119 = vunpack.c.l.b16 %v53
  %v120 = vunpack.c.h.b16 %v53
  %v121 = vunpack.c.l.b16 %v54
  %v122 = vunpack.c.h.b16 %v54
  %v123 = vunpack.c.l.b16 %v55
  %v124 = vunpack.c.h.b16 %v55
  %v125 = vunpack.c.l.b16 %v56
  %v126 = vunpack.c.h.b16 %v56
  %v127 = vunpack.c.l.b16 %v57
  %v128 = vunpack.c.h.b16 %v57
  %v129 = vunpack.c.l.b16 %v58
  %v130 = vunpack.c.h.b16 %v58
  %v131 = vunpack.c.l.b16 %v59
  %v132 = vunpack.c.h.b16 %v59
  %v133 = vunpack.c.l.b16 %v60
  %v134 = vunpack.c.h.b16 %v60
  %v135 = vunpack.c.l.b16 %v61
  %v136 = vunpack.c.h.b16 %v61
  %v137 = vunpack.c.l.b16 %v62
  %v138 = vunpack.c.h.b16 %v62
  %v139 = vunpack.c.l.b16 %v63
  %v140 = vunpack.c.h.b16 %v63
  %v141 = vunpack.c.l.b16 %v64
  %v142 = vunpack.c.h.b16 %v64
  %v143 = vunpack.c.l.b16 %v65
  %v144 = vunpack.c.h.b16 %v65
  %v145 = vunpack.c.l.b16 %v66
  %v146 = vunpack.c.h.b16 %v66
  %v147 = vpack.c.b16 %v117, %v115
  %v148 = vpack.c.b16 %v118, %v116
  %v149 = vpack.c.b16 %v121, %v119
  %v150 = vpack.c.b16 %v122, %v120
  %v151 = vpack.c.b16 %v125, %v123
  %v152 = vpack.c.b16 %v126, %v124
  %v153 = vpack.c.b16 %v129, %v127
  %v154 = vpack.c.b16 %v130, %v128
  %v155 = vpack.c.b16 %v133, %v131
  %v156 = vpack.c.b16 %v134, %v132
  %v157 = vpack.c.b16 %v137, %v135
  %v158 = vpack.c.b16 %v138, %v136
  %v159 = vpack.c.b16 %v141, %v139
  %v160 = vpack.c.b16 %v142, %v140
  %v161 = vpack.c.b16 %v145, %v143
  %v162 = vpack.c.b16 %v146, %v144
  %v211 = vunpack.c.l.b16 %v67
  %v212 = vunpack.c.l.b16 %v68
  %v213 = vunpack.c.l.b16 %v69
  %v214 = vunpack.c.l.b16 %v70
  %v215 = vunpack.c.l.b16 %v71
  %v216 = vunpack.c.l.b16 %v72
  %v217 = vunpack.c.l.b16 %v73
  %v218 = vunpack.c.l.b16 %v74
  %v219 = vunpack.c.l.b16 %v75
  %v220 = vunpack.c.l.b16 %v76
  %v221 = vunpack.c.l.b16 %v77
  %v222 = vunpack.c.l.b16 %v78
  %v223 = vunpack.c.l.b16 %v79
  %v224 = vunpack.c.l.b16 %v80
  %v225 = vunpack.c.l.b16 %v81
  %v226 = vunpack.c.l.b16 %v82
  %v227 = vunpack.c.l.b16 %v83
  %v228 = vunpack.c.l.b16 %v84
  %v229 = vunpack.c.l.b16 %v85
  %v230 = vunpack.c.l.b16 %v86
  %v231 = vunpack.c.l.b16 %v87
  %v232 = vunpack.c.l.b16 %v88
  %v233 = vunpack.c.l.b16 %v89
  %v234 = vunpack.c.l.b16 %v90
  %v235 = vunpack.c.l.b16 %v91
  %v236 = vunpack.c.l.b16 %v92
  %v237 = vunpack.c.l.b16 %v93
  %v238 = vunpack.c.l.b16 %v94
  %v239 = vunpack.c.l.b16 %v95
  %v240 = vunpack.c.l.b16 %v96
  %v241 = vunpack.c.l.b16 %v97
  %v242 = vunpack.c.l.b16 %v98
  %v243 = vpack.c.b16 %v212, %v211
  %v244 = vpack.c.b16 %v214, %v213
  %v245 = vpack.c.b16 %v216, %v215
  %v246 = vpack.c.b16 %v218, %v217
  %v247 = vpack.c.b16 %v220, %v219
  %v248 = vpack.c.b16 %v222, %v221
  %v249 = vpack.c.b16 %v224, %v223
  %v250 = vpack.c.b16 %v226, %v225
  %v251 = vpack.c.b16 %v228, %v227
  %v252 = vpack.c.b16 %v230, %v229
  %v253 = vpack.c.b16 %v232, %v231
  %v254 = vpack.c.b16 %v234, %v233
  %v255 = vpack.c.b16 %v236, %v235
  %v256 = vpack.c.b16 %v238, %v237
  %v257 = vpack.c.b16 %v240, %v239
  %v258 = vpack.c.b16 %v242, %v241
  %275 = vmatprep.subr.bf16.mxu0 0
  %276 = vmatpush1.bf16.msra.mxu0 %v243
  %277 = vmatprep.subr.bf16.mxu0 0
  %278 = vmatpush1.bf16.msra.mxu0 %v244
  %279 = vmatprep.subr.bf16.mxu0 0
  %280 = vmatpush1.bf16.msra.mxu0 %v245
  %281 = vmatprep.subr.bf16.mxu0 0
  %282 = vmatpush1.bf16.msra.mxu0 %v246
  %283 = vmatprep.subr.bf16.mxu0 0
  %284 = vmatpush1.bf16.msra.mxu0 %v247
  %285 = vmatprep.subr.bf16.mxu0 0
  %286 = vmatpush1.bf16.msra.mxu0 %v248
  %287 = vmatprep.subr.bf16.mxu0 0
  %288 = vmatpush1.bf16.msra.mxu0 %v249
  %289 = vmatprep.subr.bf16.mxu0 0
  %290 = vmatpush1.bf16.msra.mxu0 %v250
  %291 = vmatprep.subr.bf16.mxu0 0
  %292 = vmatpush1.bf16.msra.mxu0 %v251
  %293 = vmatprep.subr.bf16.mxu0 0
  %294 = vmatpush1.bf16.msra.mxu0 %v252
  %295 = vmatprep.subr.bf16.mxu0 0
  %296 = vmatpush1.bf16.msra.mxu0 %v253
  %297 = vmatprep.subr.bf16.mxu0 0
  %298 = vmatpush1.bf16.msra.mxu0 %v254
  %299 = vmatprep.subr.bf16.mxu0 0
  %300 = vmatpush1.bf16.msra.mxu0 %v255
  %301 = vmatprep.subr.bf16.mxu0 0
  %302 = vmatpush1.bf16.msra.mxu0 %v256
  %303 = vmatprep.subr.bf16.mxu0 0
  %304 = vmatpush1.bf16.msra.mxu0 %v257
  %305 = vmatprep.subr.bf16.mxu0 0
  %306 = vmatpush1.bf16.msra.mxu0 %v258
  %307 = vmatprep.mubr.bf16.mxu0 %v148
  %308 = vmatmul.mubr.bf16.gmra.mrb[0].mxu0 %v147
  %v309 = vpop.f32.mrb[0].mxu0
  %v310 = vadd.f32 0.0, %v309
  %v311 = vpop.f32.mrb[0].mxu0
  %v312 = vpop.f32.mrb[0].mxu0
  %v313 = vadd.f32 0.0, %v312
  %v314 = vpop.f32.mrb[0].mxu0
  %315 = vmatprep.mubr.bf16.mxu0 %v150
  %316 = vmatmul.mubr.bf16.gmra.mrb[0].mxu0 %v149
  %v317 = vpop.f32.mrb[0].mxu0
  %v318 = vadd.f32 0.0, %v317
  %v319 = vpop.f32.mrb[0].mxu0
  %v320 = vpop.f32.mrb[0].mxu0
  %v321 = vadd.f32 0.0, %v320
  %v322 = vpop.f32.mrb[0].mxu0
  %323 = vmatprep.mubr.bf16.mxu0 %v152
  %324 = vmatmul.mubr.bf16.gmra.mrb[0].mxu0 %v151
  %v325 = vpop.f32.mrb[0].mxu0
  %v326 = vadd.f32 0.0, %v325
  %v327 = vpop.f32.mrb[0].mxu0
  %v328 = vpop.f32.mrb[0].mxu0
  %v329 = vadd.f32 0.0, %v328
  %v330 = vpop.f32.mrb[0].mxu0
  %331 = vmatprep.mubr.bf16.mxu0 %v154
  %332 = vmatmul.mubr.bf16.gmra.mrb[0].mxu0 %v153
  %v333 = vpop.f32.mrb[0].mxu0
  %v334 = vadd.f32 0.0, %v333
  %v335 = vpop.f32.mrb[0].mxu0
  %v336 = vpop.f32.mrb[0].mxu0
  %v337 = vadd.f32 0.0, %v336
  %v338 = vpop.f32.mrb[0].mxu0
  %339 = vmatprep.mubr.bf16.mxu0 %v156
  %340 = vmatmul.mubr.bf16.gmra.mrb[0].mxu0 %v155
  %v341 = vpop.f32.mrb[0].mxu0
  %v342 = vadd.f32 0.0, %v341
  %v343 = vpop.f32.mrb[0].mxu0
  %v344 = vpop.f32.mrb[0].mxu0
  %v345 = vadd.f32 0.0, %v344
  %v346 = vpop.f32.mrb[0].mxu0
  %347 = vmatprep.mubr.bf16.mxu0 %v158
  %348 = vmatmul.mubr.bf16.gmra.mrb[0].mxu0 %v157
  %v349 = vpop.f32.mrb[0].mxu0
  %v350 = vadd.f32 0.0, %v349
  %v351 = vpop.f32.mrb[0].mxu0
  %v352 = vpop.f32.mrb[0].mxu0
  %v353 = vadd.f32 0.0, %v352
  %v354 = vpop.f32.mrb[0].mxu0
  %355 = vmatprep.mubr.bf16.mxu0 %v160
  %356 = vmatmul.mubr.bf16.gmra.mrb[0].mxu0 %v159
  %v357 = vpop.f32.mrb[0].mxu0
  %v358 = vadd.f32 0.0, %v357
  %v359 = vpop.f32.mrb[0].mxu0
  %v360 = vpop.f32.mrb[0].mxu0
  %v361 = vadd.f32 0.0, %v360
  %v362 = vpop.f32.mrb[0].mxu0
  %363 = vmatprep.mubr.bf16.mxu0 %v162
  %364 = vmatmul.mubr.bf16.gmra.mrb[0].mxu0 %v161
  %v365 = vpop.f32.mrb[0].mxu0
  %v366 = vadd.f32 0.0, %v365
  %v367 = vpop.f32.mrb[0].mxu0
  %v368 = vpop.f32.mrb[0].mxu0
  %v369 = vadd.f32 0.0, %v368
  %v370 = vpop.f32.mrb[0].mxu0
  %371 = vdwg.mxu0
  %v372 = vadd.f32 %v35, %v310
  %v373 = vadd.f32 %v36, %v313
  %v374 = vadd.f32 %v37, %v318
  %v375 = vadd.f32 %v38, %v321
  %v376 = vadd.f32 %v39, %v326
  %v377 = vadd.f32 %v40, %v329
  %v378 = vadd.f32 %v41, %v334
  %v379 = vadd.f32 %v42, %v337
  %v380 = vadd.f32 %v43, %v342
  %v381 = vadd.f32 %v44, %v345
  %v382 = vadd.f32 %v45, %v350
  %v383 = vadd.f32 %v46, %v353
  %v384 = vadd.f32 %v47, %v358
  %v385 = vadd.f32 %v48, %v361
  %v386 = vadd.f32 %v49, %v366
  %v387 = vadd.f32 %v50, %v369
  %388 = vst [vmem:[#allocation2] sm:$0xff] %v372
  %389 = vst [vmem:[#allocation2 + $0x8] sm:$0xff] %v373
  %390 = vst [vmem:[#allocation2 + $0x10] sm:$0xff] %v374
  %391 = vst [vmem:[#allocation2 + $0x18] sm:$0xff] %v375
  %392 = vst [vmem:[#allocation2 + $0x20] sm:$0xff] %v376
  %393 = vst [vmem:[#allocation2 + $0x28] sm:$0xff] %v377
  %394 = vst [vmem:[#allocation2 + $0x30] sm:$0xff] %v378
  %395 = vst [vmem:[#allocation2 + $0x38] sm:$0xff] %v379
  %396 = vst [vmem:[#allocation2 + $0x40] sm:$0xff] %v380
  %397 = vst [vmem:[#allocation2 + $0x48] sm:$0xff] %v381
  %398 = vst [vmem:[#allocation2 + $0x50] sm:$0xff] %v382
  %399 = vst [vmem:[#allocation2 + $0x58] sm:$0xff] %v383
  %400 = vst [vmem:[#allocation2 + $0x60] sm:$0xff] %v384
  %401 = vst [vmem:[#allocation2 + $0x68] sm:$0xff] %v385
  %402 = vst [vmem:[#allocation2 + $0x70] sm:$0xff] %v386
  %403 = vst [vmem:[#allocation2 + $0x78] sm:$0xff] %v387
  // Predicated region
  $region18: #{alexnet_forward.15} parent=0 // pred_check
    %p404 = pneg %p15
  $region19: #{alexnet_forward.15} parent=0 // pred_check_branch
    %406 = sbr.rel (%p404) target = $region21
  $region20: #{alexnet_forward.15} parent=0 // pred_region
    %v407 = vld [vmem:[#allocation2] sm:$0xff]
    %v408 = vld [vmem:[#allocation2 + $0x8] sm:$0xff]
    %v409 = vld [vmem:[#allocation2 + $0x10] sm:$0xff]
    %v410 = vld [vmem:[#allocation2 + $0x18] sm:$0xff]
    %v411 = vld [vmem:[#allocation2 + $0x20] sm:$0xff]
    %v412 = vld [vmem:[#allocation2 + $0x28] sm:$0xff]
    %v413 = vld [vmem:[#allocation2 + $0x30] sm:$0xff]
    %v414 = vld [vmem:[#allocation2 + $0x38] sm:$0xff]
    %v415 = vld [vmem:[#allocation2 + $0x40] sm:$0xff]
    %v416 = vld [vmem:[#allocation2 + $0x48] sm:$0xff]
    %v417 = vld [vmem:[#allocation2 + $0x50] sm:$0xff]
    %v418 = vld [vmem:[#allocation2 + $0x58] sm:$0xff]
    %v419 = vld [vmem:[#allocation2 + $0x60] sm:$0xff]
    %v420 = vld [vmem:[#allocation2 + $0x68] sm:$0xff]
    %v421 = vld [vmem:[#allocation2 + $0x70] sm:$0xff]
    %v422 = vld [vmem:[#allocation2 + $0x78] sm:$0xff]
    %v423 = vld [vmem:[%s2] sm:$0x1]
    %v425 = vlaneseq
    %v426 = vshrl.u32 %v425, 7
    %v427 = vsub.s32 0, %v426
    %v428 = vrot.slane %v423, %v427
    %v430 = vadd.f32 %v407, %v428
    %v431 = vadd.f32 %v408, %v428
    %v432 = vadd.f32 %v409, %v428
    %v433 = vadd.f32 %v410, %v428
    %v434 = vadd.f32 %v411, %v428
    %v435 = vadd.f32 %v412, %v428
    %v436 = vadd.f32 %v413, %v428
    %v437 = vadd.f32 %v414, %v428
    %v438 = vadd.f32 %v415, %v428
    %v439 = vadd.f32 %v416, %v428
    %v440 = vadd.f32 %v417, %v428
    %v441 = vadd.f32 %v418, %v428
    %v442 = vadd.f32 %v419, %v428
    %v443 = vadd.f32 %v420, %v428
    %v444 = vadd.f32 %v421, %v428
    %v445 = vadd.f32 %v422, %v428
    %v446 = vmax.f32 %v430, 0.0
    %v447 = vmax.f32 %v431, 0.0
    %v448 = vmax.f32 %v432, 0.0
    %v449 = vmax.f32 %v433, 0.0
    %v450 = vmax.f32 %v434, 0.0
    %v451 = vmax.f32 %v435, 0.0
    %v452 = vmax.f32 %v436, 0.0
    %v453 = vmax.f32 %v437, 0.0
    %v454 = vmax.f32 %v438, 0.0
    %v455 = vmax.f32 %v439, 0.0
    %v456 = vmax.f32 %v440, 0.0
    %v457 = vmax.f32 %v441, 0.0
    %v458 = vmax.f32 %v442, 0.0
    %v459 = vmax.f32 %v443, 0.0
    %v460 = vmax.f32 %v444, 0.0
    %v461 = vmax.f32 %v445, 0.0
    %v462 = vpack.c.bf16 %v447, %v446
    %v463 = vpack.c.bf16 %v449, %v448
    %v464 = vpack.c.bf16 %v451, %v450
    %v465 = vpack.c.bf16 %v453, %v452
    %v466 = vpack.c.bf16 %v455, %v454
    %v467 = vpack.c.bf16 %v457, %v456
    %v468 = vpack.c.bf16 %v459, %v458
    %v469 = vpack.c.bf16 %v461, %v460
    %v478 = vunpack.c.l.b16 %v462
    %v479 = vunpack.c.h.b16 %v462
    %v480 = vunpack.c.l.b16 %v463
    %v481 = vunpack.c.h.b16 %v463
    %v482 = vunpack.c.l.b16 %v464
    %v483 = vunpack.c.h.b16 %v464
    %v484 = vunpack.c.l.b16 %v465
    %v485 = vunpack.c.h.b16 %v465
    %v486 = vunpack.c.l.b16 %v466
    %v487 = vunpack.c.h.b16 %v466
    %v488 = vunpack.c.l.b16 %v467
    %v489 = vunpack.c.h.b16 %v467
    %v490 = vunpack.c.l.b16 %v468
    %v491 = vunpack.c.h.b16 %v468
    %v492 = vunpack.c.l.b16 %v469
    %v493 = vunpack.c.h.b16 %v469
    %v494 = vpack.c.b16 %v478, %v478
    %v495 = vpack.c.b16 %v479, %v479
    %v496 = vpack.c.b16 %v480, %v480
    %v497 = vpack.c.b16 %v481, %v481
    %v498 = vpack.c.b16 %v482, %v482
    %v499 = vpack.c.b16 %v483, %v483
    %v500 = vpack.c.b16 %v484, %v484
    %v501 = vpack.c.b16 %v485, %v485
    %v502 = vpack.c.b16 %v486, %v486
    %v503 = vpack.c.b16 %v487, %v487
    %v504 = vpack.c.b16 %v488, %v488
    %v505 = vpack.c.b16 %v489, %v489
    %v506 = vpack.c.b16 %v490, %v490
    %v507 = vpack.c.b16 %v491, %v491
    %v508 = vpack.c.b16 %v492, %v492
    %v509 = vpack.c.b16 %v493, %v493
    %526 = vst [vmem:[%s3] sm:$0xf] %v494
    %527 = vst [vmem:[%s3 + $0x4] sm:$0xf] %v495
    %528 = vst [vmem:[%s3 + $0x8] sm:$0xf] %v496
    %529 = vst [vmem:[%s3 + $0xc] sm:$0xf] %v497
    %530 = vst [vmem:[%s3 + $0x10] sm:$0xf] %v498
    %531 = vst [vmem:[%s3 + $0x14] sm:$0xf] %v499
    %532 = vst [vmem:[%s3 + $0x18] sm:$0xf] %v500
    %533 = vst [vmem:[%s3 + $0x1c] sm:$0xf] %v501
    %534 = vst [vmem:[%s3 + $0x20] sm:$0xf] %v502
    %535 = vst [vmem:[%s3 + $0x24] sm:$0xf] %v503
    %536 = vst [vmem:[%s3 + $0x28] sm:$0xf] %v504
    %537 = vst [vmem:[%s3 + $0x2c] sm:$0xf] %v505
    %538 = vst [vmem:[%s3 + $0x30] sm:$0xf] %v506
    %539 = vst [vmem:[%s3 + $0x34] sm:$0xf] %v507
    %540 = vst [vmem:[%s3 + $0x38] sm:$0xf] %v508
    %541 = vst [vmem:[%s3 + $0x3c] sm:$0xf] %v509
  $region21: #{alexnet_forward.15} parent=0 // pred_fallthru
    _
  // Predicated region
  $region22: #{alexnet_forward.15} parent=0 // pred_check
    _
  $region23: #{alexnet_forward.15} parent=0 // pred_check_branch
    %543 = sbr.rel (0) target = $region25
  $region24: #{alexnet_forward.15} parent=0 // pred_region
    _
  $region25: #{alexnet_forward.15} parent=0 // pred_fallthru
    _
  // Predicated region
  $region26: #{alexnet_forward.15} parent=0 // pred_check
    _
  $region27: #{alexnet_forward.15} parent=0 // pred_check_branch
    %545 = sbr.rel (0) target = $region29
  $region28: #{alexnet_forward.15} parent=0 // pred_region
    _
  $region29: #{alexnet_forward.15} parent=0 // pred_fallthru
    _

// kernel: alexnet_forward.21
$region0: #{alexnet_forward.21}
  #allocation0 [shape = 'u32[]', space=smem, size = 0x4, offset = 0x4, fixed_abs, tag = 'smem constant byte address 0x4 - core index']
  #allocation1 [shape = 'u32[144,128]{1,0:T(1,128)}', space=vmem, size = 0x12000, scoped, tag = 'internal scratch']
  #allocation2 [shape = 'f32[128,128]{1,0:T(8,128)}', space=vmem, size = 0x10000, scoped, tag = 'scratch operand']
  %s0 = inlined_call_operand.vmem [shape: bf16[128,128], index: 0, kind: input, shape index: {}]
  %s1 = inlined_call_operand.vmem [shape: bf16[128,128], index: 1, kind: input, shape index: {}]
  %s2 = inlined_call_operand.vmem [shape: f32[1,128], index: 2, kind: input, shape index: {}]
  %s3 = inlined_call_operand.vmem [shape: f32[128,128], index: 3, kind: output, shape index: {}]
  %s4 = sld [smem:[#allocation0]]
  $region30: #{alexnet_forward.21} parent=0
    _
  %s6 = ssub.s32 1, %s4
  %s7 = scalar_select 0, %s6, %s4
  // Predicated region
  $region2: #{alexnet_forward.21} parent=0 // pred_check
    _
  $region3: #{alexnet_forward.21} parent=0 // pred_check_branch
    %9 = sbr.rel (0) target = $region5
  $region4: #{alexnet_forward.21} parent=0 // pred_region
    _
  $region5: #{alexnet_forward.21} parent=0 // pred_fallthru
    _
  // Predicated region
  $region6: #{alexnet_forward.21} parent=0 // pred_check
    _
  $region7: #{alexnet_forward.21} parent=0 // pred_check_branch
    %11 = sbr.rel (0) target = $region9
  $region8: #{alexnet_forward.21} parent=0 // pred_region
    _
  $region9: #{alexnet_forward.21} parent=0 // pred_fallthru
    _
  // Predicated region
  $region10: #{alexnet_forward.21} parent=0 // pred_check
    _
  $region11: #{alexnet_forward.21} parent=0 // pred_check_branch
    %13 = sbr.rel (0) target = $region13
  $region12: #{alexnet_forward.21} parent=0 // pred_region
    _
  $region13: #{alexnet_forward.21} parent=0 // pred_fallthru
    _
  %p15 = scmp.eq.s32.totalorder 0, 0
  // Predicated region
  $region14: #{alexnet_forward.21} parent=0 // pred_check
    %p16 = pneg %p15
  $region15: #{alexnet_forward.21} parent=0 // pred_check_branch
    %18 = sbr.rel (%p16) target = $region17
  $region16: #{alexnet_forward.21} parent=0 // pred_region
    %19 = vst [vmem:[#allocation2] sm:$0xff] 0.0
    %20 = vst [vmem:[#allocation2 + $0x8] sm:$0xff] 0.0
    %21 = vst [vmem:[#allocation2 + $0x10] sm:$0xff] 0.0
    %22 = vst [vmem:[#allocation2 + $0x18] sm:$0xff] 0.0
    %23 = vst [vmem:[#allocation2 + $0x20] sm:$0xff] 0.0
    %24 = vst [vmem:[#allocation2 + $0x28] sm:$0xff] 0.0
    %25 = vst [vmem:[#allocation2 + $0x30] sm:$0xff] 0.0
    %26 = vst [vmem:[#allocation2 + $0x38] sm:$0xff] 0.0
    %27 = vst [vmem:[#allocation2 + $0x40] sm:$0xff] 0.0
    %28 = vst [vmem:[#allocation2 + $0x48] sm:$0xff] 0.0
    %29 = vst [vmem:[#allocation2 + $0x50] sm:$0xff] 0.0
    %30 = vst [vmem:[#allocation2 + $0x58] sm:$0xff] 0.0
    %31 = vst [vmem:[#allocation2 + $0x60] sm:$0xff] 0.0
    %32 = vst [vmem:[#allocation2 + $0x68] sm:$0xff] 0.0
    %33 = vst [vmem:[#allocation2 + $0x70] sm:$0xff] 0.0
    %34 = vst [vmem:[#allocation2 + $0x78] sm:$0xff] 0.0
  $region17: #{alexnet_forward.21} parent=0 // pred_fallthru
    _
  %v35 = vld [vmem:[#allocation2] sm:$0xff]
  %v36 = vld [vmem:[#allocation2 + $0x8] sm:$0xff]
  %v37 = vld [vmem:[#allocation2 + $0x10] sm:$0xff]
  %v38 = vld [vmem:[#allocation2 + $0x18] sm:$0xff]
  %v39 = vld [vmem:[#allocation2 + $0x20] sm:$0xff]
  %v40 = vld [vmem:[#allocation2 + $0x28] sm:$0xff]
  %v41 = vld [vmem:[#allocation2 + $0x30] sm:$0xff]
  %v42 = vld [vmem:[#allocation2 + $0x38] sm:$0xff]
  %v43 = vld [vmem:[#allocation2 + $0x40] sm:$0xff]
  %v44 = vld [vmem:[#allocation2 + $0x48] sm:$0xff]
  %v45 = vld [vmem:[#allocation2 + $0x50] sm:$0xff]
  %v46 = vld [vmem:[#allocation2 + $0x58] sm:$0xff]
  %v47 = vld [vmem:[#allocation2 + $0x60] sm:$0xff]
  %v48 = vld [vmem:[#allocation2 + $0x68] sm:$0xff]
  %v49 = vld [vmem:[#allocation2 + $0x70] sm:$0xff]
  %v50 = vld [vmem:[#allocation2 + $0x78] sm:$0xff]
  %v51 = vld [vmem:[%s0] sm:$0xf]
  %v52 = vld [vmem:[%s0 + $0x4] sm:$0xf]
  %v53 = vld [vmem:[%s0 + $0x8] sm:$0xf]
  %v54 = vld [vmem:[%s0 + $0xc] sm:$0xf]
  %v55 = vld [vmem:[%s0 + $0x10] sm:$0xf]
  %v56 = vld [vmem:[%s0 + $0x14] sm:$0xf]
  %v57 = vld [vmem:[%s0 + $0x18] sm:$0xf]
  %v58 = vld [vmem:[%s0 + $0x1c] sm:$0xf]
  %v59 = vld [vmem:[%s0 + $0x20] sm:$0xf]
  %v60 = vld [vmem:[%s0 + $0x24] sm:$0xf]
  %v61 = vld [vmem:[%s0 + $0x28] sm:$0xf]
  %v62 = vld [vmem:[%s0 + $0x2c] sm:$0xf]
  %v63 = vld [vmem:[%s0 + $0x30] sm:$0xf]
  %v64 = vld [vmem:[%s0 + $0x34] sm:$0xf]
  %v65 = vld [vmem:[%s0 + $0x38] sm:$0xf]
  %v66 = vld [vmem:[%s0 + $0x3c] sm:$0xf]
  %v67 = vld [vmem:[%s1] sm:$0xf]
  %v68 = vld [vmem:[%s1 + $0x4] sm:$0xf]
  %v69 = vld [vmem:[%s1 + $0x8] sm:$0xf]
  %v70 = vld [vmem:[%s1 + $0xc] sm:$0xf]
  %v71 = vld [vmem:[%s1 + $0x10] sm:$0xf]
  %v72 = vld [vmem:[%s1 + $0x14] sm:$0xf]
  %v73 = vld [vmem:[%s1 + $0x18] sm:$0xf]
  %v74 = vld [vmem:[%s1 + $0x1c] sm:$0xf]
  %v75 = vld [vmem:[%s1 + $0x20] sm:$0xf]
  %v76 = vld [vmem:[%s1 + $0x24] sm:$0xf]
  %v77 = vld [vmem:[%s1 + $0x28] sm:$0xf]
  %v78 = vld [vmem:[%s1 + $0x2c] sm:$0xf]
  %v79 = vld [vmem:[%s1 + $0x30] sm:$0xf]
  %v80 = vld [vmem:[%s1 + $0x34] sm:$0xf]
  %v81 = vld [vmem:[%s1 + $0x38] sm:$0xf]
  %v82 = vld [vmem:[%s1 + $0x3c] sm:$0xf]
  %v99 = vunpack.c.l.b16 %v51
  %v100 = vunpack.c.l.b16 %v52
  %v101 = vunpack.c.l.b16 %v53
  %v102 = vunpack.c.l.b16 %v54
  %v103 = vunpack.c.l.b16 %v55
  %v104 = vunpack.c.l.b16 %v56
  %v105 = vunpack.c.l.b16 %v57
  %v106 = vunpack.c.l.b16 %v58
  %v107 = vunpack.c.l.b16 %v59
  %v108 = vunpack.c.l.b16 %v60
  %v109 = vunpack.c.l.b16 %v61
  %v110 = vunpack.c.l.b16 %v62
  %v111 = vunpack.c.l.b16 %v63
  %v112 = vunpack.c.l.b16 %v64
  %v113 = vunpack.c.l.b16 %v65
  %v114 = vunpack.c.l.b16 %v66
  %v115 = vpack.c.b16 %v100, %v99
  %v116 = vpack.c.b16 %v102, %v101
  %v117 = vpack.c.b16 %v104, %v103
  %v118 = vpack.c.b16 %v106, %v105
  %v119 = vpack.c.b16 %v108, %v107
  %v120 = vpack.c.b16 %v110, %v109
  %v121 = vpack.c.b16 %v112, %v111
  %v122 = vpack.c.b16 %v114, %v113
  %v147 = vunpack.c.l.b16 %v67
  %v148 = vunpack.c.l.b16 %v68
  %v149 = vunpack.c.l.b16 %v69
  %v150 = vunpack.c.l.b16 %v70
  %v151 = vunpack.c.l.b16 %v71
  %v152 = vunpack.c.l.b16 %v72
  %v153 = vunpack.c.l.b16 %v73
  %v154 = vunpack.c.l.b16 %v74
  %v155 = vunpack.c.l.b16 %v75
  %v156 = vunpack.c.l.b16 %v76
  %v157 = vunpack.c.l.b16 %v77
  %v158 = vunpack.c.l.b16 %v78
  %v159 = vunpack.c.l.b16 %v79
  %v160 = vunpack.c.l.b16 %v80
  %v161 = vunpack.c.l.b16 %v81
  %v162 = vunpack.c.l.b16 %v82
  %v163 = vpack.c.b16 %v148, %v147
  %v164 = vpack.c.b16 %v150, %v149
  %v165 = vpack.c.b16 %v152, %v151
  %v166 = vpack.c.b16 %v154, %v153
  %v167 = vpack.c.b16 %v156, %v155
  %v168 = vpack.c.b16 %v158, %v157
  %v169 = vpack.c.b16 %v160, %v159
  %v170 = vpack.c.b16 %v162, %v161
  %179 = vmatprep.subr.bf16.mxu0 0
  %180 = vmatpush1.bf16.msra.mxu0 %v163
  %181 = vmatprep.subr.bf16.mxu0 0
  %182 = vmatpush1.bf16.msra.mxu0 %v164
  %183 = vmatprep.subr.bf16.mxu0 0
  %184 = vmatpush1.bf16.msra.mxu0 %v165
  %185 = vmatprep.subr.bf16.mxu0 0
  %186 = vmatpush1.bf16.msra.mxu0 %v166
  %187 = vmatprep.subr.bf16.mxu0 0
  %188 = vmatpush1.bf16.msra.mxu0 %v167
  %189 = vmatprep.subr.bf16.mxu0 0
  %190 = vmatpush1.bf16.msra.mxu0 %v168
  %191 = vmatprep.subr.bf16.mxu0 0
  %192 = vmatpush1.bf16.msra.mxu0 %v169
  %193 = vmatprep.subr.bf16.mxu0 0
  %194 = vmatpush1.bf16.msra.mxu0 %v170
  %195 = vmatprep.subr.bf16.mxu0 0
  %196 = vmatpush1.bf16.msra.mxu0 0
  %197 = vmatprep.subr.bf16.mxu0 0
  %198 = vmatpush1.bf16.msra.mxu0 0
  %199 = vmatprep.subr.bf16.mxu0 0
  %200 = vmatpush1.bf16.msra.mxu0 0
  %201 = vmatprep.subr.bf16.mxu0 0
  %202 = vmatpush1.bf16.msra.mxu0 0
  %203 = vmatprep.subr.bf16.mxu0 0
  %204 = vmatpush1.bf16.msra.mxu0 0
  %205 = vmatprep.subr.bf16.mxu0 0
  %206 = vmatpush1.bf16.msra.mxu0 0
  %207 = vmatprep.subr.bf16.mxu0 0
  %208 = vmatpush1.bf16.msra.mxu0 0
  %209 = vmatprep.subr.bf16.mxu0 0
  %210 = vmatpush1.bf16.msra.mxu0 0
  %211 = vmatprep.mubr.bf16.mxu0 0
  %212 = vmatmul.mubr.bf16.gmra.mrb[0].mxu0 %v115
  %v213 = vpop.f32.mrb[0].mxu0
  %v214 = vadd.f32 0.0, %v213
  %v215 = vpop.f32.mrb[0].mxu0
  %v216 = vpop.f32.mrb[0].mxu0
  %v217 = vadd.f32 0.0, %v216
  %v218 = vpop.f32.mrb[0].mxu0
  %219 = vmatprep.mubr.bf16.mxu0 0
  %220 = vmatmul.mubr.bf16.gmra.mrb[0].mxu0 %v116
  %v221 = vpop.f32.mrb[0].mxu0
  %v222 = vadd.f32 0.0, %v221
  %v223 = vpop.f32.mrb[0].mxu0
  %v224 = vpop.f32.mrb[0].mxu0
  %v225 = vadd.f32 0.0, %v224
  %v226 = vpop.f32.mrb[0].mxu0
  %227 = vmatprep.mubr.bf16.mxu0 0
  %228 = vmatmul.mubr.bf16.gmra.mrb[0].mxu0 %v117
  %v229 = vpop.f32.mrb[0].mxu0
  %v230 = vadd.f32 0.0, %v229
  %v231 = vpop.f32.mrb[0].mxu0
  %v232 = vpop.f32.mrb[0].mxu0
  %v233 = vadd.f32 0.0, %v232
  %v234 = vpop.f32.mrb[0].mxu0
  %235 = vmatprep.mubr.bf16.mxu0 0
  %236 = vmatmul.mubr.bf16.gmra.mrb[0].mxu0 %v118
  %v237 = vpop.f32.mrb[0].mxu0
  %v238 = vadd.f32 0.0, %v237
  %v239 = vpop.f32.mrb[0].mxu0
  %v240 = vpop.f32.mrb[0].mxu0
  %v241 = vadd.f32 0.0, %v240
  %v242 = vpop.f32.mrb[0].mxu0
  %243 = vmatprep.mubr.bf16.mxu0 0
  %244 = vmatmul.mubr.bf16.gmra.mrb[0].mxu0 %v119
  %v245 = vpop.f32.mrb[0].mxu0
  %v246 = vadd.f32 0.0, %v245
  %v247 = vpop.f32.mrb[0].mxu0
  %v248 = vpop.f32.mrb[0].mxu0
  %v249 = vadd.f32 0.0, %v248
  %v250 = vpop.f32.mrb[0].mxu0
  %251 = vmatprep.mubr.bf16.mxu0 0
  %252 = vmatmul.mubr.bf16.gmra.mrb[0].mxu0 %v120
  %v253 = vpop.f32.mrb[0].mxu0
  %v254 = vadd.f32 0.0, %v253
  %v255 = vpop.f32.mrb[0].mxu0
  %v256 = vpop.f32.mrb[0].mxu0
  %v257 = vadd.f32 0.0, %v256
  %v258 = vpop.f32.mrb[0].mxu0
  %259 = vmatprep.mubr.bf16.mxu0 0
  %260 = vmatmul.mubr.bf16.gmra.mrb[0].mxu0 %v121
  %v261 = vpop.f32.mrb[0].mxu0
  %v262 = vadd.f32 0.0, %v261
  %v263 = vpop.f32.mrb[0].mxu0
  %v264 = vpop.f32.mrb[0].mxu0
  %v265 = vadd.f32 0.0, %v264
  %v266 = vpop.f32.mrb[0].mxu0
  %267 = vmatprep.mubr.bf16.mxu0 0
  %268 = vmatmul.mubr.bf16.gmra.mrb[0].mxu0 %v122
  %v269 = vpop.f32.mrb[0].mxu0
  %v270 = vadd.f32 0.0, %v269
  %v271 = vpop.f32.mrb[0].mxu0
  %v272 = vpop.f32.mrb[0].mxu0
  %v273 = vadd.f32 0.0, %v272
  %v274 = vpop.f32.mrb[0].mxu0
  %275 = vdwg.mxu0
  %v276 = vadd.f32 %v35, %v214
  %v277 = vadd.f32 %v36, %v217
  %v278 = vadd.f32 %v37, %v222
  %v279 = vadd.f32 %v38, %v225
  %v280 = vadd.f32 %v39, %v230
  %v281 = vadd.f32 %v40, %v233
  %v282 = vadd.f32 %v41, %v238
  %v283 = vadd.f32 %v42, %v241
  %v284 = vadd.f32 %v43, %v246
  %v285 = vadd.f32 %v44, %v249
  %v286 = vadd.f32 %v45, %v254
  %v287 = vadd.f32 %v46, %v257
  %v288 = vadd.f32 %v47, %v262
  %v289 = vadd.f32 %v48, %v265
  %v290 = vadd.f32 %v49, %v270
  %v291 = vadd.f32 %v50, %v273
  %292 = vst [vmem:[#allocation2] sm:$0xff] %v276
  %293 = vst [vmem:[#allocation2 + $0x8] sm:$0xff] %v277
  %294 = vst [vmem:[#allocation2 + $0x10] sm:$0xff] %v278
  %295 = vst [vmem:[#allocation2 + $0x18] sm:$0xff] %v279
  %296 = vst [vmem:[#allocation2 + $0x20] sm:$0xff] %v280
  %297 = vst [vmem:[#allocation2 + $0x28] sm:$0xff] %v281
  %298 = vst [vmem:[#allocation2 + $0x30] sm:$0xff] %v282
  %299 = vst [vmem:[#allocation2 + $0x38] sm:$0xff] %v283
  %300 = vst [vmem:[#allocation2 + $0x40] sm:$0xff] %v284
  %301 = vst [vmem:[#allocation2 + $0x48] sm:$0xff] %v285
  %302 = vst [vmem:[#allocation2 + $0x50] sm:$0xff] %v286
  %303 = vst [vmem:[#allocation2 + $0x58] sm:$0xff] %v287
  %304 = vst [vmem:[#allocation2 + $0x60] sm:$0xff] %v288
  %305 = vst [vmem:[#allocation2 + $0x68] sm:$0xff] %v289
  %306 = vst [vmem:[#allocation2 + $0x70] sm:$0xff] %v290
  %307 = vst [vmem:[#allocation2 + $0x78] sm:$0xff] %v291
  // Predicated region
  $region18: #{alexnet_forward.21} parent=0 // pred_check
    %p308 = pneg %p15
  $region19: #{alexnet_forward.21} parent=0 // pred_check_branch
    %310 = sbr.rel (%p308) target = $region21
  $region20: #{alexnet_forward.21} parent=0 // pred_region
    %v311 = vld [vmem:[#allocation2] sm:$0xff]
    %v312 = vld [vmem:[#allocation2 + $0x8] sm:$0xff]
    %v313 = vld [vmem:[#allocation2 + $0x10] sm:$0xff]
    %v314 = vld [vmem:[#allocation2 + $0x18] sm:$0xff]
    %v315 = vld [vmem:[#allocation2 + $0x20] sm:$0xff]
    %v316 = vld [vmem:[#allocation2 + $0x28] sm:$0xff]
    %v317 = vld [vmem:[#allocation2 + $0x30] sm:$0xff]
    %v318 = vld [vmem:[#allocation2 + $0x38] sm:$0xff]
    %v319 = vld [vmem:[#allocation2 + $0x40] sm:$0xff]
    %v320 = vld [vmem:[#allocation2 + $0x48] sm:$0xff]
    %v321 = vld [vmem:[#allocation2 + $0x50] sm:$0xff]
    %v322 = vld [vmem:[#allocation2 + $0x58] sm:$0xff]
    %v323 = vld [vmem:[#allocation2 + $0x60] sm:$0xff]
    %v324 = vld [vmem:[#allocation2 + $0x68] sm:$0xff]
    %v325 = vld [vmem:[#allocation2 + $0x70] sm:$0xff]
    %v326 = vld [vmem:[#allocation2 + $0x78] sm:$0xff]
    %v327 = vld [vmem:[%s2] sm:$0x1]
    %v329 = vlaneseq
    %v330 = vshrl.u32 %v329, 7
    %v331 = vsub.s32 0, %v330
    %v332 = vrot.slane %v327, %v331
    %v334 = vadd.f32 %v311, %v332
    %v335 = vadd.f32 %v312, %v332
    %v336 = vadd.f32 %v313, %v332
    %v337 = vadd.f32 %v314, %v332
    %v338 = vadd.f32 %v315, %v332
    %v339 = vadd.f32 %v316, %v332
    %v340 = vadd.f32 %v317, %v332
    %v341 = vadd.f32 %v318, %v332
    %v342 = vadd.f32 %v319, %v332
    %v343 = vadd.f32 %v320, %v332
    %v344 = vadd.f32 %v321, %v332
    %v345 = vadd.f32 %v322, %v332
    %v346 = vadd.f32 %v323, %v332
    %v347 = vadd.f32 %v324, %v332
    %v348 = vadd.f32 %v325, %v332
    %v349 = vadd.f32 %v326, %v332
    %350 = vst [vmem:[%s3] sm:$0xff] %v334
    %351 = vst [vmem:[%s3 + $0x8] sm:$0xff] %v335
    %352 = vst [vmem:[%s3 + $0x10] sm:$0xff] %v336
    %353 = vst [vmem:[%s3 + $0x18] sm:$0xff] %v337
    %354 = vst [vmem:[%s3 + $0x20] sm:$0xff] %v338
    %355 = vst [vmem:[%s3 + $0x28] sm:$0xff] %v339
    %356 = vst [vmem:[%s3 + $0x30] sm:$0xff] %v340
    %357 = vst [vmem:[%s3 + $0x38] sm:$0xff] %v341
    %358 = vst [vmem:[%s3 + $0x40] sm:$0xff] %v342
    %359 = vst [vmem:[%s3 + $0x48] sm:$0xff] %v343
    %360 = vst [vmem:[%s3 + $0x50] sm:$0xff] %v344
    %361 = vst [vmem:[%s3 + $0x58] sm:$0xff] %v345
    %362 = vst [vmem:[%s3 + $0x60] sm:$0xff] %v346
    %363 = vst [vmem:[%s3 + $0x68] sm:$0xff] %v347
    %364 = vst [vmem:[%s3 + $0x70] sm:$0xff] %v348
    %365 = vst [vmem:[%s3 + $0x78] sm:$0xff] %v349
  $region21: #{alexnet_forward.21} parent=0 // pred_fallthru
    _
  // Predicated region
  $region22: #{alexnet_forward.21} parent=0 // pred_check
    _
  $region23: #{alexnet_forward.21} parent=0 // pred_check_branch
    %367 = sbr.rel (0) target = $region25
  $region24: #{alexnet_forward.21} parent=0 // pred_region
    _
  $region25: #{alexnet_forward.21} parent=0 // pred_fallthru
    _
  // Predicated region
  $region26: #{alexnet_forward.21} parent=0 // pred_check
    _
  $region27: #{alexnet_forward.21} parent=0 // pred_check_branch
    %369 = sbr.rel (0) target = $region29
  $region28: #{alexnet_forward.21} parent=0 // pred_region
    _
  $region29: #{alexnet_forward.21} parent=0 // pred_fallthru
    _

// kernel: alexnet_forward.19
$region0: #{alexnet_forward.19}
  #allocation0 [shape = 'u32[]', space=smem, size = 0x4, offset = 0x4, fixed_abs, tag = 'smem constant byte address 0x4 - core index']
  #allocation1 [shape = 'u32[144,128]{1,0:T(1,128)}', space=vmem, size = 0x12000, scoped, tag = 'internal scratch']
  #allocation2 [shape = 'f32[128,128]{1,0:T(8,128)}', space=vmem, size = 0x10000, scoped, tag = 'scratch operand']
  %s0 = inlined_call_operand.vmem [shape: bf16[128,128], index: 0, kind: input, shape index: {}]
  %s1 = inlined_call_operand.vmem [shape: bf16[128,128], index: 1, kind: input, shape index: {}]
  %s2 = inlined_call_operand.vmem [shape: f32[1,128], index: 2, kind: input, shape index: {}]
  %s3 = inlined_call_operand.vmem [shape: bf16[128,128], index: 3, kind: output, shape index: {}]
  %s4 = sld [smem:[#allocation0]]
  $region30: #{alexnet_forward.19} parent=0
    _
  %s6 = ssub.s32 1, %s4
  %s7 = scalar_select 0, %s6, %s4
  // Predicated region
  $region2: #{alexnet_forward.19} parent=0 // pred_check
    _
  $region3: #{alexnet_forward.19} parent=0 // pred_check_branch
    %9 = sbr.rel (0) target = $region5
  $region4: #{alexnet_forward.19} parent=0 // pred_region
    _
  $region5: #{alexnet_forward.19} parent=0 // pred_fallthru
    _
  // Predicated region
  $region6: #{alexnet_forward.19} parent=0 // pred_check
    _
  $region7: #{alexnet_forward.19} parent=0 // pred_check_branch
    %11 = sbr.rel (0) target = $region9
  $region8: #{alexnet_forward.19} parent=0 // pred_region
    _
  $region9: #{alexnet_forward.19} parent=0 // pred_fallthru
    _
  // Predicated region
  $region10: #{alexnet_forward.19} parent=0 // pred_check
    _
  $region11: #{alexnet_forward.19} parent=0 // pred_check_branch
    %13 = sbr.rel (0) target = $region13
  $region12: #{alexnet_forward.19} parent=0 // pred_region
    _
  $region13: #{alexnet_forward.19} parent=0 // pred_fallthru
    _
  %p15 = scmp.eq.s32.totalorder 0, 0
  // Predicated region
  $region14: #{alexnet_forward.19} parent=0 // pred_check
    %p16 = pneg %p15
  $region15: #{alexnet_forward.19} parent=0 // pred_check_branch
    %18 = sbr.rel (%p16) target = $region17
  $region16: #{alexnet_forward.19} parent=0 // pred_region
    %19 = vst [vmem:[#allocation2] sm:$0xff] 0.0
    %20 = vst [vmem:[#allocation2 + $0x8] sm:$0xff] 0.0
    %21 = vst [vmem:[#allocation2 + $0x10] sm:$0xff] 0.0
    %22 = vst [vmem:[#allocation2 + $0x18] sm:$0xff] 0.0
    %23 = vst [vmem:[#allocation2 + $0x20] sm:$0xff] 0.0
    %24 = vst [vmem:[#allocation2 + $0x28] sm:$0xff] 0.0
    %25 = vst [vmem:[#allocation2 + $0x30] sm:$0xff] 0.0
    %26 = vst [vmem:[#allocation2 + $0x38] sm:$0xff] 0.0
    %27 = vst [vmem:[#allocation2 + $0x40] sm:$0xff] 0.0
    %28 = vst [vmem:[#allocation2 + $0x48] sm:$0xff] 0.0
    %29 = vst [vmem:[#allocation2 + $0x50] sm:$0xff] 0.0
    %30 = vst [vmem:[#allocation2 + $0x58] sm:$0xff] 0.0
    %31 = vst [vmem:[#allocation2 + $0x60] sm:$0xff] 0.0
    %32 = vst [vmem:[#allocation2 + $0x68] sm:$0xff] 0.0
    %33 = vst [vmem:[#allocation2 + $0x70] sm:$0xff] 0.0
    %34 = vst [vmem:[#allocation2 + $0x78] sm:$0xff] 0.0
  $region17: #{alexnet_forward.19} parent=0 // pred_fallthru
    _
  %v35 = vld [vmem:[#allocation2] sm:$0xff]
  %v36 = vld [vmem:[#allocation2 + $0x8] sm:$0xff]
  %v37 = vld [vmem:[#allocation2 + $0x10] sm:$0xff]
  %v38 = vld [vmem:[#allocation2 + $0x18] sm:$0xff]
  %v39 = vld [vmem:[#allocation2 + $0x20] sm:$0xff]
  %v40 = vld [vmem:[#allocation2 + $0x28] sm:$0xff]
  %v41 = vld [vmem:[#allocation2 + $0x30] sm:$0xff]
  %v42 = vld [vmem:[#allocation2 + $0x38] sm:$0xff]
  %v43 = vld [vmem:[#allocation2 + $0x40] sm:$0xff]
  %v44 = vld [vmem:[#allocation2 + $0x48] sm:$0xff]
  %v45 = vld [vmem:[#allocation2 + $0x50] sm:$0xff]
  %v46 = vld [vmem:[#allocation2 + $0x58] sm:$0xff]
  %v47 = vld [vmem:[#allocation2 + $0x60] sm:$0xff]
  %v48 = vld [vmem:[#allocation2 + $0x68] sm:$0xff]
  %v49 = vld [vmem:[#allocation2 + $0x70] sm:$0xff]
  %v50 = vld [vmem:[#allocation2 + $0x78] sm:$0xff]
  %v51 = vld [vmem:[%s0] sm:$0xf]
  %v52 = vld [vmem:[%s0 + $0x4] sm:$0xf]
  %v53 = vld [vmem:[%s0 + $0x8] sm:$0xf]
  %v54 = vld [vmem:[%s0 + $0xc] sm:$0xf]
  %v55 = vld [vmem:[%s0 + $0x10] sm:$0xf]
  %v56 = vld [vmem:[%s0 + $0x14] sm:$0xf]
  %v57 = vld [vmem:[%s0 + $0x18] sm:$0xf]
  %v58 = vld [vmem:[%s0 + $0x1c] sm:$0xf]
  %v59 = vld [vmem:[%s0 + $0x20] sm:$0xf]
  %v60 = vld [vmem:[%s0 + $0x24] sm:$0xf]
  %v61 = vld [vmem:[%s0 + $0x28] sm:$0xf]
  %v62 = vld [vmem:[%s0 + $0x2c] sm:$0xf]
  %v63 = vld [vmem:[%s0 + $0x30] sm:$0xf]
  %v64 = vld [vmem:[%s0 + $0x34] sm:$0xf]
  %v65 = vld [vmem:[%s0 + $0x38] sm:$0xf]
  %v66 = vld [vmem:[%s0 + $0x3c] sm:$0xf]
  %v67 = vld [vmem:[%s1] sm:$0xf]
  %v68 = vld [vmem:[%s1 + $0x4] sm:$0xf]
  %v69 = vld [vmem:[%s1 + $0x8] sm:$0xf]
  %v70 = vld [vmem:[%s1 + $0xc] sm:$0xf]
  %v71 = vld [vmem:[%s1 + $0x10] sm:$0xf]
  %v72 = vld [vmem:[%s1 + $0x14] sm:$0xf]
  %v73 = vld [vmem:[%s1 + $0x18] sm:$0xf]
  %v74 = vld [vmem:[%s1 + $0x1c] sm:$0xf]
  %v75 = vld [vmem:[%s1 + $0x20] sm:$0xf]
  %v76 = vld [vmem:[%s1 + $0x24] sm:$0xf]
  %v77 = vld [vmem:[%s1 + $0x28] sm:$0xf]
  %v78 = vld [vmem:[%s1 + $0x2c] sm:$0xf]
  %v79 = vld [vmem:[%s1 + $0x30] sm:$0xf]
  %v80 = vld [vmem:[%s1 + $0x34] sm:$0xf]
  %v81 = vld [vmem:[%s1 + $0x38] sm:$0xf]
  %v82 = vld [vmem:[%s1 + $0x3c] sm:$0xf]
  %v99 = vunpack.c.l.b16 %v51
  %v100 = vunpack.c.l.b16 %v52
  %v101 = vunpack.c.l.b16 %v53
  %v102 = vunpack.c.l.b16 %v54
  %v103 = vunpack.c.l.b16 %v55
  %v104 = vunpack.c.l.b16 %v56
  %v105 = vunpack.c.l.b16 %v57
  %v106 = vunpack.c.l.b16 %v58
  %v107 = vunpack.c.l.b16 %v59
  %v108 = vunpack.c.l.b16 %v60
  %v109 = vunpack.c.l.b16 %v61
  %v110 = vunpack.c.l.b16 %v62
  %v111 = vunpack.c.l.b16 %v63
  %v112 = vunpack.c.l.b16 %v64
  %v113 = vunpack.c.l.b16 %v65
  %v114 = vunpack.c.l.b16 %v66
  %v115 = vpack.c.b16 %v100, %v99
  %v116 = vpack.c.b16 %v102, %v101
  %v117 = vpack.c.b16 %v104, %v103
  %v118 = vpack.c.b16 %v106, %v105
  %v119 = vpack.c.b16 %v108, %v107
  %v120 = vpack.c.b16 %v110, %v109
  %v121 = vpack.c.b16 %v112, %v111
  %v122 = vpack.c.b16 %v114, %v113
  %v147 = vunpack.c.l.b16 %v67
  %v148 = vunpack.c.l.b16 %v68
  %v149 = vunpack.c.l.b16 %v69
  %v150 = vunpack.c.l.b16 %v70
  %v151 = vunpack.c.l.b16 %v71
  %v152 = vunpack.c.l.b16 %v72
  %v153 = vunpack.c.l.b16 %v73
  %v154 = vunpack.c.l.b16 %v74
  %v155 = vunpack.c.l.b16 %v75
  %v156 = vunpack.c.l.b16 %v76
  %v157 = vunpack.c.l.b16 %v77
  %v158 = vunpack.c.l.b16 %v78
  %v159 = vunpack.c.l.b16 %v79
  %v160 = vunpack.c.l.b16 %v80
  %v161 = vunpack.c.l.b16 %v81
  %v162 = vunpack.c.l.b16 %v82
  %v163 = vpack.c.b16 %v148, %v147
  %v164 = vpack.c.b16 %v150, %v149
  %v165 = vpack.c.b16 %v152, %v151
  %v166 = vpack.c.b16 %v154, %v153
  %v167 = vpack.c.b16 %v156, %v155
  %v168 = vpack.c.b16 %v158, %v157
  %v169 = vpack.c.b16 %v160, %v159
  %v170 = vpack.c.b16 %v162, %v161
  %179 = vmatprep.subr.bf16.mxu0 0
  %180 = vmatpush1.bf16.msra.mxu0 %v163
  %181 = vmatprep.subr.bf16.mxu0 0
  %182 = vmatpush1.bf16.msra.mxu0 %v164
  %183 = vmatprep.subr.bf16.mxu0 0
  %184 = vmatpush1.bf16.msra.mxu0 %v165
  %185 = vmatprep.subr.bf16.mxu0 0
  %186 = vmatpush1.bf16.msra.mxu0 %v166
  %187 = vmatprep.subr.bf16.mxu0 0
  %188 = vmatpush1.bf16.msra.mxu0 %v167
  %189 = vmatprep.subr.bf16.mxu0 0
  %190 = vmatpush1.bf16.msra.mxu0 %v168
  %191 = vmatprep.subr.bf16.mxu0 0
  %192 = vmatpush1.bf16.msra.mxu0 %v169
  %193 = vmatprep.subr.bf16.mxu0 0
  %194 = vmatpush1.bf16.msra.mxu0 %v170
  %195 = vmatprep.subr.bf16.mxu0 0
  %196 = vmatpush1.bf16.msra.mxu0 0
  %197 = vmatprep.subr.bf16.mxu0 0
  %198 = vmatpush1.bf16.msra.mxu0 0
  %199 = vmatprep.subr.bf16.mxu0 0
  %200 = vmatpush1.bf16.msra.mxu0 0
  %201 = vmatprep.subr.bf16.mxu0 0
  %202 = vmatpush1.bf16.msra.mxu0 0
  %203 = vmatprep.subr.bf16.mxu0 0
  %204 = vmatpush1.bf16.msra.mxu0 0
  %205 = vmatprep.subr.bf16.mxu0 0
  %206 = vmatpush1.bf16.msra.mxu0 0
  %207 = vmatprep.subr.bf16.mxu0 0
  %208 = vmatpush1.bf16.msra.mxu0 0
  %209 = vmatprep.subr.bf16.mxu0 0
  %210 = vmatpush1.bf16.msra.mxu0 0
  %211 = vmatprep.mubr.bf16.mxu0 0
  %212 = vmatmul.mubr.bf16.gmra.mrb[0].mxu0 %v115
  %v213 = vpop.f32.mrb[0].mxu0
  %v214 = vadd.f32 0.0, %v213
  %v215 = vpop.f32.mrb[0].mxu0
  %v216 = vpop.f32.mrb[0].mxu0
  %v217 = vadd.f32 0.0, %v216
  %v218 = vpop.f32.mrb[0].mxu0
  %219 = vmatprep.mubr.bf16.mxu0 0
  %220 = vmatmul.mubr.bf16.gmra.mrb[0].mxu0 %v116
  %v221 = vpop.f32.mrb[0].mxu0
  %v222 = vadd.f32 0.0, %v221
  %v223 = vpop.f32.mrb[0].mxu0
  %v224 = vpop.f32.mrb[0].mxu0
  %v225 = vadd.f32 0.0, %v224
  %v226 = vpop.f32.mrb[0].mxu0
  %227 = vmatprep.mubr.bf16.mxu0 0
  %228 = vmatmul.mubr.bf16.gmra.mrb[0].mxu0 %v117
  %v229 = vpop.f32.mrb[0].mxu0
  %v230 = vadd.f32 0.0, %v229
  %v231 = vpop.f32.mrb[0].mxu0
  %v232 = vpop.f32.mrb[0].mxu0
  %v233 = vadd.f32 0.0, %v232
  %v234 = vpop.f32.mrb[0].mxu0
  %235 = vmatprep.mubr.bf16.mxu0 0
  %236 = vmatmul.mubr.bf16.gmra.mrb[0].mxu0 %v118
  %v237 = vpop.f32.mrb[0].mxu0
  %v238 = vadd.f32 0.0, %v237
  %v239 = vpop.f32.mrb[0].mxu0
  %v240 = vpop.f32.mrb[0].mxu0
  %v241 = vadd.f32 0.0, %v240
  %v242 = vpop.f32.mrb[0].mxu0
  %243 = vmatprep.mubr.bf16.mxu0 0
  %244 = vmatmul.mubr.bf16.gmra.mrb[0].mxu0 %v119
  %v245 = vpop.f32.mrb[0].mxu0
  %v246 = vadd.f32 0.0, %v245
  %v247 = vpop.f32.mrb[0].mxu0
  %v248 = vpop.f32.mrb[0].mxu0
  %v249 = vadd.f32 0.0, %v248
  %v250 = vpop.f32.mrb[0].mxu0
  %251 = vmatprep.mubr.bf16.mxu0 0
  %252 = vmatmul.mubr.bf16.gmra.mrb[0].mxu0 %v120
  %v253 = vpop.f32.mrb[0].mxu0
  %v254 = vadd.f32 0.0, %v253
  %v255 = vpop.f32.mrb[0].mxu0
  %v256 = vpop.f32.mrb[0].mxu0
  %v257 = vadd.f32 0.0, %v256
  %v258 = vpop.f32.mrb[0].mxu0
  %259 = vmatprep.mubr.bf16.mxu0 0
  %260 = vmatmul.mubr.bf16.gmra.mrb[0].mxu0 %v121
  %v261 = vpop.f32.mrb[0].mxu0
  %v262 = vadd.f32 0.0, %v261
  %v263 = vpop.f32.mrb[0].mxu0
  %v264 = vpop.f32.mrb[0].mxu0
  %v265 = vadd.f32 0.0, %v264
  %v266 = vpop.f32.mrb[0].mxu0
  %267 = vmatprep.mubr.bf16.mxu0 0
  %268 = vmatmul.mubr.bf16.gmra.mrb[0].mxu0 %v122
  %v269 = vpop.f32.mrb[0].mxu0
  %v270 = vadd.f32 0.0, %v269
  %v271 = vpop.f32.mrb[0].mxu0
  %v272 = vpop.f32.mrb[0].mxu0
  %v273 = vadd.f32 0.0, %v272
  %v274 = vpop.f32.mrb[0].mxu0
  %275 = vdwg.mxu0
  %v276 = vadd.f32 %v35, %v214
  %v277 = vadd.f32 %v36, %v217
  %v278 = vadd.f32 %v37, %v222
  %v279 = vadd.f32 %v38, %v225
  %v280 = vadd.f32 %v39, %v230
  %v281 = vadd.f32 %v40, %v233
  %v282 = vadd.f32 %v41, %v238
  %v283 = vadd.f32 %v42, %v241
  %v284 = vadd.f32 %v43, %v246
  %v285 = vadd.f32 %v44, %v249
  %v286 = vadd.f32 %v45, %v254
  %v287 = vadd.f32 %v46, %v257
  %v288 = vadd.f32 %v47, %v262
  %v289 = vadd.f32 %v48, %v265
  %v290 = vadd.f32 %v49, %v270
  %v291 = vadd.f32 %v50, %v273
  %292 = vst [vmem:[#allocation2] sm:$0xff] %v276
  %293 = vst [vmem:[#allocation2 + $0x8] sm:$0xff] %v277
  %294 = vst [vmem:[#allocation2 + $0x10] sm:$0xff] %v278
  %295 = vst [vmem:[#allocation2 + $0x18] sm:$0xff] %v279
  %296 = vst [vmem:[#allocation2 + $0x20] sm:$0xff] %v280
  %297 = vst [vmem:[#allocation2 + $0x28] sm:$0xff] %v281
  %298 = vst [vmem:[#allocation2 + $0x30] sm:$0xff] %v282
  %299 = vst [vmem:[#allocation2 + $0x38] sm:$0xff] %v283
  %300 = vst [vmem:[#allocation2 + $0x40] sm:$0xff] %v284
  %301 = vst [vmem:[#allocation2 + $0x48] sm:$0xff] %v285
  %302 = vst [vmem:[#allocation2 + $0x50] sm:$0xff] %v286
  %303 = vst [vmem:[#allocation2 + $0x58] sm:$0xff] %v287
  %304 = vst [vmem:[#allocation2 + $0x60] sm:$0xff] %v288
  %305 = vst [vmem:[#allocation2 + $0x68] sm:$0xff] %v289
  %306 = vst [vmem:[#allocation2 + $0x70] sm:$0xff] %v290
  %307 = vst [vmem:[#allocation2 + $0x78] sm:$0xff] %v291
  // Predicated region
  $region18: #{alexnet_forward.19} parent=0 // pred_check
    %p308 = pneg %p15
  $region19: #{alexnet_forward.19} parent=0 // pred_check_branch
    %310 = sbr.rel (%p308) target = $region21
  $region20: #{alexnet_forward.19} parent=0 // pred_region
    %v311 = vld [vmem:[#allocation2] sm:$0xff]
    %v312 = vld [vmem:[#allocation2 + $0x8] sm:$0xff]
    %v313 = vld [vmem:[#allocation2 + $0x10] sm:$0xff]
    %v314 = vld [vmem:[#allocation2 + $0x18] sm:$0xff]
    %v315 = vld [vmem:[#allocation2 + $0x20] sm:$0xff]
    %v316 = vld [vmem:[#allocation2 + $0x28] sm:$0xff]
    %v317 = vld [vmem:[#allocation2 + $0x30] sm:$0xff]
    %v318 = vld [vmem:[#allocation2 + $0x38] sm:$0xff]
    %v319 = vld [vmem:[#allocation2 + $0x40] sm:$0xff]
    %v320 = vld [vmem:[#allocation2 + $0x48] sm:$0xff]
    %v321 = vld [vmem:[#allocation2 + $0x50] sm:$0xff]
    %v322 = vld [vmem:[#allocation2 + $0x58] sm:$0xff]
    %v323 = vld [vmem:[#allocation2 + $0x60] sm:$0xff]
    %v324 = vld [vmem:[#allocation2 + $0x68] sm:$0xff]
    %v325 = vld [vmem:[#allocation2 + $0x70] sm:$0xff]
    %v326 = vld [vmem:[#allocation2 + $0x78] sm:$0xff]
    %v327 = vld [vmem:[%s2] sm:$0x1]
    %v329 = vlaneseq
    %v330 = vshrl.u32 %v329, 7
    %v331 = vsub.s32 0, %v330
    %v332 = vrot.slane %v327, %v331
    %v334 = vadd.f32 %v311, %v332
    %v335 = vadd.f32 %v312, %v332
    %v336 = vadd.f32 %v313, %v332
    %v337 = vadd.f32 %v314, %v332
    %v338 = vadd.f32 %v315, %v332
    %v339 = vadd.f32 %v316, %v332
    %v340 = vadd.f32 %v317, %v332
    %v341 = vadd.f32 %v318, %v332
    %v342 = vadd.f32 %v319, %v332
    %v343 = vadd.f32 %v320, %v332
    %v344 = vadd.f32 %v321, %v332
    %v345 = vadd.f32 %v322, %v332
    %v346 = vadd.f32 %v323, %v332
    %v347 = vadd.f32 %v324, %v332
    %v348 = vadd.f32 %v325, %v332
    %v349 = vadd.f32 %v326, %v332
    %v350 = vmax.f32 %v334, 0.0
    %v351 = vmax.f32 %v335, 0.0
    %v352 = vmax.f32 %v336, 0.0
    %v353 = vmax.f32 %v337, 0.0
    %v354 = vmax.f32 %v338, 0.0
    %v355 = vmax.f32 %v339, 0.0
    %v356 = vmax.f32 %v340, 0.0
    %v357 = vmax.f32 %v341, 0.0
    %v358 = vmax.f32 %v342, 0.0
    %v359 = vmax.f32 %v343, 0.0
    %v360 = vmax.f32 %v344, 0.0
    %v361 = vmax.f32 %v345, 0.0
    %v362 = vmax.f32 %v346, 0.0
    %v363 = vmax.f32 %v347, 0.0
    %v364 = vmax.f32 %v348, 0.0
    %v365 = vmax.f32 %v349, 0.0
    %v366 = vpack.c.bf16 %v351, %v350
    %v367 = vpack.c.bf16 %v353, %v352
    %v368 = vpack.c.bf16 %v355, %v354
    %v369 = vpack.c.bf16 %v357, %v356
    %v370 = vpack.c.bf16 %v359, %v358
    %v371 = vpack.c.bf16 %v361, %v360
    %v372 = vpack.c.bf16 %v363, %v362
    %v373 = vpack.c.bf16 %v365, %v364
    %v382 = vunpack.c.l.b16 %v366
    %v383 = vunpack.c.h.b16 %v366
    %v384 = vunpack.c.l.b16 %v367
    %v385 = vunpack.c.h.b16 %v367
    %v386 = vunpack.c.l.b16 %v368
    %v387 = vunpack.c.h.b16 %v368
    %v388 = vunpack.c.l.b16 %v369
    %v389 = vunpack.c.h.b16 %v369
    %v390 = vunpack.c.l.b16 %v370
    %v391 = vunpack.c.h.b16 %v370
    %v392 = vunpack.c.l.b16 %v371
    %v393 = vunpack.c.h.b16 %v371
    %v394 = vunpack.c.l.b16 %v372
    %v395 = vunpack.c.h.b16 %v372
    %v396 = vunpack.c.l.b16 %v373
    %v397 = vunpack.c.h.b16 %v373
    %v398 = vpack.c.b16 %v382, %v382
    %v399 = vpack.c.b16 %v383, %v383
    %v400 = vpack.c.b16 %v384, %v384
    %v401 = vpack.c.b16 %v385, %v385
    %v402 = vpack.c.b16 %v386, %v386
    %v403 = vpack.c.b16 %v387, %v387
    %v404 = vpack.c.b16 %v388, %v388
    %v405 = vpack.c.b16 %v389, %v389
    %v406 = vpack.c.b16 %v390, %v390
    %v407 = vpack.c.b16 %v391, %v391
    %v408 = vpack.c.b16 %v392, %v392
    %v409 = vpack.c.b16 %v393, %v393
    %v410 = vpack.c.b16 %v394, %v394
    %v411 = vpack.c.b16 %v395, %v395
    %v412 = vpack.c.b16 %v396, %v396
    %v413 = vpack.c.b16 %v397, %v397
    %430 = vst [vmem:[%s3] sm:$0xf] %v398
    %431 = vst [vmem:[%s3 + $0x4] sm:$0xf] %v399
    %432 = vst [vmem:[%s3 + $0x8] sm:$0xf] %v400
    %433 = vst [vmem:[%s3 + $0xc] sm:$0xf] %v401
    %434 = vst [vmem:[%s3 + $0x10] sm:$0xf] %v402
    %435 = vst [vmem:[%s3 + $0x14] sm:$0xf] %v403
    %436 = vst [vmem:[%s3 + $0x18] sm:$0xf] %v404
    %437 = vst [vmem:[%s3 + $0x1c] sm:$0xf] %v405
    %438 = vst [vmem:[%s3 + $0x20] sm:$0xf] %v406
    %439 = vst [vmem:[%s3 + $0x24] sm:$0xf] %v407
    %440 = vst [vmem:[%s3 + $0x28] sm:$0xf] %v408
    %441 = vst [vmem:[%s3 + $0x2c] sm:$0xf] %v409
    %442 = vst [vmem:[%s3 + $0x30] sm:$0xf] %v410
    %443 = vst [vmem:[%s3 + $0x34] sm:$0xf] %v411
    %444 = vst [vmem:[%s3 + $0x38] sm:$0xf] %v412
    %445 = vst [vmem:[%s3 + $0x3c] sm:$0xf] %v413
  $region21: #{alexnet_forward.19} parent=0 // pred_fallthru
    _
  // Predicated region
  $region22: #{alexnet_forward.19} parent=0 // pred_check
    _
  $region23: #{alexnet_forward.19} parent=0 // pred_check_branch
    %447 = sbr.rel (0) target = $region25
  $region24: #{alexnet_forward.19} parent=0 // pred_region
    _
  $region25: #{alexnet_forward.19} parent=0 // pred_fallthru
    _
  // Predicated region
  $region26: #{alexnet_forward.19} parent=0 // pred_check
    _
  $region27: #{alexnet_forward.19} parent=0 // pred_check_branch
    %449 = sbr.rel (0) target = $region29
  $region28: #{alexnet_forward.19} parent=0 // pred_region
    _
  $region29: #{alexnet_forward.19} parent=0 // pred_fallthru
    _

</llo_original>
